<compile_context>
chip_gen: v7x
topology: tpu7x:2x2x1
jax: 0.10.0
libtpu: 0.0.40
codegen_flags: <defaults>
</compile_context>

<pallas_src>
import math
from functools import partial

import jax
import jax.numpy as jnp
from jax.experimental import pallas as pl
from jax.experimental.pallas import tpu as pltpu

MAX_VAL = 10000.0
LN_EPS = 1e-8


# ----------------------------- fused Pallas kernel -----------------------------

def _fused_kernel(seqs_ref, keep_ref,
                  ln1_g_ref, ln1_b_ref,
                  wq_ref, bq_ref, wkv_ref, bkv_ref,
                  wo_ref, bo_ref,
                  ln2_g_ref, ln2_b_ref,
                  w1_ref, b1_ref, w2_ref, b2_ref,
                  pq_ref, pk_ref, rwb_ref, wvec_ref,
                  lnf_g_ref, lnf_b_ref,
                  o_ref, *,
                  num_blocks, B, L, H, global_num, local_num):
    """Entire LocalSelfAttention forward for one call, fully resident in VMEM."""
    f32 = jnp.float32
    nh = global_num + local_num
    dk = H // nh
    inv_sqrt_dk = 1.0 / math.sqrt(dk)

    def layer_norm(x, g, b):
        mu = jnp.mean(x, axis=-1, keepdims=True)
        var = jnp.mean((x - mu) * (x - mu), axis=-1, keepdims=True)
        return (x - mu) * jax.lax.rsqrt(var + LN_EPS) * g + b

    keep = keep_ref[...].astype(f32)                     # [N, 1]
    x = seqs_ref[...].astype(f32) * keep                 # [N, H]   (seqs *= ~mask)

    row = jax.lax.broadcasted_iota(jnp.int32, (L, L), 0)
    col = jax.lax.broadcasted_iota(jnp.int32, (L, L), 1)
    future = col > row                                   # ~tril causal mask

    # num_blocks / B / nh are tiny static ints -> trace-time unrolled.
    for blk in range(num_blocks):
        # --- LN1 and projections (weights pre-transposed: y = x @ W) ---
        q_in = layer_norm(x, ln1_g_ref[blk], ln1_b_ref[blk])                     # Q = LN1(seqs)
        q = jnp.dot(q_in, wq_ref[blk], preferred_element_type=f32) + bq_ref[blk]  # [N, H]
        kv = jnp.dot(x, wkv_ref[blk], preferred_element_type=f32) + bkv_ref[blk]  # [N, 2H] fused K/V
        k = kv[:, :H]
        v = kv[:, H:]

        if local_num > 0:
            pq_b = pq_ref[blk]       # [local_num, L, dk]
            pk_b = pk_ref[blk]       # [local_num, L, dk]
            rwb_b = rwb_ref[blk]     # [local_num, L, L]   (rel@w + bias, precomputed)
            wvec_b = wvec_ref[blk]   # [local_num, 1, dk]

        # --- attention for all (batch, head) pairs, assembled straight into [N, H] ---
        rows = []
        for b in range(B):
            r0 = b * L
            cols_out = []
            for h in range(nh):
                c0 = h * dk
                qh = q[r0:r0 + L, c0:c0 + dk]            # [L, dk]
                kh = k[r0:r0 + L, c0:c0 + dk]
                vh = v[r0:r0 + L, c0:c0 + dk]
                if h >= global_num:                      # local head: abs-pos add
                    hl = h - global_num
                    qh = qh + pq_b[hl]
                    kh = kh + pk_b[hl]
                s = jnp.dot(qh, kh.T, preferred_element_type=f32) * inv_sqrt_dk
                if h >= global_num:                      # local head: rel-pos reweight
                    hl = h - global_num
                    # (rel + v_i + v_j)@w + b  ==  (rel@w + b) + (v.w)_i + (v.w)_j
                    wv = jnp.sum(vh * wvec_b[hl], axis=-1, keepdims=True)   # [L, 1] (VPU reduce)
                    s = s + rwb_b[hl] + wv + wv.T
                s = jnp.where(future, -MAX_VAL, s)       # masked_fill(~tril, -1e4)
                m = jnp.max(s, axis=-1, keepdims=True)
                e = jnp.exp(s - m)
                p = e * pl.reciprocal(jnp.sum(e, axis=-1, keepdims=True), approx=True)
                cols_out.append(jnp.dot(p, vh, preferred_element_type=f32))  # [L, dk]
            rows.append(jnp.concatenate(cols_out, axis=1))                   # [L, H]
        attn = jnp.concatenate(rows, axis=0)                                 # [N, H]

        # --- output projection, residual, LN2, FFN, pad mask ---
        attn = jnp.dot(attn, wo_ref[blk], preferred_element_type=f32) + bo_ref[blk]
        x = q_in + attn
        x = layer_norm(x, ln2_g_ref[blk], ln2_b_ref[blk])
        h1 = jnp.maximum(jnp.dot(x, w1_ref[blk], preferred_element_type=f32) + b1_ref[blk], 0.0)
        y = jnp.dot(h1, w2_ref[blk], preferred_element_type=f32) + b2_ref[blk]
        x = (x + y) * keep

    o_ref[...] = layer_norm(x, lnf_g_ref[...], lnf_b_ref[...]).astype(o_ref.dtype)


def _full_spec(shape):
    nd = len(shape)
    return pl.BlockSpec(tuple(shape), lambda i, _nd=nd: (0,) * _nd)


# ------------------------------ host-side prep ------------------------------

def _prepare_fused_params(params, L, H, global_num, local_num):
    """Stack per-block weights (pre-transposed) and precompute the tiny
    positional-embedding tensors used by local heads."""
    blocks = params["blocks"]
    NB = len(blocks)
    nh = global_num + local_num
    dk = H // nh
    f32 = jnp.float32

    def stack(fn):
        return jnp.stack([fn(b) for b in blocks], axis=0)

    fp = {
        "ln1_g": stack(lambda b: b["ln1_g"])[:, None, :],
        "ln1_b": stack(lambda b: b["ln1_b"])[:, None, :],
        "wq":    stack(lambda b: b["mha"]["wq"].T),                        # [NB, H, H]
        "bq":    stack(lambda b: b["mha"]["bq"])[:, None, :],
        "wkv":   stack(lambda b: jnp.concatenate(
                        [b["mha"]["wk"].T, b["mha"]["wv"].T], axis=1)),    # [NB, H, 2H]
        "bkv":   stack(lambda b: jnp.concatenate(
                        [b["mha"]["bk"], b["mha"]["bv"]], axis=0))[:, None, :],
        "wo":    stack(lambda b: b["mha"]["wo"].T),
        "bo":    stack(lambda b: b["mha"]["bo"])[:, None, :],
        "ln2_g": stack(lambda b: b["ln2_g"])[:, None, :],
        "ln2_b": stack(lambda b: b["ln2_b"])[:, None, :],
        "w1":    stack(lambda b: b["w1"].T),
        "b1":    stack(lambda b: b["b1"])[:, None, :],
        "w2":    stack(lambda b: b["w2"].T),
        "b2":    stack(lambda b: b["b2"])[:, None, :],
        "lnf_g": params["lnf_g"][None, :],
        "lnf_b": params["lnf_b"][None, :],
    }

    if local_num > 0:
        # distance / abs-pos / rel-pos gathers (tiny embedding tables): host glue.
        distance = jnp.arange(L)[None, :] - jnp.arange(L)[:, None] + L - 1   # [L, L]
        index = distance[-1]                                                 # [L]

        def aux(b):
            m = b["mha"]
            pq = m["abs_q"][index].reshape(local_num, L, dk)
            pk = m["abs_k"][index].reshape(local_num, L, dk)
            rel = m["rel"][distance].reshape(L, L, local_num, dk).transpose(2, 0, 1, 3)
            R = jnp.einsum("hijd,hd->hij", rel, m["mlp_w"]) + m["mlp_b"][:, None, None]
            return pq, pk, R, m["mlp_w"][:, None, :]

        auxes = [aux(b) for b in blocks]
        fp["pq"] = jnp.stack([a[0] for a in auxes], axis=0)     # [NB, ln, L, dk]
        fp["pk"] = jnp.stack([a[1] for a in auxes], axis=0)
        fp["rwb"] = jnp.stack([a[2] for a in auxes], axis=0)    # [NB, ln, L, L]
        fp["wvec"] = jnp.stack([a[3] for a in auxes], axis=0)   # [NB, ln, 1, dk]
    else:
        fp["pq"] = jnp.zeros((NB, 1, L, dk), f32)   # never read when local_num == 0
        fp["pk"] = jnp.zeros((NB, 1, L, dk), f32)
        fp["rwb"] = jnp.zeros((NB, 1, L, L), f32)
        fp["wvec"] = jnp.zeros((NB, 1, 1, dk), f32)
    return fp


def local_self_attention_forward(params, seqs, timeline_mask, *,
                                 global_num, local_num):
    B, L, H = seqs.shape
    num_blocks = len(params["blocks"])
    fp = _prepare_fused_params(params, L, H, global_num, local_num)

    keep2d = jnp.logical_not(timeline_mask).astype(seqs.dtype).reshape(B * L, 1)
    seqs2d = seqs.reshape(B * L, H)

    args = (seqs2d, keep2d,
            fp["ln1_g"], fp["ln1_b"], fp["wq"], fp["bq"], fp["wkv"], fp["bkv"],
            fp["wo"], fp["bo"], fp["ln2_g"], fp["ln2_b"],
            fp["w1"], fp["b1"], fp["w2"], fp["b2"],
            fp["pq"], fp["pk"], fp["rwb"], fp["wvec"],
            fp["lnf_g"], fp["lnf_b"])

    kernel = partial(_fused_kernel, num_blocks=num_blocks, B=B, L=L, H=H,
                     global_num=global_num, local_num=local_num)

    out2d = pl.pallas_call(
        kernel,
        out_shape=jax.ShapeDtypeStruct((B * L, H), seqs.dtype),
        grid=(1,),
        in_specs=[_full_spec(a.shape) for a in args],
        out_specs=_full_spec((B * L, H)),
        compiler_params=pltpu.CompilerParams(
            dimension_semantics=("arbitrary",)),
    )(*args)

    attn_output_weights = []   # matches reference: never populated
    return out2d.reshape(B, L, H), attn_output_weights


# ------------------------- deterministic parameters ------------------------

def init_params(key, *, H, global_num, local_num, max_len, num_blocks):
    nh = global_num + local_num
    dk = H // nh
    keys = iter(jax.random.split(key, 16 * num_blocks + 4))

    def nrm(shape, scale=0.05):
        return (scale * jax.random.normal(next(keys), shape)).astype(jnp.float32)

    blocks = []
    for _ in range(num_blocks):
        blocks.append(dict(
            ln1_g=jnp.ones((H,), jnp.float32), ln1_b=jnp.zeros((H,), jnp.float32),
            ln2_g=jnp.ones((H,), jnp.float32), ln2_b=jnp.zeros((H,), jnp.float32),
            mha=dict(
                wq=nrm((H, H)), bq=nrm((H,)),
                wk=nrm((H, H)), bk=nrm((H,)),
                wv=nrm((H, H)), bv=nrm((H,)),
                wo=nrm((H, H)), bo=nrm((H,)),
                abs_q=nrm((max_len, dk * local_num)),
                abs_k=nrm((max_len, dk * local_num)),
                rel=nrm((2 * max_len - 1, dk * local_num)),
                mlp_w=nrm((local_num, dk)),
                mlp_b=nrm((local_num,)),
            ),
            w1=nrm((H, H)), b1=nrm((H,)),   # Conv1d(H, H, 1) as [H_out, H_in]
            w2=nrm((H, H)), b2=nrm((H,)),
        ))
    return dict(blocks=blocks,
                lnf_g=jnp.ones((H,), jnp.float32),
                lnf_b=jnp.zeros((H,), jnp.float32))


if __name__ == "__main__":
    # args: trm_hidden_dim=32, trm_num_heads=2, local_num_heads=2,
    #       trm_max_len=8, trm_num_blocks=2, dropouts=0 (identity)
    B, L, H = 2, 8, 32
    global_num, local_num = 2, 2
    num_blocks = 2

    key = jax.random.PRNGKey(0)
    kp, kx = jax.random.split(key)
    params = init_params(kp, H=H, global_num=global_num, local_num=local_num,
                         max_len=L, num_blocks=num_blocks)
    seqs = jax.random.normal(kx, (B, L, H), jnp.float32)
    timeline_mask = jnp.zeros((B, L), jnp.bool_).at[:, :2].set(True)  # pad first 2

    fwd = jax.jit(partial(local_self_attention_forward,
                          global_num=global_num, local_num=local_num))
    log_feats, attn_w = fwd(params, seqs, timeline_mask)
    jax.block_until_ready(log_feats)
    assert log_feats.shape == (B, L, H)
    print("KERNEL_OK")
</pallas_src>

<mosaic_0001>
module attributes {stable_mosaic.version = 11 : i64} {
  func.func @_fused_kernel(%arg0: i32, %arg1: memref<16x32xf32, #tpu.memory_space<vmem>>, %arg2: memref<16x1xf32, #tpu.memory_space<vmem>>, %arg3: memref<2x1x32xf32, #tpu.memory_space<vmem>>, %arg4: memref<2x1x32xf32, #tpu.memory_space<vmem>>, %arg5: memref<2x32x32xf32, #tpu.memory_space<vmem>>, %arg6: memref<2x1x32xf32, #tpu.memory_space<vmem>>, %arg7: memref<2x32x64xf32, #tpu.memory_space<vmem>>, %arg8: memref<2x1x64xf32, #tpu.memory_space<vmem>>, %arg9: memref<2x32x32xf32, #tpu.memory_space<vmem>>, %arg10: memref<2x1x32xf32, #tpu.memory_space<vmem>>, %arg11: memref<2x1x32xf32, #tpu.memory_space<vmem>>, %arg12: memref<2x1x32xf32, #tpu.memory_space<vmem>>, %arg13: memref<2x32x32xf32, #tpu.memory_space<vmem>>, %arg14: memref<2x1x32xf32, #tpu.memory_space<vmem>>, %arg15: memref<2x32x32xf32, #tpu.memory_space<vmem>>, %arg16: memref<2x1x32xf32, #tpu.memory_space<vmem>>, %arg17: memref<2x2x8x8xf32, #tpu.memory_space<vmem>>, %arg18: memref<2x2x8x8xf32, #tpu.memory_space<vmem>>, %arg19: memref<2x2x8x8xf32, #tpu.memory_space<vmem>>, %arg20: memref<2x2x1x8xf32, #tpu.memory_space<vmem>>, %arg21: memref<1x32xf32, #tpu.memory_space<vmem>>, %arg22: memref<1x32xf32, #tpu.memory_space<vmem>>, %arg23: memref<16x32xf32, #tpu.memory_space<vmem>>) attributes {dimension_semantics = [#tpu.dimension_semantics<arbitrary>], iteration_bounds = array<i64: 1>, scalar_prefetch = 0 : i64, scratch_operands = 0 : i64, tpu.core_type = #tpu.core_type<tc>, window_params = [{pipeline_mode = #tpu.pipeline_mode<synchronous>, transform_indices = @transform_0, window_bounds = array<i64: 16, 32>}, {pipeline_mode = #tpu.pipeline_mode<synchronous>, transform_indices = @transform_1, window_bounds = array<i64: 16, 1>}, {pipeline_mode = #tpu.pipeline_mode<synchronous>, transform_indices = @transform_2, window_bounds = array<i64: 2, 1, 32>}, {pipeline_mode = #tpu.pipeline_mode<synchronous>, transform_indices = @transform_3, window_bounds = array<i64: 2, 1, 32>}, {pipeline_mode = #tpu.pipeline_mode<synchronous>, transform_indices = @transform_4, window_bounds = array<i64: 2, 32, 32>}, {pipeline_mode = #tpu.pipeline_mode<synchronous>, transform_indices = @transform_5, window_bounds = array<i64: 2, 1, 32>}, {pipeline_mode = #tpu.pipeline_mode<synchronous>, transform_indices = @transform_6, window_bounds = array<i64: 2, 32, 64>}, {pipeline_mode = #tpu.pipeline_mode<synchronous>, transform_indices = @transform_7, window_bounds = array<i64: 2, 1, 64>}, {pipeline_mode = #tpu.pipeline_mode<synchronous>, transform_indices = @transform_8, window_bounds = array<i64: 2, 32, 32>}, {pipeline_mode = #tpu.pipeline_mode<synchronous>, transform_indices = @transform_9, window_bounds = array<i64: 2, 1, 32>}, {pipeline_mode = #tpu.pipeline_mode<synchronous>, transform_indices = @transform_10, window_bounds = array<i64: 2, 1, 32>}, {pipeline_mode = #tpu.pipeline_mode<synchronous>, transform_indices = @transform_11, window_bounds = array<i64: 2, 1, 32>}, {pipeline_mode = #tpu.pipeline_mode<synchronous>, transform_indices = @transform_12, window_bounds = array<i64: 2, 32, 32>}, {pipeline_mode = #tpu.pipeline_mode<synchronous>, transform_indices = @transform_13, window_bounds = array<i64: 2, 1, 32>}, {pipeline_mode = #tpu.pipeline_mode<synchronous>, transform_indices = @transform_14, window_bounds = array<i64: 2, 32, 32>}, {pipeline_mode = #tpu.pipeline_mode<synchronous>, transform_indices = @transform_15, window_bounds = array<i64: 2, 1, 32>}, {pipeline_mode = #tpu.pipeline_mode<synchronous>, transform_indices = @transform_16, window_bounds = array<i64: 2, 2, 8, 8>}, {pipeline_mode = #tpu.pipeline_mode<synchronous>, transform_indices = @transform_17, window_bounds = array<i64: 2, 2, 8, 8>}, {pipeline_mode = #tpu.pipeline_mode<synchronous>, transform_indices = @transform_18, window_bounds = array<i64: 2, 2, 8, 8>}, {pipeline_mode = #tpu.pipeline_mode<synchronous>, transform_indices = @transform_19, window_bounds = array<i64: 2, 2, 1, 8>}, {pipeline_mode = #tpu.pipeline_mode<synchronous>, transform_indices = @transform_20, window_bounds = array<i64: 1, 32>}, {pipeline_mode = #tpu.pipeline_mode<synchronous>, transform_indices = @transform_21, window_bounds = array<i64: 1, 32>}, {pipeline_mode = #tpu.pipeline_mode<synchronous>, transform_indices = @transform_22, window_bounds = array<i64: 16, 32>}]} {
    %c0 = arith.constant 0 : index
    %c0_0 = arith.constant 0 : index
    %0 = vector.load %arg2[%c0, %c0_0] : memref<16x1xf32, #tpu.memory_space<vmem>>, vector<16x1xf32>
    %c0_1 = arith.constant 0 : index
    %c0_2 = arith.constant 0 : index
    %1 = vector.load %arg1[%c0_1, %c0_2] : memref<16x32xf32, #tpu.memory_space<vmem>>, vector<16x32xf32>
    %2 = vector.broadcast %0 : vector<16x1xf32> to vector<16x32xf32>
    %3 = arith.mulf %1, %2 : vector<16x32xf32>
    %4 = tpu.iota {dimensions = array<i32: 0>} : vector<8x8xi32>
    %5 = tpu.iota {dimensions = array<i32: 1>} : vector<8x8xi32>
    %6 = arith.cmpi sgt, %5, %4 : vector<8x8xi32>
    %c0_3 = arith.constant 0 : index
    %c0_4 = arith.constant 0 : index
    %c0_5 = arith.constant 0 : index
    %7 = vector.load %arg3[%c0_3, %c0_4, %c0_5] : memref<2x1x32xf32, #tpu.memory_space<vmem>>, vector<1x1x32xf32>
    %8 = vector.shape_cast %7 : vector<1x1x32xf32> to vector<1x32xf32>
    %c0_6 = arith.constant 0 : index
    %c0_7 = arith.constant 0 : index
    %c0_8 = arith.constant 0 : index
    %9 = vector.load %arg4[%c0_6, %c0_7, %c0_8] : memref<2x1x32xf32, #tpu.memory_space<vmem>>, vector<1x1x32xf32>
    %10 = vector.shape_cast %9 : vector<1x1x32xf32> to vector<1x32xf32>
    %cst = arith.constant dense<0.000000e+00> : vector<16xf32>
    %11 = vector.multi_reduction <add>, %3, %cst [1] : vector<16x32xf32> to vector<16xf32>
    %12 = vector.shape_cast %11 : vector<16xf32> to vector<16x1xf32>
    %cst_9 = arith.constant 3.200000e+01 : f32
    %13 = vector.broadcast %cst_9 : f32 to vector<16x1xf32>
    %14 = arith.divf %12, %13 : vector<16x1xf32>
    %15 = vector.broadcast %14 : vector<16x1xf32> to vector<16x32xf32>
    %16 = arith.subf %3, %15 : vector<16x32xf32>
    %17 = vector.broadcast %14 : vector<16x1xf32> to vector<16x32xf32>
    %18 = arith.subf %3, %17 : vector<16x32xf32>
    %19 = arith.mulf %16, %18 : vector<16x32xf32>
    %cst_10 = arith.constant dense<0.000000e+00> : vector<16xf32>
    %20 = vector.multi_reduction <add>, %19, %cst_10 [1] : vector<16x32xf32> to vector<16xf32>
    %21 = vector.shape_cast %20 : vector<16xf32> to vector<16x1xf32>
    %cst_11 = arith.constant 3.200000e+01 : f32
    %22 = vector.broadcast %cst_11 : f32 to vector<16x1xf32>
    %23 = arith.divf %21, %22 : vector<16x1xf32>
    %24 = vector.broadcast %14 : vector<16x1xf32> to vector<16x32xf32>
    %25 = arith.subf %3, %24 : vector<16x32xf32>
    %cst_12 = arith.constant 9.99999993E-9 : f32
    %26 = vector.broadcast %cst_12 : f32 to vector<16x1xf32>
    %27 = arith.addf %23, %26 : vector<16x1xf32>
    %28 = math.rsqrt %27 : vector<16x1xf32>
    %29 = vector.broadcast %28 : vector<16x1xf32> to vector<16x32xf32>
    %30 = arith.mulf %25, %29 : vector<16x32xf32>
    %31 = vector.broadcast %8 : vector<1x32xf32> to vector<16x32xf32>
    %32 = arith.mulf %30, %31 : vector<16x32xf32>
    %33 = vector.broadcast %10 : vector<1x32xf32> to vector<16x32xf32>
    %34 = arith.addf %32, %33 : vector<16x32xf32>
    %c0_13 = arith.constant 0 : index
    %c0_14 = arith.constant 0 : index
    %c0_15 = arith.constant 0 : index
    %35 = vector.load %arg5[%c0_13, %c0_14, %c0_15] : memref<2x32x32xf32, #tpu.memory_space<vmem>>, vector<1x32x32xf32>
    %36 = vector.shape_cast %35 : vector<1x32x32xf32> to vector<32x32xf32>
    %cst_16 = arith.constant dense<0.000000e+00> : vector<16x32xf32>
    %37 = tpu.matmul %34, %36, %cst_16 {dimension_numbers = #tpu.dot_dimension_numbers<[1], [0], [0], [1], [0, 0, 1, 1], [], []>} : vector<16x32xf32>, vector<32x32xf32>, vector<16x32xf32> -> vector<16x32xf32>
    %c0_17 = arith.constant 0 : index
    %c0_18 = arith.constant 0 : index
    %c0_19 = arith.constant 0 : index
    %38 = vector.load %arg6[%c0_17, %c0_18, %c0_19] : memref<2x1x32xf32, #tpu.memory_space<vmem>>, vector<1x1x32xf32>
    %39 = vector.shape_cast %38 : vector<1x1x32xf32> to vector<1x32xf32>
    %40 = vector.broadcast %39 : vector<1x32xf32> to vector<16x32xf32>
    %41 = arith.addf %37, %40 : vector<16x32xf32>
    %c0_20 = arith.constant 0 : index
    %c0_21 = arith.constant 0 : index
    %c0_22 = arith.constant 0 : index
    %42 = vector.load %arg7[%c0_20, %c0_21, %c0_22] : memref<2x32x64xf32, #tpu.memory_space<vmem>>, vector<1x32x64xf32>
    %43 = vector.shape_cast %42 : vector<1x32x64xf32> to vector<32x64xf32>
    %cst_23 = arith.constant dense<0.000000e+00> : vector<16x64xf32>
    %44 = tpu.matmul %3, %43, %cst_23 {dimension_numbers = #tpu.dot_dimension_numbers<[1], [0], [0], [1], [0, 0, 1, 1], [], []>} : vector<16x32xf32>, vector<32x64xf32>, vector<16x64xf32> -> vector<16x64xf32>
    %c0_24 = arith.constant 0 : index
    %c0_25 = arith.constant 0 : index
    %c0_26 = arith.constant 0 : index
    %45 = vector.load %arg8[%c0_24, %c0_25, %c0_26] : memref<2x1x64xf32, #tpu.memory_space<vmem>>, vector<1x1x64xf32>
    %46 = vector.shape_cast %45 : vector<1x1x64xf32> to vector<1x64xf32>
    %47 = vector.broadcast %46 : vector<1x64xf32> to vector<16x64xf32>
    %48 = arith.addf %44, %47 : vector<16x64xf32>
    %49 = vector.extract_strided_slice %48 {offsets = [0, 0], sizes = [16, 32], strides = [1, 1]} : vector<16x64xf32> to vector<16x32xf32>
    %50 = vector.extract_strided_slice %48 {offsets = [0, 32], sizes = [16, 32], strides = [1, 1]} : vector<16x64xf32> to vector<16x32xf32>
    %c0_27 = arith.constant 0 : index
    %c0_28 = arith.constant 0 : index
    %c0_29 = arith.constant 0 : index
    %c0_30 = arith.constant 0 : index
    %51 = vector.load %arg17[%c0_27, %c0_28, %c0_29, %c0_30] : memref<2x2x8x8xf32, #tpu.memory_space<vmem>>, vector<1x2x8x8xf32>
    %52 = vector.shape_cast %51 : vector<1x2x8x8xf32> to vector<2x8x8xf32>
    %c0_31 = arith.constant 0 : index
    %c0_32 = arith.constant 0 : index
    %c0_33 = arith.constant 0 : index
    %c0_34 = arith.constant 0 : index
    %53 = vector.load %arg18[%c0_31, %c0_32, %c0_33, %c0_34] : memref<2x2x8x8xf32, #tpu.memory_space<vmem>>, vector<1x2x8x8xf32>
    %54 = vector.shape_cast %53 : vector<1x2x8x8xf32> to vector<2x8x8xf32>
    %c0_35 = arith.constant 0 : index
    %c0_36 = arith.constant 0 : index
    %c0_37 = arith.constant 0 : index
    %c0_38 = arith.constant 0 : index
    %55 = vector.load %arg19[%c0_35, %c0_36, %c0_37, %c0_38] : memref<2x2x8x8xf32, #tpu.memory_space<vmem>>, vector<1x2x8x8xf32>
    %56 = vector.shape_cast %55 : vector<1x2x8x8xf32> to vector<2x8x8xf32>
    %c0_39 = arith.constant 0 : index
    %c0_40 = arith.constant 0 : index
    %c0_41 = arith.constant 0 : index
    %c0_42 = arith.constant 0 : index
    %57 = vector.load %arg20[%c0_39, %c0_40, %c0_41, %c0_42] : memref<2x2x1x8xf32, #tpu.memory_space<vmem>>, vector<1x2x1x8xf32>
    %58 = vector.shape_cast %57 : vector<1x2x1x8xf32> to vector<2x1x8xf32>
    %59 = vector.extract_strided_slice %41 {offsets = [0, 0], sizes = [8, 8], strides = [1, 1]} : vector<16x32xf32> to vector<8x8xf32>
    %60 = vector.extract_strided_slice %49 {offsets = [0, 0], sizes = [8, 8], strides = [1, 1]} : vector<16x32xf32> to vector<8x8xf32>
    %61 = vector.extract_strided_slice %50 {offsets = [0, 0], sizes = [8, 8], strides = [1, 1]} : vector<16x32xf32> to vector<8x8xf32>
    %62 = tpu.transpose %60, [1, 0] : vector<8x8xf32> -> vector<8x8xf32>
    %cst_43 = arith.constant dense<0.000000e+00> : vector<8x8xf32>
    %63 = tpu.matmul %59, %62, %cst_43 {dimension_numbers = #tpu.dot_dimension_numbers<[1], [0], [0], [1], [0, 0, 1, 1], [], []>} : vector<8x8xf32>, vector<8x8xf32>, vector<8x8xf32> -> vector<8x8xf32>
    %cst_44 = arith.constant 0.353553385 : f32
    %64 = vector.broadcast %cst_44 : f32 to vector<8x8xf32>
    %65 = arith.mulf %63, %64 : vector<8x8xf32>
    %cst_45 = arith.constant -1.000000e+04 : f32
    %66 = vector.broadcast %cst_45 : f32 to vector<8x8xf32>
    %67 = arith.select %6, %66, %65 : vector<8x8xi1>, vector<8x8xf32>
    %cst_46 = arith.constant dense<0xFF800000> : vector<8xf32>
    %68 = vector.multi_reduction <maximumf>, %67, %cst_46 [1] : vector<8x8xf32> to vector<8xf32>
    %69 = vector.shape_cast %68 : vector<8xf32> to vector<8x1xf32>
    %70 = vector.broadcast %69 : vector<8x1xf32> to vector<8x8xf32>
    %71 = arith.subf %67, %70 : vector<8x8xf32>
    %72 = math.exp %71 : vector<8x8xf32>
    %cst_47 = arith.constant dense<0.000000e+00> : vector<8xf32>
    %73 = vector.multi_reduction <add>, %72, %cst_47 [1] : vector<8x8xf32> to vector<8xf32>
    %74 = vector.shape_cast %73 : vector<8xf32> to vector<8x1xf32>
    %75 = tpu.reciprocal %74 {approx = true} : vector<8x1xf32> -> vector<8x1xf32>
    %76 = vector.broadcast %75 : vector<8x1xf32> to vector<8x8xf32>
    %77 = arith.mulf %72, %76 : vector<8x8xf32>
    %cst_48 = arith.constant dense<0.000000e+00> : vector<8x8xf32>
    %78 = tpu.matmul %77, %61, %cst_48 {dimension_numbers = #tpu.dot_dimension_numbers<[1], [0], [0], [1], [0, 0, 1, 1], [], []>} : vector<8x8xf32>, vector<8x8xf32>, vector<8x8xf32> -> vector<8x8xf32>
    %79 = vector.extract_strided_slice %41 {offsets = [0, 8], sizes = [8, 8], strides = [1, 1]} : vector<16x32xf32> to vector<8x8xf32>
    %80 = vector.extract_strided_slice %49 {offsets = [0, 8], sizes = [8, 8], strides = [1, 1]} : vector<16x32xf32> to vector<8x8xf32>
    %81 = vector.extract_strided_slice %50 {offsets = [0, 8], sizes = [8, 8], strides = [1, 1]} : vector<16x32xf32> to vector<8x8xf32>
    %82 = tpu.transpose %80, [1, 0] : vector<8x8xf32> -> vector<8x8xf32>
    %cst_49 = arith.constant dense<0.000000e+00> : vector<8x8xf32>
    %83 = tpu.matmul %79, %82, %cst_49 {dimension_numbers = #tpu.dot_dimension_numbers<[1], [0], [0], [1], [0, 0, 1, 1], [], []>} : vector<8x8xf32>, vector<8x8xf32>, vector<8x8xf32> -> vector<8x8xf32>
    %cst_50 = arith.constant 0.353553385 : f32
    %84 = vector.broadcast %cst_50 : f32 to vector<8x8xf32>
    %85 = arith.mulf %83, %84 : vector<8x8xf32>
    %cst_51 = arith.constant -1.000000e+04 : f32
    %86 = vector.broadcast %cst_51 : f32 to vector<8x8xf32>
    %87 = arith.select %6, %86, %85 : vector<8x8xi1>, vector<8x8xf32>
    %cst_52 = arith.constant dense<0xFF800000> : vector<8xf32>
    %88 = vector.multi_reduction <maximumf>, %87, %cst_52 [1] : vector<8x8xf32> to vector<8xf32>
    %89 = vector.shape_cast %88 : vector<8xf32> to vector<8x1xf32>
    %90 = vector.broadcast %89 : vector<8x1xf32> to vector<8x8xf32>
    %91 = arith.subf %87, %90 : vector<8x8xf32>
    %92 = math.exp %91 : vector<8x8xf32>
    %cst_53 = arith.constant dense<0.000000e+00> : vector<8xf32>
    %93 = vector.multi_reduction <add>, %92, %cst_53 [1] : vector<8x8xf32> to vector<8xf32>
    %94 = vector.shape_cast %93 : vector<8xf32> to vector<8x1xf32>
    %95 = tpu.reciprocal %94 {approx = true} : vector<8x1xf32> -> vector<8x1xf32>
    %96 = vector.broadcast %95 : vector<8x1xf32> to vector<8x8xf32>
    %97 = arith.mulf %92, %96 : vector<8x8xf32>
    %cst_54 = arith.constant dense<0.000000e+00> : vector<8x8xf32>
    %98 = tpu.matmul %97, %81, %cst_54 {dimension_numbers = #tpu.dot_dimension_numbers<[1], [0], [0], [1], [0, 0, 1, 1], [], []>} : vector<8x8xf32>, vector<8x8xf32>, vector<8x8xf32> -> vector<8x8xf32>
    %99 = vector.extract_strided_slice %41 {offsets = [0, 16], sizes = [8, 8], strides = [1, 1]} : vector<16x32xf32> to vector<8x8xf32>
    %100 = vector.extract_strided_slice %49 {offsets = [0, 16], sizes = [8, 8], strides = [1, 1]} : vector<16x32xf32> to vector<8x8xf32>
    %101 = vector.extract_strided_slice %50 {offsets = [0, 16], sizes = [8, 8], strides = [1, 1]} : vector<16x32xf32> to vector<8x8xf32>
    %102 = vector.extract_strided_slice %52 {offsets = [0, 0, 0], sizes = [1, 8, 8], strides = [1, 1, 1]} : vector<2x8x8xf32> to vector<1x8x8xf32>
    %103 = vector.shape_cast %102 : vector<1x8x8xf32> to vector<8x8xf32>
    %104 = arith.addf %99, %103 : vector<8x8xf32>
    %105 = vector.extract_strided_slice %54 {offsets = [0, 0, 0], sizes = [1, 8, 8], strides = [1, 1, 1]} : vector<2x8x8xf32> to vector<1x8x8xf32>
    %106 = vector.shape_cast %105 : vector<1x8x8xf32> to vector<8x8xf32>
    %107 = arith.addf %100, %106 : vector<8x8xf32>
    %108 = tpu.transpose %107, [1, 0] : vector<8x8xf32> -> vector<8x8xf32>
    %cst_55 = arith.constant dense<0.000000e+00> : vector<8x8xf32>
    %109 = tpu.matmul %104, %108, %cst_55 {dimension_numbers = #tpu.dot_dimension_numbers<[1], [0], [0], [1], [0, 0, 1, 1], [], []>} : vector<8x8xf32>, vector<8x8xf32>, vector<8x8xf32> -> vector<8x8xf32>
    %cst_56 = arith.constant 0.353553385 : f32
    %110 = vector.broadcast %cst_56 : f32 to vector<8x8xf32>
    %111 = arith.mulf %109, %110 : vector<8x8xf32>
    %112 = vector.extract_strided_slice %58 {offsets = [0, 0, 0], sizes = [1, 1, 8], strides = [1, 1, 1]} : vector<2x1x8xf32> to vector<1x1x8xf32>
    %113 = vector.shape_cast %112 : vector<1x1x8xf32> to vector<1x8xf32>
    %114 = vector.broadcast %113 : vector<1x8xf32> to vector<8x8xf32>
    %115 = arith.mulf %101, %114 : vector<8x8xf32>
    %cst_57 = arith.constant dense<0.000000e+00> : vector<8xf32>
    %116 = vector.multi_reduction <add>, %115, %cst_57 [1] : vector<8x8xf32> to vector<8xf32>
    %117 = vector.shape_cast %116 : vector<8xf32> to vector<8x1xf32>
    %118 = vector.extract_strided_slice %56 {offsets = [0, 0, 0], sizes = [1, 8, 8], strides = [1, 1, 1]} : vector<2x8x8xf32> to vector<1x8x8xf32>
    %119 = vector.shape_cast %118 : vector<1x8x8xf32> to vector<8x8xf32>
    %120 = arith.addf %111, %119 : vector<8x8xf32>
    %121 = vector.broadcast %117 : vector<8x1xf32> to vector<8x8xf32>
    %122 = arith.addf %120, %121 : vector<8x8xf32>
    %123 = tpu.transpose %117, [1, 0] : vector<8x1xf32> -> vector<1x8xf32>
    %124 = vector.broadcast %123 : vector<1x8xf32> to vector<8x8xf32>
    %125 = arith.addf %122, %124 : vector<8x8xf32>
    %cst_58 = arith.constant -1.000000e+04 : f32
    %126 = vector.broadcast %cst_58 : f32 to vector<8x8xf32>
    %127 = arith.select %6, %126, %125 : vector<8x8xi1>, vector<8x8xf32>
    %cst_59 = arith.constant dense<0xFF800000> : vector<8xf32>
    %128 = vector.multi_reduction <maximumf>, %127, %cst_59 [1] : vector<8x8xf32> to vector<8xf32>
    %129 = vector.shape_cast %128 : vector<8xf32> to vector<8x1xf32>
    %130 = vector.broadcast %129 : vector<8x1xf32> to vector<8x8xf32>
    %131 = arith.subf %127, %130 : vector<8x8xf32>
    %132 = math.exp %131 : vector<8x8xf32>
    %cst_60 = arith.constant dense<0.000000e+00> : vector<8xf32>
    %133 = vector.multi_reduction <add>, %132, %cst_60 [1] : vector<8x8xf32> to vector<8xf32>
    %134 = vector.shape_cast %133 : vector<8xf32> to vector<8x1xf32>
    %135 = tpu.reciprocal %134 {approx = true} : vector<8x1xf32> -> vector<8x1xf32>
    %136 = vector.broadcast %135 : vector<8x1xf32> to vector<8x8xf32>
    %137 = arith.mulf %132, %136 : vector<8x8xf32>
    %cst_61 = arith.constant dense<0.000000e+00> : vector<8x8xf32>
    %138 = tpu.matmul %137, %101, %cst_61 {dimension_numbers = #tpu.dot_dimension_numbers<[1], [0], [0], [1], [0, 0, 1, 1], [], []>} : vector<8x8xf32>, vector<8x8xf32>, vector<8x8xf32> -> vector<8x8xf32>
    %139 = vector.extract_strided_slice %41 {offsets = [0, 24], sizes = [8, 8], strides = [1, 1]} : vector<16x32xf32> to vector<8x8xf32>
    %140 = vector.extract_strided_slice %49 {offsets = [0, 24], sizes = [8, 8], strides = [1, 1]} : vector<16x32xf32> to vector<8x8xf32>
    %141 = vector.extract_strided_slice %50 {offsets = [0, 24], sizes = [8, 8], strides = [1, 1]} : vector<16x32xf32> to vector<8x8xf32>
    %142 = vector.extract_strided_slice %52 {offsets = [1, 0, 0], sizes = [1, 8, 8], strides = [1, 1, 1]} : vector<2x8x8xf32> to vector<1x8x8xf32>
    %143 = vector.shape_cast %142 : vector<1x8x8xf32> to vector<8x8xf32>
    %144 = arith.addf %139, %143 : vector<8x8xf32>
    %145 = vector.extract_strided_slice %54 {offsets = [1, 0, 0], sizes = [1, 8, 8], strides = [1, 1, 1]} : vector<2x8x8xf32> to vector<1x8x8xf32>
    %146 = vector.shape_cast %145 : vector<1x8x8xf32> to vector<8x8xf32>
    %147 = arith.addf %140, %146 : vector<8x8xf32>
    %148 = tpu.transpose %147, [1, 0] : vector<8x8xf32> -> vector<8x8xf32>
    %cst_62 = arith.constant dense<0.000000e+00> : vector<8x8xf32>
    %149 = tpu.matmul %144, %148, %cst_62 {dimension_numbers = #tpu.dot_dimension_numbers<[1], [0], [0], [1], [0, 0, 1, 1], [], []>} : vector<8x8xf32>, vector<8x8xf32>, vector<8x8xf32> -> vector<8x8xf32>
    %cst_63 = arith.constant 0.353553385 : f32
    %150 = vector.broadcast %cst_63 : f32 to vector<8x8xf32>
    %151 = arith.mulf %149, %150 : vector<8x8xf32>
    %152 = vector.extract_strided_slice %58 {offsets = [1, 0, 0], sizes = [1, 1, 8], strides = [1, 1, 1]} : vector<2x1x8xf32> to vector<1x1x8xf32>
    %153 = vector.shape_cast %152 : vector<1x1x8xf32> to vector<1x8xf32>
    %154 = vector.broadcast %153 : vector<1x8xf32> to vector<8x8xf32>
    %155 = arith.mulf %141, %154 : vector<8x8xf32>
    %cst_64 = arith.constant dense<0.000000e+00> : vector<8xf32>
    %156 = vector.multi_reduction <add>, %155, %cst_64 [1] : vector<8x8xf32> to vector<8xf32>
    %157 = vector.shape_cast %156 : vector<8xf32> to vector<8x1xf32>
    %158 = vector.extract_strided_slice %56 {offsets = [1, 0, 0], sizes = [1, 8, 8], strides = [1, 1, 1]} : vector<2x8x8xf32> to vector<1x8x8xf32>
    %159 = vector.shape_cast %158 : vector<1x8x8xf32> to vector<8x8xf32>
    %160 = arith.addf %151, %159 : vector<8x8xf32>
    %161 = vector.broadcast %157 : vector<8x1xf32> to vector<8x8xf32>
    %162 = arith.addf %160, %161 : vector<8x8xf32>
    %163 = tpu.transpose %157, [1, 0] : vector<8x1xf32> -> vector<1x8xf32>
    %164 = vector.broadcast %163 : vector<1x8xf32> to vector<8x8xf32>
    %165 = arith.addf %162, %164 : vector<8x8xf32>
    %cst_65 = arith.constant -1.000000e+04 : f32
    %166 = vector.broadcast %cst_65 : f32 to vector<8x8xf32>
    %167 = arith.select %6, %166, %165 : vector<8x8xi1>, vector<8x8xf32>
    %cst_66 = arith.constant dense<0xFF800000> : vector<8xf32>
    %168 = vector.multi_reduction <maximumf>, %167, %cst_66 [1] : vector<8x8xf32> to vector<8xf32>
    %169 = vector.shape_cast %168 : vector<8xf32> to vector<8x1xf32>
    %170 = vector.broadcast %169 : vector<8x1xf32> to vector<8x8xf32>
    %171 = arith.subf %167, %170 : vector<8x8xf32>
    %172 = math.exp %171 : vector<8x8xf32>
    %cst_67 = arith.constant dense<0.000000e+00> : vector<8xf32>
    %173 = vector.multi_reduction <add>, %172, %cst_67 [1] : vector<8x8xf32> to vector<8xf32>
    %174 = vector.shape_cast %173 : vector<8xf32> to vector<8x1xf32>
    %175 = tpu.reciprocal %174 {approx = true} : vector<8x1xf32> -> vector<8x1xf32>
    %176 = vector.broadcast %175 : vector<8x1xf32> to vector<8x8xf32>
    %177 = arith.mulf %172, %176 : vector<8x8xf32>
    %cst_68 = arith.constant dense<0.000000e+00> : vector<8x8xf32>
    %178 = tpu.matmul %177, %141, %cst_68 {dimension_numbers = #tpu.dot_dimension_numbers<[1], [0], [0], [1], [0, 0, 1, 1], [], []>} : vector<8x8xf32>, vector<8x8xf32>, vector<8x8xf32> -> vector<8x8xf32>
    %179 = tpu.concatenate %78, %98, %138, %178 in 1 : vector<8x8xf32>, vector<8x8xf32>, vector<8x8xf32>, vector<8x8xf32> -> vector<8x32xf32>
    %180 = vector.extract_strided_slice %41 {offsets = [8, 0], sizes = [8, 8], strides = [1, 1]} : vector<16x32xf32> to vector<8x8xf32>
    %181 = vector.extract_strided_slice %49 {offsets = [8, 0], sizes = [8, 8], strides = [1, 1]} : vector<16x32xf32> to vector<8x8xf32>
    %182 = vector.extract_strided_slice %50 {offsets = [8, 0], sizes = [8, 8], strides = [1, 1]} : vector<16x32xf32> to vector<8x8xf32>
    %183 = tpu.transpose %181, [1, 0] : vector<8x8xf32> -> vector<8x8xf32>
    %cst_69 = arith.constant dense<0.000000e+00> : vector<8x8xf32>
    %184 = tpu.matmul %180, %183, %cst_69 {dimension_numbers = #tpu.dot_dimension_numbers<[1], [0], [0], [1], [0, 0, 1, 1], [], []>} : vector<8x8xf32>, vector<8x8xf32>, vector<8x8xf32> -> vector<8x8xf32>
    %cst_70 = arith.constant 0.353553385 : f32
    %185 = vector.broadcast %cst_70 : f32 to vector<8x8xf32>
    %186 = arith.mulf %184, %185 : vector<8x8xf32>
    %cst_71 = arith.constant -1.000000e+04 : f32
    %187 = vector.broadcast %cst_71 : f32 to vector<8x8xf32>
    %188 = arith.select %6, %187, %186 : vector<8x8xi1>, vector<8x8xf32>
    %cst_72 = arith.constant dense<0xFF800000> : vector<8xf32>
    %189 = vector.multi_reduction <maximumf>, %188, %cst_72 [1] : vector<8x8xf32> to vector<8xf32>
    %190 = vector.shape_cast %189 : vector<8xf32> to vector<8x1xf32>
    %191 = vector.broadcast %190 : vector<8x1xf32> to vector<8x8xf32>
    %192 = arith.subf %188, %191 : vector<8x8xf32>
    %193 = math.exp %192 : vector<8x8xf32>
    %cst_73 = arith.constant dense<0.000000e+00> : vector<8xf32>
    %194 = vector.multi_reduction <add>, %193, %cst_73 [1] : vector<8x8xf32> to vector<8xf32>
    %195 = vector.shape_cast %194 : vector<8xf32> to vector<8x1xf32>
    %196 = tpu.reciprocal %195 {approx = true} : vector<8x1xf32> -> vector<8x1xf32>
    %197 = vector.broadcast %196 : vector<8x1xf32> to vector<8x8xf32>
    %198 = arith.mulf %193, %197 : vector<8x8xf32>
    %cst_74 = arith.constant dense<0.000000e+00> : vector<8x8xf32>
    %199 = tpu.matmul %198, %182, %cst_74 {dimension_numbers = #tpu.dot_dimension_numbers<[1], [0], [0], [1], [0, 0, 1, 1], [], []>} : vector<8x8xf32>, vector<8x8xf32>, vector<8x8xf32> -> vector<8x8xf32>
    %200 = vector.extract_strided_slice %41 {offsets = [8, 8], sizes = [8, 8], strides = [1, 1]} : vector<16x32xf32> to vector<8x8xf32>
    %201 = vector.extract_strided_slice %49 {offsets = [8, 8], sizes = [8, 8], strides = [1, 1]} : vector<16x32xf32> to vector<8x8xf32>
    %202 = vector.extract_strided_slice %50 {offsets = [8, 8], sizes = [8, 8], strides = [1, 1]} : vector<16x32xf32> to vector<8x8xf32>
    %203 = tpu.transpose %201, [1, 0] : vector<8x8xf32> -> vector<8x8xf32>
    %cst_75 = arith.constant dense<0.000000e+00> : vector<8x8xf32>
    %204 = tpu.matmul %200, %203, %cst_75 {dimension_numbers = #tpu.dot_dimension_numbers<[1], [0], [0], [1], [0, 0, 1, 1], [], []>} : vector<8x8xf32>, vector<8x8xf32>, vector<8x8xf32> -> vector<8x8xf32>
    %cst_76 = arith.constant 0.353553385 : f32
    %205 = vector.broadcast %cst_76 : f32 to vector<8x8xf32>
    %206 = arith.mulf %204, %205 : vector<8x8xf32>
    %cst_77 = arith.constant -1.000000e+04 : f32
    %207 = vector.broadcast %cst_77 : f32 to vector<8x8xf32>
    %208 = arith.select %6, %207, %206 : vector<8x8xi1>, vector<8x8xf32>
    %cst_78 = arith.constant dense<0xFF800000> : vector<8xf32>
    %209 = vector.multi_reduction <maximumf>, %208, %cst_78 [1] : vector<8x8xf32> to vector<8xf32>
    %210 = vector.shape_cast %209 : vector<8xf32> to vector<8x1xf32>
    %211 = vector.broadcast %210 : vector<8x1xf32> to vector<8x8xf32>
    %212 = arith.subf %208, %211 : vector<8x8xf32>
    %213 = math.exp %212 : vector<8x8xf32>
    %cst_79 = arith.constant dense<0.000000e+00> : vector<8xf32>
    %214 = vector.multi_reduction <add>, %213, %cst_79 [1] : vector<8x8xf32> to vector<8xf32>
    %215 = vector.shape_cast %214 : vector<8xf32> to vector<8x1xf32>
    %216 = tpu.reciprocal %215 {approx = true} : vector<8x1xf32> -> vector<8x1xf32>
    %217 = vector.broadcast %216 : vector<8x1xf32> to vector<8x8xf32>
    %218 = arith.mulf %213, %217 : vector<8x8xf32>
    %cst_80 = arith.constant dense<0.000000e+00> : vector<8x8xf32>
    %219 = tpu.matmul %218, %202, %cst_80 {dimension_numbers = #tpu.dot_dimension_numbers<[1], [0], [0], [1], [0, 0, 1, 1], [], []>} : vector<8x8xf32>, vector<8x8xf32>, vector<8x8xf32> -> vector<8x8xf32>
    %220 = vector.extract_strided_slice %41 {offsets = [8, 16], sizes = [8, 8], strides = [1, 1]} : vector<16x32xf32> to vector<8x8xf32>
    %221 = vector.extract_strided_slice %49 {offsets = [8, 16], sizes = [8, 8], strides = [1, 1]} : vector<16x32xf32> to vector<8x8xf32>
    %222 = vector.extract_strided_slice %50 {offsets = [8, 16], sizes = [8, 8], strides = [1, 1]} : vector<16x32xf32> to vector<8x8xf32>
    %223 = vector.extract_strided_slice %52 {offsets = [0, 0, 0], sizes = [1, 8, 8], strides = [1, 1, 1]} : vector<2x8x8xf32> to vector<1x8x8xf32>
    %224 = vector.shape_cast %223 : vector<1x8x8xf32> to vector<8x8xf32>
    %225 = arith.addf %220, %224 : vector<8x8xf32>
    %226 = vector.extract_strided_slice %54 {offsets = [0, 0, 0], sizes = [1, 8, 8], strides = [1, 1, 1]} : vector<2x8x8xf32> to vector<1x8x8xf32>
    %227 = vector.shape_cast %226 : vector<1x8x8xf32> to vector<8x8xf32>
    %228 = arith.addf %221, %227 : vector<8x8xf32>
    %229 = tpu.transpose %228, [1, 0] : vector<8x8xf32> -> vector<8x8xf32>
    %cst_81 = arith.constant dense<0.000000e+00> : vector<8x8xf32>
    %230 = tpu.matmul %225, %229, %cst_81 {dimension_numbers = #tpu.dot_dimension_numbers<[1], [0], [0], [1], [0, 0, 1, 1], [], []>} : vector<8x8xf32>, vector<8x8xf32>, vector<8x8xf32> -> vector<8x8xf32>
    %cst_82 = arith.constant 0.353553385 : f32
    %231 = vector.broadcast %cst_82 : f32 to vector<8x8xf32>
    %232 = arith.mulf %230, %231 : vector<8x8xf32>
    %233 = vector.extract_strided_slice %58 {offsets = [0, 0, 0], sizes = [1, 1, 8], strides = [1, 1, 1]} : vector<2x1x8xf32> to vector<1x1x8xf32>
    %234 = vector.shape_cast %233 : vector<1x1x8xf32> to vector<1x8xf32>
    %235 = vector.broadcast %234 : vector<1x8xf32> to vector<8x8xf32>
    %236 = arith.mulf %222, %235 : vector<8x8xf32>
    %cst_83 = arith.constant dense<0.000000e+00> : vector<8xf32>
    %237 = vector.multi_reduction <add>, %236, %cst_83 [1] : vector<8x8xf32> to vector<8xf32>
    %238 = vector.shape_cast %237 : vector<8xf32> to vector<8x1xf32>
    %239 = vector.extract_strided_slice %56 {offsets = [0, 0, 0], sizes = [1, 8, 8], strides = [1, 1, 1]} : vector<2x8x8xf32> to vector<1x8x8xf32>
    %240 = vector.shape_cast %239 : vector<1x8x8xf32> to vector<8x8xf32>
    %241 = arith.addf %232, %240 : vector<8x8xf32>
    %242 = vector.broadcast %238 : vector<8x1xf32> to vector<8x8xf32>
    %243 = arith.addf %241, %242 : vector<8x8xf32>
    %244 = tpu.transpose %238, [1, 0] : vector<8x1xf32> -> vector<1x8xf32>
    %245 = vector.broadcast %244 : vector<1x8xf32> to vector<8x8xf32>
    %246 = arith.addf %243, %245 : vector<8x8xf32>
    %cst_84 = arith.constant -1.000000e+04 : f32
    %247 = vector.broadcast %cst_84 : f32 to vector<8x8xf32>
    %248 = arith.select %6, %247, %246 : vector<8x8xi1>, vector<8x8xf32>
    %cst_85 = arith.constant dense<0xFF800000> : vector<8xf32>
    %249 = vector.multi_reduction <maximumf>, %248, %cst_85 [1] : vector<8x8xf32> to vector<8xf32>
    %250 = vector.shape_cast %249 : vector<8xf32> to vector<8x1xf32>
    %251 = vector.broadcast %250 : vector<8x1xf32> to vector<8x8xf32>
    %252 = arith.subf %248, %251 : vector<8x8xf32>
    %253 = math.exp %252 : vector<8x8xf32>
    %cst_86 = arith.constant dense<0.000000e+00> : vector<8xf32>
    %254 = vector.multi_reduction <add>, %253, %cst_86 [1] : vector<8x8xf32> to vector<8xf32>
    %255 = vector.shape_cast %254 : vector<8xf32> to vector<8x1xf32>
    %256 = tpu.reciprocal %255 {approx = true} : vector<8x1xf32> -> vector<8x1xf32>
    %257 = vector.broadcast %256 : vector<8x1xf32> to vector<8x8xf32>
    %258 = arith.mulf %253, %257 : vector<8x8xf32>
    %cst_87 = arith.constant dense<0.000000e+00> : vector<8x8xf32>
    %259 = tpu.matmul %258, %222, %cst_87 {dimension_numbers = #tpu.dot_dimension_numbers<[1], [0], [0], [1], [0, 0, 1, 1], [], []>} : vector<8x8xf32>, vector<8x8xf32>, vector<8x8xf32> -> vector<8x8xf32>
    %260 = vector.extract_strided_slice %41 {offsets = [8, 24], sizes = [8, 8], strides = [1, 1]} : vector<16x32xf32> to vector<8x8xf32>
    %261 = vector.extract_strided_slice %49 {offsets = [8, 24], sizes = [8, 8], strides = [1, 1]} : vector<16x32xf32> to vector<8x8xf32>
    %262 = vector.extract_strided_slice %50 {offsets = [8, 24], sizes = [8, 8], strides = [1, 1]} : vector<16x32xf32> to vector<8x8xf32>
    %263 = vector.extract_strided_slice %52 {offsets = [1, 0, 0], sizes = [1, 8, 8], strides = [1, 1, 1]} : vector<2x8x8xf32> to vector<1x8x8xf32>
    %264 = vector.shape_cast %263 : vector<1x8x8xf32> to vector<8x8xf32>
    %265 = arith.addf %260, %264 : vector<8x8xf32>
    %266 = vector.extract_strided_slice %54 {offsets = [1, 0, 0], sizes = [1, 8, 8], strides = [1, 1, 1]} : vector<2x8x8xf32> to vector<1x8x8xf32>
    %267 = vector.shape_cast %266 : vector<1x8x8xf32> to vector<8x8xf32>
    %268 = arith.addf %261, %267 : vector<8x8xf32>
    %269 = tpu.transpose %268, [1, 0] : vector<8x8xf32> -> vector<8x8xf32>
    %cst_88 = arith.constant dense<0.000000e+00> : vector<8x8xf32>
    %270 = tpu.matmul %265, %269, %cst_88 {dimension_numbers = #tpu.dot_dimension_numbers<[1], [0], [0], [1], [0, 0, 1, 1], [], []>} : vector<8x8xf32>, vector<8x8xf32>, vector<8x8xf32> -> vector<8x8xf32>
    %cst_89 = arith.constant 0.353553385 : f32
    %271 = vector.broadcast %cst_89 : f32 to vector<8x8xf32>
    %272 = arith.mulf %270, %271 : vector<8x8xf32>
    %273 = vector.extract_strided_slice %58 {offsets = [1, 0, 0], sizes = [1, 1, 8], strides = [1, 1, 1]} : vector<2x1x8xf32> to vector<1x1x8xf32>
    %274 = vector.shape_cast %273 : vector<1x1x8xf32> to vector<1x8xf32>
    %275 = vector.broadcast %274 : vector<1x8xf32> to vector<8x8xf32>
    %276 = arith.mulf %262, %275 : vector<8x8xf32>
    %cst_90 = arith.constant dense<0.000000e+00> : vector<8xf32>
    %277 = vector.multi_reduction <add>, %276, %cst_90 [1] : vector<8x8xf32> to vector<8xf32>
    %278 = vector.shape_cast %277 : vector<8xf32> to vector<8x1xf32>
    %279 = vector.extract_strided_slice %56 {offsets = [1, 0, 0], sizes = [1, 8, 8], strides = [1, 1, 1]} : vector<2x8x8xf32> to vector<1x8x8xf32>
    %280 = vector.shape_cast %279 : vector<1x8x8xf32> to vector<8x8xf32>
    %281 = arith.addf %272, %280 : vector<8x8xf32>
    %282 = vector.broadcast %278 : vector<8x1xf32> to vector<8x8xf32>
    %283 = arith.addf %281, %282 : vector<8x8xf32>
    %284 = tpu.transpose %278, [1, 0] : vector<8x1xf32> -> vector<1x8xf32>
    %285 = vector.broadcast %284 : vector<1x8xf32> to vector<8x8xf32>
    %286 = arith.addf %283, %285 : vector<8x8xf32>
    %cst_91 = arith.constant -1.000000e+04 : f32
    %287 = vector.broadcast %cst_91 : f32 to vector<8x8xf32>
    %288 = arith.select %6, %287, %286 : vector<8x8xi1>, vector<8x8xf32>
    %cst_92 = arith.constant dense<0xFF800000> : vector<8xf32>
    %289 = vector.multi_reduction <maximumf>, %288, %cst_92 [1] : vector<8x8xf32> to vector<8xf32>
    %290 = vector.shape_cast %289 : vector<8xf32> to vector<8x1xf32>
    %291 = vector.broadcast %290 : vector<8x1xf32> to vector<8x8xf32>
    %292 = arith.subf %288, %291 : vector<8x8xf32>
    %293 = math.exp %292 : vector<8x8xf32>
    %cst_93 = arith.constant dense<0.000000e+00> : vector<8xf32>
    %294 = vector.multi_reduction <add>, %293, %cst_93 [1] : vector<8x8xf32> to vector<8xf32>
    %295 = vector.shape_cast %294 : vector<8xf32> to vector<8x1xf32>
    %296 = tpu.reciprocal %295 {approx = true} : vector<8x1xf32> -> vector<8x1xf32>
    %297 = vector.broadcast %296 : vector<8x1xf32> to vector<8x8xf32>
    %298 = arith.mulf %293, %297 : vector<8x8xf32>
    %cst_94 = arith.constant dense<0.000000e+00> : vector<8x8xf32>
    %299 = tpu.matmul %298, %262, %cst_94 {dimension_numbers = #tpu.dot_dimension_numbers<[1], [0], [0], [1], [0, 0, 1, 1], [], []>} : vector<8x8xf32>, vector<8x8xf32>, vector<8x8xf32> -> vector<8x8xf32>
    %300 = tpu.concatenate %199, %219, %259, %299 in 1 : vector<8x8xf32>, vector<8x8xf32>, vector<8x8xf32>, vector<8x8xf32> -> vector<8x32xf32>
    %301 = tpu.concatenate %179, %300 in 0 : vector<8x32xf32>, vector<8x32xf32> -> vector<16x32xf32>
    %c0_95 = arith.constant 0 : index
    %c0_96 = arith.constant 0 : index
    %c0_97 = arith.constant 0 : index
    %302 = vector.load %arg9[%c0_95, %c0_96, %c0_97] : memref<2x32x32xf32, #tpu.memory_space<vmem>>, vector<1x32x32xf32>
    %303 = vector.shape_cast %302 : vector<1x32x32xf32> to vector<32x32xf32>
    %cst_98 = arith.constant dense<0.000000e+00> : vector<16x32xf32>
    %304 = tpu.matmul %301, %303, %cst_98 {dimension_numbers = #tpu.dot_dimension_numbers<[1], [0], [0], [1], [0, 0, 1, 1], [], []>} : vector<16x32xf32>, vector<32x32xf32>, vector<16x32xf32> -> vector<16x32xf32>
    %c0_99 = arith.constant 0 : index
    %c0_100 = arith.constant 0 : index
    %c0_101 = arith.constant 0 : index
    %305 = vector.load %arg10[%c0_99, %c0_100, %c0_101] : memref<2x1x32xf32, #tpu.memory_space<vmem>>, vector<1x1x32xf32>
    %306 = vector.shape_cast %305 : vector<1x1x32xf32> to vector<1x32xf32>
    %307 = vector.broadcast %306 : vector<1x32xf32> to vector<16x32xf32>
    %308 = arith.addf %304, %307 : vector<16x32xf32>
    %309 = arith.addf %34, %308 : vector<16x32xf32>
    %c0_102 = arith.constant 0 : index
    %c0_103 = arith.constant 0 : index
    %c0_104 = arith.constant 0 : index
    %310 = vector.load %arg11[%c0_102, %c0_103, %c0_104] : memref<2x1x32xf32, #tpu.memory_space<vmem>>, vector<1x1x32xf32>
    %311 = vector.shape_cast %310 : vector<1x1x32xf32> to vector<1x32xf32>
    %c0_105 = arith.constant 0 : index
    %c0_106 = arith.constant 0 : index
    %c0_107 = arith.constant 0 : index
    %312 = vector.load %arg12[%c0_105, %c0_106, %c0_107] : memref<2x1x32xf32, #tpu.memory_space<vmem>>, vector<1x1x32xf32>
    %313 = vector.shape_cast %312 : vector<1x1x32xf32> to vector<1x32xf32>
    %cst_108 = arith.constant dense<0.000000e+00> : vector<16xf32>
    %314 = vector.multi_reduction <add>, %309, %cst_108 [1] : vector<16x32xf32> to vector<16xf32>
    %315 = vector.shape_cast %314 : vector<16xf32> to vector<16x1xf32>
    %cst_109 = arith.constant 3.200000e+01 : f32
    %316 = vector.broadcast %cst_109 : f32 to vector<16x1xf32>
    %317 = arith.divf %315, %316 : vector<16x1xf32>
    %318 = vector.broadcast %317 : vector<16x1xf32> to vector<16x32xf32>
    %319 = arith.subf %309, %318 : vector<16x32xf32>
    %320 = vector.broadcast %317 : vector<16x1xf32> to vector<16x32xf32>
    %321 = arith.subf %309, %320 : vector<16x32xf32>
    %322 = arith.mulf %319, %321 : vector<16x32xf32>
    %cst_110 = arith.constant dense<0.000000e+00> : vector<16xf32>
    %323 = vector.multi_reduction <add>, %322, %cst_110 [1] : vector<16x32xf32> to vector<16xf32>
    %324 = vector.shape_cast %323 : vector<16xf32> to vector<16x1xf32>
    %cst_111 = arith.constant 3.200000e+01 : f32
    %325 = vector.broadcast %cst_111 : f32 to vector<16x1xf32>
    %326 = arith.divf %324, %325 : vector<16x1xf32>
    %327 = vector.broadcast %317 : vector<16x1xf32> to vector<16x32xf32>
    %328 = arith.subf %309, %327 : vector<16x32xf32>
    %cst_112 = arith.constant 9.99999993E-9 : f32
    %329 = vector.broadcast %cst_112 : f32 to vector<16x1xf32>
    %330 = arith.addf %326, %329 : vector<16x1xf32>
    %331 = math.rsqrt %330 : vector<16x1xf32>
    %332 = vector.broadcast %331 : vector<16x1xf32> to vector<16x32xf32>
    %333 = arith.mulf %328, %332 : vector<16x32xf32>
    %334 = vector.broadcast %311 : vector<1x32xf32> to vector<16x32xf32>
    %335 = arith.mulf %333, %334 : vector<16x32xf32>
    %336 = vector.broadcast %313 : vector<1x32xf32> to vector<16x32xf32>
    %337 = arith.addf %335, %336 : vector<16x32xf32>
    %c0_113 = arith.constant 0 : index
    %c0_114 = arith.constant 0 : index
    %c0_115 = arith.constant 0 : index
    %338 = vector.load %arg13[%c0_113, %c0_114, %c0_115] : memref<2x32x32xf32, #tpu.memory_space<vmem>>, vector<1x32x32xf32>
    %339 = vector.shape_cast %338 : vector<1x32x32xf32> to vector<32x32xf32>
    %cst_116 = arith.constant dense<0.000000e+00> : vector<16x32xf32>
    %340 = tpu.matmul %337, %339, %cst_116 {dimension_numbers = #tpu.dot_dimension_numbers<[1], [0], [0], [1], [0, 0, 1, 1], [], []>} : vector<16x32xf32>, vector<32x32xf32>, vector<16x32xf32> -> vector<16x32xf32>
    %c0_117 = arith.constant 0 : index
    %c0_118 = arith.constant 0 : index
    %c0_119 = arith.constant 0 : index
    %341 = vector.load %arg14[%c0_117, %c0_118, %c0_119] : memref<2x1x32xf32, #tpu.memory_space<vmem>>, vector<1x1x32xf32>
    %342 = vector.shape_cast %341 : vector<1x1x32xf32> to vector<1x32xf32>
    %343 = vector.broadcast %342 : vector<1x32xf32> to vector<16x32xf32>
    %344 = arith.addf %340, %343 : vector<16x32xf32>
    %cst_120 = arith.constant 0.000000e+00 : f32
    %345 = vector.broadcast %cst_120 : f32 to vector<16x32xf32>
    %346 = arith.maximumf %344, %345 : vector<16x32xf32>
    %c0_121 = arith.constant 0 : index
    %c0_122 = arith.constant 0 : index
    %c0_123 = arith.constant 0 : index
    %347 = vector.load %arg15[%c0_121, %c0_122, %c0_123] : memref<2x32x32xf32, #tpu.memory_space<vmem>>, vector<1x32x32xf32>
    %348 = vector.shape_cast %347 : vector<1x32x32xf32> to vector<32x32xf32>
    %cst_124 = arith.constant dense<0.000000e+00> : vector<16x32xf32>
    %349 = tpu.matmul %346, %348, %cst_124 {dimension_numbers = #tpu.dot_dimension_numbers<[1], [0], [0], [1], [0, 0, 1, 1], [], []>} : vector<16x32xf32>, vector<32x32xf32>, vector<16x32xf32> -> vector<16x32xf32>
    %c0_125 = arith.constant 0 : index
    %c0_126 = arith.constant 0 : index
    %c0_127 = arith.constant 0 : index
    %350 = vector.load %arg16[%c0_125, %c0_126, %c0_127] : memref<2x1x32xf32, #tpu.memory_space<vmem>>, vector<1x1x32xf32>
    %351 = vector.shape_cast %350 : vector<1x1x32xf32> to vector<1x32xf32>
    %352 = vector.broadcast %351 : vector<1x32xf32> to vector<16x32xf32>
    %353 = arith.addf %349, %352 : vector<16x32xf32>
    %354 = arith.addf %337, %353 : vector<16x32xf32>
    %355 = vector.broadcast %0 : vector<16x1xf32> to vector<16x32xf32>
    %356 = arith.mulf %354, %355 : vector<16x32xf32>
    %c1 = arith.constant 1 : index
    %c0_128 = arith.constant 0 : index
    %c0_129 = arith.constant 0 : index
    %357 = vector.load %arg3[%c1, %c0_128, %c0_129] : memref<2x1x32xf32, #tpu.memory_space<vmem>>, vector<1x1x32xf32>
    %358 = vector.shape_cast %357 : vector<1x1x32xf32> to vector<1x32xf32>
    %c1_130 = arith.constant 1 : index
    %c0_131 = arith.constant 0 : index
    %c0_132 = arith.constant 0 : index
    %359 = vector.load %arg4[%c1_130, %c0_131, %c0_132] : memref<2x1x32xf32, #tpu.memory_space<vmem>>, vector<1x1x32xf32>
    %360 = vector.shape_cast %359 : vector<1x1x32xf32> to vector<1x32xf32>
    %cst_133 = arith.constant dense<0.000000e+00> : vector<16xf32>
    %361 = vector.multi_reduction <add>, %356, %cst_133 [1] : vector<16x32xf32> to vector<16xf32>
    %362 = vector.shape_cast %361 : vector<16xf32> to vector<16x1xf32>
    %cst_134 = arith.constant 3.200000e+01 : f32
    %363 = vector.broadcast %cst_134 : f32 to vector<16x1xf32>
    %364 = arith.divf %362, %363 : vector<16x1xf32>
    %365 = vector.broadcast %364 : vector<16x1xf32> to vector<16x32xf32>
    %366 = arith.subf %356, %365 : vector<16x32xf32>
    %367 = vector.broadcast %364 : vector<16x1xf32> to vector<16x32xf32>
    %368 = arith.subf %356, %367 : vector<16x32xf32>
    %369 = arith.mulf %366, %368 : vector<16x32xf32>
    %cst_135 = arith.constant dense<0.000000e+00> : vector<16xf32>
    %370 = vector.multi_reduction <add>, %369, %cst_135 [1] : vector<16x32xf32> to vector<16xf32>
    %371 = vector.shape_cast %370 : vector<16xf32> to vector<16x1xf32>
    %cst_136 = arith.constant 3.200000e+01 : f32
    %372 = vector.broadcast %cst_136 : f32 to vector<16x1xf32>
    %373 = arith.divf %371, %372 : vector<16x1xf32>
    %374 = vector.broadcast %364 : vector<16x1xf32> to vector<16x32xf32>
    %375 = arith.subf %356, %374 : vector<16x32xf32>
    %cst_137 = arith.constant 9.99999993E-9 : f32
    %376 = vector.broadcast %cst_137 : f32 to vector<16x1xf32>
    %377 = arith.addf %373, %376 : vector<16x1xf32>
    %378 = math.rsqrt %377 : vector<16x1xf32>
    %379 = vector.broadcast %378 : vector<16x1xf32> to vector<16x32xf32>
    %380 = arith.mulf %375, %379 : vector<16x32xf32>
    %381 = vector.broadcast %358 : vector<1x32xf32> to vector<16x32xf32>
    %382 = arith.mulf %380, %381 : vector<16x32xf32>
    %383 = vector.broadcast %360 : vector<1x32xf32> to vector<16x32xf32>
    %384 = arith.addf %382, %383 : vector<16x32xf32>
    %c1_138 = arith.constant 1 : index
    %c0_139 = arith.constant 0 : index
    %c0_140 = arith.constant 0 : index
    %385 = vector.load %arg5[%c1_138, %c0_139, %c0_140] : memref<2x32x32xf32, #tpu.memory_space<vmem>>, vector<1x32x32xf32>
    %386 = vector.shape_cast %385 : vector<1x32x32xf32> to vector<32x32xf32>
    %cst_141 = arith.constant dense<0.000000e+00> : vector<16x32xf32>
    %387 = tpu.matmul %384, %386, %cst_141 {dimension_numbers = #tpu.dot_dimension_numbers<[1], [0], [0], [1], [0, 0, 1, 1], [], []>} : vector<16x32xf32>, vector<32x32xf32>, vector<16x32xf32> -> vector<16x32xf32>
    %c1_142 = arith.constant 1 : index
    %c0_143 = arith.constant 0 : index
    %c0_144 = arith.constant 0 : index
    %388 = vector.load %arg6[%c1_142, %c0_143, %c0_144] : memref<2x1x32xf32, #tpu.memory_space<vmem>>, vector<1x1x32xf32>
    %389 = vector.shape_cast %388 : vector<1x1x32xf32> to vector<1x32xf32>
    %390 = vector.broadcast %389 : vector<1x32xf32> to vector<16x32xf32>
    %391 = arith.addf %387, %390 : vector<16x32xf32>
    %c1_145 = arith.constant 1 : index
    %c0_146 = arith.constant 0 : index
    %c0_147 = arith.constant 0 : index
    %392 = vector.load %arg7[%c1_145, %c0_146, %c0_147] : memref<2x32x64xf32, #tpu.memory_space<vmem>>, vector<1x32x64xf32>
    %393 = vector.shape_cast %392 : vector<1x32x64xf32> to vector<32x64xf32>
    %cst_148 = arith.constant dense<0.000000e+00> : vector<16x64xf32>
    %394 = tpu.matmul %356, %393, %cst_148 {dimension_numbers = #tpu.dot_dimension_numbers<[1], [0], [0], [1], [0, 0, 1, 1], [], []>} : vector<16x32xf32>, vector<32x64xf32>, vector<16x64xf32> -> vector<16x64xf32>
    %c1_149 = arith.constant 1 : index
    %c0_150 = arith.constant 0 : index
    %c0_151 = arith.constant 0 : index
    %395 = vector.load %arg8[%c1_149, %c0_150, %c0_151] : memref<2x1x64xf32, #tpu.memory_space<vmem>>, vector<1x1x64xf32>
    %396 = vector.shape_cast %395 : vector<1x1x64xf32> to vector<1x64xf32>
    %397 = vector.broadcast %396 : vector<1x64xf32> to vector<16x64xf32>
    %398 = arith.addf %394, %397 : vector<16x64xf32>
    %399 = vector.extract_strided_slice %398 {offsets = [0, 0], sizes = [16, 32], strides = [1, 1]} : vector<16x64xf32> to vector<16x32xf32>
    %400 = vector.extract_strided_slice %398 {offsets = [0, 32], sizes = [16, 32], strides = [1, 1]} : vector<16x64xf32> to vector<16x32xf32>
    %c1_152 = arith.constant 1 : index
    %c0_153 = arith.constant 0 : index
    %c0_154 = arith.constant 0 : index
    %c0_155 = arith.constant 0 : index
    %401 = vector.load %arg17[%c1_152, %c0_153, %c0_154, %c0_155] : memref<2x2x8x8xf32, #tpu.memory_space<vmem>>, vector<1x2x8x8xf32>
    %402 = vector.shape_cast %401 : vector<1x2x8x8xf32> to vector<2x8x8xf32>
    %c1_156 = arith.constant 1 : index
    %c0_157 = arith.constant 0 : index
    %c0_158 = arith.constant 0 : index
    %c0_159 = arith.constant 0 : index
    %403 = vector.load %arg18[%c1_156, %c0_157, %c0_158, %c0_159] : memref<2x2x8x8xf32, #tpu.memory_space<vmem>>, vector<1x2x8x8xf32>
    %404 = vector.shape_cast %403 : vector<1x2x8x8xf32> to vector<2x8x8xf32>
    %c1_160 = arith.constant 1 : index
    %c0_161 = arith.constant 0 : index
    %c0_162 = arith.constant 0 : index
    %c0_163 = arith.constant 0 : index
    %405 = vector.load %arg19[%c1_160, %c0_161, %c0_162, %c0_163] : memref<2x2x8x8xf32, #tpu.memory_space<vmem>>, vector<1x2x8x8xf32>
    %406 = vector.shape_cast %405 : vector<1x2x8x8xf32> to vector<2x8x8xf32>
    %c1_164 = arith.constant 1 : index
    %c0_165 = arith.constant 0 : index
    %c0_166 = arith.constant 0 : index
    %c0_167 = arith.constant 0 : index
    %407 = vector.load %arg20[%c1_164, %c0_165, %c0_166, %c0_167] : memref<2x2x1x8xf32, #tpu.memory_space<vmem>>, vector<1x2x1x8xf32>
    %408 = vector.shape_cast %407 : vector<1x2x1x8xf32> to vector<2x1x8xf32>
    %409 = vector.extract_strided_slice %391 {offsets = [0, 0], sizes = [8, 8], strides = [1, 1]} : vector<16x32xf32> to vector<8x8xf32>
    %410 = vector.extract_strided_slice %399 {offsets = [0, 0], sizes = [8, 8], strides = [1, 1]} : vector<16x32xf32> to vector<8x8xf32>
    %411 = vector.extract_strided_slice %400 {offsets = [0, 0], sizes = [8, 8], strides = [1, 1]} : vector<16x32xf32> to vector<8x8xf32>
    %412 = tpu.transpose %410, [1, 0] : vector<8x8xf32> -> vector<8x8xf32>
    %cst_168 = arith.constant dense<0.000000e+00> : vector<8x8xf32>
    %413 = tpu.matmul %409, %412, %cst_168 {dimension_numbers = #tpu.dot_dimension_numbers<[1], [0], [0], [1], [0, 0, 1, 1], [], []>} : vector<8x8xf32>, vector<8x8xf32>, vector<8x8xf32> -> vector<8x8xf32>
    %cst_169 = arith.constant 0.353553385 : f32
    %414 = vector.broadcast %cst_169 : f32 to vector<8x8xf32>
    %415 = arith.mulf %413, %414 : vector<8x8xf32>
    %cst_170 = arith.constant -1.000000e+04 : f32
    %416 = vector.broadcast %cst_170 : f32 to vector<8x8xf32>
    %417 = arith.select %6, %416, %415 : vector<8x8xi1>, vector<8x8xf32>
    %cst_171 = arith.constant dense<0xFF800000> : vector<8xf32>
    %418 = vector.multi_reduction <maximumf>, %417, %cst_171 [1] : vector<8x8xf32> to vector<8xf32>
    %419 = vector.shape_cast %418 : vector<8xf32> to vector<8x1xf32>
    %420 = vector.broadcast %419 : vector<8x1xf32> to vector<8x8xf32>
    %421 = arith.subf %417, %420 : vector<8x8xf32>
    %422 = math.exp %421 : vector<8x8xf32>
    %cst_172 = arith.constant dense<0.000000e+00> : vector<8xf32>
    %423 = vector.multi_reduction <add>, %422, %cst_172 [1] : vector<8x8xf32> to vector<8xf32>
    %424 = vector.shape_cast %423 : vector<8xf32> to vector<8x1xf32>
    %425 = tpu.reciprocal %424 {approx = true} : vector<8x1xf32> -> vector<8x1xf32>
    %426 = vector.broadcast %425 : vector<8x1xf32> to vector<8x8xf32>
    %427 = arith.mulf %422, %426 : vector<8x8xf32>
    %cst_173 = arith.constant dense<0.000000e+00> : vector<8x8xf32>
    %428 = tpu.matmul %427, %411, %cst_173 {dimension_numbers = #tpu.dot_dimension_numbers<[1], [0], [0], [1], [0, 0, 1, 1], [], []>} : vector<8x8xf32>, vector<8x8xf32>, vector<8x8xf32> -> vector<8x8xf32>
    %429 = vector.extract_strided_slice %391 {offsets = [0, 8], sizes = [8, 8], strides = [1, 1]} : vector<16x32xf32> to vector<8x8xf32>
    %430 = vector.extract_strided_slice %399 {offsets = [0, 8], sizes = [8, 8], strides = [1, 1]} : vector<16x32xf32> to vector<8x8xf32>
    %431 = vector.extract_strided_slice %400 {offsets = [0, 8], sizes = [8, 8], strides = [1, 1]} : vector<16x32xf32> to vector<8x8xf32>
    %432 = tpu.transpose %430, [1, 0] : vector<8x8xf32> -> vector<8x8xf32>
    %cst_174 = arith.constant dense<0.000000e+00> : vector<8x8xf32>
    %433 = tpu.matmul %429, %432, %cst_174 {dimension_numbers = #tpu.dot_dimension_numbers<[1], [0], [0], [1], [0, 0, 1, 1], [], []>} : vector<8x8xf32>, vector<8x8xf32>, vector<8x8xf32> -> vector<8x8xf32>
    %cst_175 = arith.constant 0.353553385 : f32
    %434 = vector.broadcast %cst_175 : f32 to vector<8x8xf32>
    %435 = arith.mulf %433, %434 : vector<8x8xf32>
    %cst_176 = arith.constant -1.000000e+04 : f32
    %436 = vector.broadcast %cst_176 : f32 to vector<8x8xf32>
    %437 = arith.select %6, %436, %435 : vector<8x8xi1>, vector<8x8xf32>
    %cst_177 = arith.constant dense<0xFF800000> : vector<8xf32>
    %438 = vector.multi_reduction <maximumf>, %437, %cst_177 [1] : vector<8x8xf32> to vector<8xf32>
    %439 = vector.shape_cast %438 : vector<8xf32> to vector<8x1xf32>
    %440 = vector.broadcast %439 : vector<8x1xf32> to vector<8x8xf32>
    %441 = arith.subf %437, %440 : vector<8x8xf32>
    %442 = math.exp %441 : vector<8x8xf32>
    %cst_178 = arith.constant dense<0.000000e+00> : vector<8xf32>
    %443 = vector.multi_reduction <add>, %442, %cst_178 [1] : vector<8x8xf32> to vector<8xf32>
    %444 = vector.shape_cast %443 : vector<8xf32> to vector<8x1xf32>
    %445 = tpu.reciprocal %444 {approx = true} : vector<8x1xf32> -> vector<8x1xf32>
    %446 = vector.broadcast %445 : vector<8x1xf32> to vector<8x8xf32>
    %447 = arith.mulf %442, %446 : vector<8x8xf32>
    %cst_179 = arith.constant dense<0.000000e+00> : vector<8x8xf32>
    %448 = tpu.matmul %447, %431, %cst_179 {dimension_numbers = #tpu.dot_dimension_numbers<[1], [0], [0], [1], [0, 0, 1, 1], [], []>} : vector<8x8xf32>, vector<8x8xf32>, vector<8x8xf32> -> vector<8x8xf32>
    %449 = vector.extract_strided_slice %391 {offsets = [0, 16], sizes = [8, 8], strides = [1, 1]} : vector<16x32xf32> to vector<8x8xf32>
    %450 = vector.extract_strided_slice %399 {offsets = [0, 16], sizes = [8, 8], strides = [1, 1]} : vector<16x32xf32> to vector<8x8xf32>
    %451 = vector.extract_strided_slice %400 {offsets = [0, 16], sizes = [8, 8], strides = [1, 1]} : vector<16x32xf32> to vector<8x8xf32>
    %452 = vector.extract_strided_slice %402 {offsets = [0, 0, 0], sizes = [1, 8, 8], strides = [1, 1, 1]} : vector<2x8x8xf32> to vector<1x8x8xf32>
    %453 = vector.shape_cast %452 : vector<1x8x8xf32> to vector<8x8xf32>
    %454 = arith.addf %449, %453 : vector<8x8xf32>
    %455 = vector.extract_strided_slice %404 {offsets = [0, 0, 0], sizes = [1, 8, 8], strides = [1, 1, 1]} : vector<2x8x8xf32> to vector<1x8x8xf32>
    %456 = vector.shape_cast %455 : vector<1x8x8xf32> to vector<8x8xf32>
    %457 = arith.addf %450, %456 : vector<8x8xf32>
    %458 = tpu.transpose %457, [1, 0] : vector<8x8xf32> -> vector<8x8xf32>
    %cst_180 = arith.constant dense<0.000000e+00> : vector<8x8xf32>
    %459 = tpu.matmul %454, %458, %cst_180 {dimension_numbers = #tpu.dot_dimension_numbers<[1], [0], [0], [1], [0, 0, 1, 1], [], []>} : vector<8x8xf32>, vector<8x8xf32>, vector<8x8xf32> -> vector<8x8xf32>
    %cst_181 = arith.constant 0.353553385 : f32
    %460 = vector.broadcast %cst_181 : f32 to vector<8x8xf32>
    %461 = arith.mulf %459, %460 : vector<8x8xf32>
    %462 = vector.extract_strided_slice %408 {offsets = [0, 0, 0], sizes = [1, 1, 8], strides = [1, 1, 1]} : vector<2x1x8xf32> to vector<1x1x8xf32>
    %463 = vector.shape_cast %462 : vector<1x1x8xf32> to vector<1x8xf32>
    %464 = vector.broadcast %463 : vector<1x8xf32> to vector<8x8xf32>
    %465 = arith.mulf %451, %464 : vector<8x8xf32>
    %cst_182 = arith.constant dense<0.000000e+00> : vector<8xf32>
    %466 = vector.multi_reduction <add>, %465, %cst_182 [1] : vector<8x8xf32> to vector<8xf32>
    %467 = vector.shape_cast %466 : vector<8xf32> to vector<8x1xf32>
    %468 = vector.extract_strided_slice %406 {offsets = [0, 0, 0], sizes = [1, 8, 8], strides = [1, 1, 1]} : vector<2x8x8xf32> to vector<1x8x8xf32>
    %469 = vector.shape_cast %468 : vector<1x8x8xf32> to vector<8x8xf32>
    %470 = arith.addf %461, %469 : vector<8x8xf32>
    %471 = vector.broadcast %467 : vector<8x1xf32> to vector<8x8xf32>
    %472 = arith.addf %470, %471 : vector<8x8xf32>
    %473 = tpu.transpose %467, [1, 0] : vector<8x1xf32> -> vector<1x8xf32>
    %474 = vector.broadcast %473 : vector<1x8xf32> to vector<8x8xf32>
    %475 = arith.addf %472, %474 : vector<8x8xf32>
    %cst_183 = arith.constant -1.000000e+04 : f32
    %476 = vector.broadcast %cst_183 : f32 to vector<8x8xf32>
    %477 = arith.select %6, %476, %475 : vector<8x8xi1>, vector<8x8xf32>
    %cst_184 = arith.constant dense<0xFF800000> : vector<8xf32>
    %478 = vector.multi_reduction <maximumf>, %477, %cst_184 [1] : vector<8x8xf32> to vector<8xf32>
    %479 = vector.shape_cast %478 : vector<8xf32> to vector<8x1xf32>
    %480 = vector.broadcast %479 : vector<8x1xf32> to vector<8x8xf32>
    %481 = arith.subf %477, %480 : vector<8x8xf32>
    %482 = math.exp %481 : vector<8x8xf32>
    %cst_185 = arith.constant dense<0.000000e+00> : vector<8xf32>
    %483 = vector.multi_reduction <add>, %482, %cst_185 [1] : vector<8x8xf32> to vector<8xf32>
    %484 = vector.shape_cast %483 : vector<8xf32> to vector<8x1xf32>
    %485 = tpu.reciprocal %484 {approx = true} : vector<8x1xf32> -> vector<8x1xf32>
    %486 = vector.broadcast %485 : vector<8x1xf32> to vector<8x8xf32>
    %487 = arith.mulf %482, %486 : vector<8x8xf32>
    %cst_186 = arith.constant dense<0.000000e+00> : vector<8x8xf32>
    %488 = tpu.matmul %487, %451, %cst_186 {dimension_numbers = #tpu.dot_dimension_numbers<[1], [0], [0], [1], [0, 0, 1, 1], [], []>} : vector<8x8xf32>, vector<8x8xf32>, vector<8x8xf32> -> vector<8x8xf32>
    %489 = vector.extract_strided_slice %391 {offsets = [0, 24], sizes = [8, 8], strides = [1, 1]} : vector<16x32xf32> to vector<8x8xf32>
    %490 = vector.extract_strided_slice %399 {offsets = [0, 24], sizes = [8, 8], strides = [1, 1]} : vector<16x32xf32> to vector<8x8xf32>
    %491 = vector.extract_strided_slice %400 {offsets = [0, 24], sizes = [8, 8], strides = [1, 1]} : vector<16x32xf32> to vector<8x8xf32>
    %492 = vector.extract_strided_slice %402 {offsets = [1, 0, 0], sizes = [1, 8, 8], strides = [1, 1, 1]} : vector<2x8x8xf32> to vector<1x8x8xf32>
    %493 = vector.shape_cast %492 : vector<1x8x8xf32> to vector<8x8xf32>
    %494 = arith.addf %489, %493 : vector<8x8xf32>
    %495 = vector.extract_strided_slice %404 {offsets = [1, 0, 0], sizes = [1, 8, 8], strides = [1, 1, 1]} : vector<2x8x8xf32> to vector<1x8x8xf32>
    %496 = vector.shape_cast %495 : vector<1x8x8xf32> to vector<8x8xf32>
    %497 = arith.addf %490, %496 : vector<8x8xf32>
    %498 = tpu.transpose %497, [1, 0] : vector<8x8xf32> -> vector<8x8xf32>
    %cst_187 = arith.constant dense<0.000000e+00> : vector<8x8xf32>
    %499 = tpu.matmul %494, %498, %cst_187 {dimension_numbers = #tpu.dot_dimension_numbers<[1], [0], [0], [1], [0, 0, 1, 1], [], []>} : vector<8x8xf32>, vector<8x8xf32>, vector<8x8xf32> -> vector<8x8xf32>
    %cst_188 = arith.constant 0.353553385 : f32
    %500 = vector.broadcast %cst_188 : f32 to vector<8x8xf32>
    %501 = arith.mulf %499, %500 : vector<8x8xf32>
    %502 = vector.extract_strided_slice %408 {offsets = [1, 0, 0], sizes = [1, 1, 8], strides = [1, 1, 1]} : vector<2x1x8xf32> to vector<1x1x8xf32>
    %503 = vector.shape_cast %502 : vector<1x1x8xf32> to vector<1x8xf32>
    %504 = vector.broadcast %503 : vector<1x8xf32> to vector<8x8xf32>
    %505 = arith.mulf %491, %504 : vector<8x8xf32>
    %cst_189 = arith.constant dense<0.000000e+00> : vector<8xf32>
    %506 = vector.multi_reduction <add>, %505, %cst_189 [1] : vector<8x8xf32> to vector<8xf32>
    %507 = vector.shape_cast %506 : vector<8xf32> to vector<8x1xf32>
    %508 = vector.extract_strided_slice %406 {offsets = [1, 0, 0], sizes = [1, 8, 8], strides = [1, 1, 1]} : vector<2x8x8xf32> to vector<1x8x8xf32>
    %509 = vector.shape_cast %508 : vector<1x8x8xf32> to vector<8x8xf32>
    %510 = arith.addf %501, %509 : vector<8x8xf32>
    %511 = vector.broadcast %507 : vector<8x1xf32> to vector<8x8xf32>
    %512 = arith.addf %510, %511 : vector<8x8xf32>
    %513 = tpu.transpose %507, [1, 0] : vector<8x1xf32> -> vector<1x8xf32>
    %514 = vector.broadcast %513 : vector<1x8xf32> to vector<8x8xf32>
    %515 = arith.addf %512, %514 : vector<8x8xf32>
    %cst_190 = arith.constant -1.000000e+04 : f32
    %516 = vector.broadcast %cst_190 : f32 to vector<8x8xf32>
    %517 = arith.select %6, %516, %515 : vector<8x8xi1>, vector<8x8xf32>
    %cst_191 = arith.constant dense<0xFF800000> : vector<8xf32>
    %518 = vector.multi_reduction <maximumf>, %517, %cst_191 [1] : vector<8x8xf32> to vector<8xf32>
    %519 = vector.shape_cast %518 : vector<8xf32> to vector<8x1xf32>
    %520 = vector.broadcast %519 : vector<8x1xf32> to vector<8x8xf32>
    %521 = arith.subf %517, %520 : vector<8x8xf32>
    %522 = math.exp %521 : vector<8x8xf32>
    %cst_192 = arith.constant dense<0.000000e+00> : vector<8xf32>
    %523 = vector.multi_reduction <add>, %522, %cst_192 [1] : vector<8x8xf32> to vector<8xf32>
    %524 = vector.shape_cast %523 : vector<8xf32> to vector<8x1xf32>
    %525 = tpu.reciprocal %524 {approx = true} : vector<8x1xf32> -> vector<8x1xf32>
    %526 = vector.broadcast %525 : vector<8x1xf32> to vector<8x8xf32>
    %527 = arith.mulf %522, %526 : vector<8x8xf32>
    %cst_193 = arith.constant dense<0.000000e+00> : vector<8x8xf32>
    %528 = tpu.matmul %527, %491, %cst_193 {dimension_numbers = #tpu.dot_dimension_numbers<[1], [0], [0], [1], [0, 0, 1, 1], [], []>} : vector<8x8xf32>, vector<8x8xf32>, vector<8x8xf32> -> vector<8x8xf32>
    %529 = tpu.concatenate %428, %448, %488, %528 in 1 : vector<8x8xf32>, vector<8x8xf32>, vector<8x8xf32>, vector<8x8xf32> -> vector<8x32xf32>
    %530 = vector.extract_strided_slice %391 {offsets = [8, 0], sizes = [8, 8], strides = [1, 1]} : vector<16x32xf32> to vector<8x8xf32>
    %531 = vector.extract_strided_slice %399 {offsets = [8, 0], sizes = [8, 8], strides = [1, 1]} : vector<16x32xf32> to vector<8x8xf32>
    %532 = vector.extract_strided_slice %400 {offsets = [8, 0], sizes = [8, 8], strides = [1, 1]} : vector<16x32xf32> to vector<8x8xf32>
    %533 = tpu.transpose %531, [1, 0] : vector<8x8xf32> -> vector<8x8xf32>
    %cst_194 = arith.constant dense<0.000000e+00> : vector<8x8xf32>
    %534 = tpu.matmul %530, %533, %cst_194 {dimension_numbers = #tpu.dot_dimension_numbers<[1], [0], [0], [1], [0, 0, 1, 1], [], []>} : vector<8x8xf32>, vector<8x8xf32>, vector<8x8xf32> -> vector<8x8xf32>
    %cst_195 = arith.constant 0.353553385 : f32
    %535 = vector.broadcast %cst_195 : f32 to vector<8x8xf32>
    %536 = arith.mulf %534, %535 : vector<8x8xf32>
    %cst_196 = arith.constant -1.000000e+04 : f32
    %537 = vector.broadcast %cst_196 : f32 to vector<8x8xf32>
    %538 = arith.select %6, %537, %536 : vector<8x8xi1>, vector<8x8xf32>
    %cst_197 = arith.constant dense<0xFF800000> : vector<8xf32>
    %539 = vector.multi_reduction <maximumf>, %538, %cst_197 [1] : vector<8x8xf32> to vector<8xf32>
    %540 = vector.shape_cast %539 : vector<8xf32> to vector<8x1xf32>
    %541 = vector.broadcast %540 : vector<8x1xf32> to vector<8x8xf32>
    %542 = arith.subf %538, %541 : vector<8x8xf32>
    %543 = math.exp %542 : vector<8x8xf32>
    %cst_198 = arith.constant dense<0.000000e+00> : vector<8xf32>
    %544 = vector.multi_reduction <add>, %543, %cst_198 [1] : vector<8x8xf32> to vector<8xf32>
    %545 = vector.shape_cast %544 : vector<8xf32> to vector<8x1xf32>
    %546 = tpu.reciprocal %545 {approx = true} : vector<8x1xf32> -> vector<8x1xf32>
    %547 = vector.broadcast %546 : vector<8x1xf32> to vector<8x8xf32>
    %548 = arith.mulf %543, %547 : vector<8x8xf32>
    %cst_199 = arith.constant dense<0.000000e+00> : vector<8x8xf32>
    %549 = tpu.matmul %548, %532, %cst_199 {dimension_numbers = #tpu.dot_dimension_numbers<[1], [0], [0], [1], [0, 0, 1, 1], [], []>} : vector<8x8xf32>, vector<8x8xf32>, vector<8x8xf32> -> vector<8x8xf32>
    %550 = vector.extract_strided_slice %391 {offsets = [8, 8], sizes = [8, 8], strides = [1, 1]} : vector<16x32xf32> to vector<8x8xf32>
    %551 = vector.extract_strided_slice %399 {offsets = [8, 8], sizes = [8, 8], strides = [1, 1]} : vector<16x32xf32> to vector<8x8xf32>
    %552 = vector.extract_strided_slice %400 {offsets = [8, 8], sizes = [8, 8], strides = [1, 1]} : vector<16x32xf32> to vector<8x8xf32>
    %553 = tpu.transpose %551, [1, 0] : vector<8x8xf32> -> vector<8x8xf32>
    %cst_200 = arith.constant dense<0.000000e+00> : vector<8x8xf32>
    %554 = tpu.matmul %550, %553, %cst_200 {dimension_numbers = #tpu.dot_dimension_numbers<[1], [0], [0], [1], [0, 0, 1, 1], [], []>} : vector<8x8xf32>, vector<8x8xf32>, vector<8x8xf32> -> vector<8x8xf32>
    %cst_201 = arith.constant 0.353553385 : f32
    %555 = vector.broadcast %cst_201 : f32 to vector<8x8xf32>
    %556 = arith.mulf %554, %555 : vector<8x8xf32>
    %cst_202 = arith.constant -1.000000e+04 : f32
    %557 = vector.broadcast %cst_202 : f32 to vector<8x8xf32>
    %558 = arith.select %6, %557, %556 : vector<8x8xi1>, vector<8x8xf32>
    %cst_203 = arith.constant dense<0xFF800000> : vector<8xf32>
    %559 = vector.multi_reduction <maximumf>, %558, %cst_203 [1] : vector<8x8xf32> to vector<8xf32>
    %560 = vector.shape_cast %559 : vector<8xf32> to vector<8x1xf32>
    %561 = vector.broadcast %560 : vector<8x1xf32> to vector<8x8xf32>
    %562 = arith.subf %558, %561 : vector<8x8xf32>
    %563 = math.exp %562 : vector<8x8xf32>
    %cst_204 = arith.constant dense<0.000000e+00> : vector<8xf32>
    %564 = vector.multi_reduction <add>, %563, %cst_204 [1] : vector<8x8xf32> to vector<8xf32>
    %565 = vector.shape_cast %564 : vector<8xf32> to vector<8x1xf32>
    %566 = tpu.reciprocal %565 {approx = true} : vector<8x1xf32> -> vector<8x1xf32>
    %567 = vector.broadcast %566 : vector<8x1xf32> to vector<8x8xf32>
    %568 = arith.mulf %563, %567 : vector<8x8xf32>
    %cst_205 = arith.constant dense<0.000000e+00> : vector<8x8xf32>
    %569 = tpu.matmul %568, %552, %cst_205 {dimension_numbers = #tpu.dot_dimension_numbers<[1], [0], [0], [1], [0, 0, 1, 1], [], []>} : vector<8x8xf32>, vector<8x8xf32>, vector<8x8xf32> -> vector<8x8xf32>
    %570 = vector.extract_strided_slice %391 {offsets = [8, 16], sizes = [8, 8], strides = [1, 1]} : vector<16x32xf32> to vector<8x8xf32>
    %571 = vector.extract_strided_slice %399 {offsets = [8, 16], sizes = [8, 8], strides = [1, 1]} : vector<16x32xf32> to vector<8x8xf32>
    %572 = vector.extract_strided_slice %400 {offsets = [8, 16], sizes = [8, 8], strides = [1, 1]} : vector<16x32xf32> to vector<8x8xf32>
    %573 = vector.extract_strided_slice %402 {offsets = [0, 0, 0], sizes = [1, 8, 8], strides = [1, 1, 1]} : vector<2x8x8xf32> to vector<1x8x8xf32>
    %574 = vector.shape_cast %573 : vector<1x8x8xf32> to vector<8x8xf32>
    %575 = arith.addf %570, %574 : vector<8x8xf32>
    %576 = vector.extract_strided_slice %404 {offsets = [0, 0, 0], sizes = [1, 8, 8], strides = [1, 1, 1]} : vector<2x8x8xf32> to vector<1x8x8xf32>
    %577 = vector.shape_cast %576 : vector<1x8x8xf32> to vector<8x8xf32>
    %578 = arith.addf %571, %577 : vector<8x8xf32>
    %579 = tpu.transpose %578, [1, 0] : vector<8x8xf32> -> vector<8x8xf32>
    %cst_206 = arith.constant dense<0.000000e+00> : vector<8x8xf32>
    %580 = tpu.matmul %575, %579, %cst_206 {dimension_numbers = #tpu.dot_dimension_numbers<[1], [0], [0], [1], [0, 0, 1, 1], [], []>} : vector<8x8xf32>, vector<8x8xf32>, vector<8x8xf32> -> vector<8x8xf32>
    %cst_207 = arith.constant 0.353553385 : f32
    %581 = vector.broadcast %cst_207 : f32 to vector<8x8xf32>
    %582 = arith.mulf %580, %581 : vector<8x8xf32>
    %583 = vector.extract_strided_slice %408 {offsets = [0, 0, 0], sizes = [1, 1, 8], strides = [1, 1, 1]} : vector<2x1x8xf32> to vector<1x1x8xf32>
    %584 = vector.shape_cast %583 : vector<1x1x8xf32> to vector<1x8xf32>
    %585 = vector.broadcast %584 : vector<1x8xf32> to vector<8x8xf32>
    %586 = arith.mulf %572, %585 : vector<8x8xf32>
    %cst_208 = arith.constant dense<0.000000e+00> : vector<8xf32>
    %587 = vector.multi_reduction <add>, %586, %cst_208 [1] : vector<8x8xf32> to vector<8xf32>
    %588 = vector.shape_cast %587 : vector<8xf32> to vector<8x1xf32>
    %589 = vector.extract_strided_slice %406 {offsets = [0, 0, 0], sizes = [1, 8, 8], strides = [1, 1, 1]} : vector<2x8x8xf32> to vector<1x8x8xf32>
    %590 = vector.shape_cast %589 : vector<1x8x8xf32> to vector<8x8xf32>
    %591 = arith.addf %582, %590 : vector<8x8xf32>
    %592 = vector.broadcast %588 : vector<8x1xf32> to vector<8x8xf32>
    %593 = arith.addf %591, %592 : vector<8x8xf32>
    %594 = tpu.transpose %588, [1, 0] : vector<8x1xf32> -> vector<1x8xf32>
    %595 = vector.broadcast %594 : vector<1x8xf32> to vector<8x8xf32>
    %596 = arith.addf %593, %595 : vector<8x8xf32>
    %cst_209 = arith.constant -1.000000e+04 : f32
    %597 = vector.broadcast %cst_209 : f32 to vector<8x8xf32>
    %598 = arith.select %6, %597, %596 : vector<8x8xi1>, vector<8x8xf32>
    %cst_210 = arith.constant dense<0xFF800000> : vector<8xf32>
    %599 = vector.multi_reduction <maximumf>, %598, %cst_210 [1] : vector<8x8xf32> to vector<8xf32>
    %600 = vector.shape_cast %599 : vector<8xf32> to vector<8x1xf32>
    %601 = vector.broadcast %600 : vector<8x1xf32> to vector<8x8xf32>
    %602 = arith.subf %598, %601 : vector<8x8xf32>
    %603 = math.exp %602 : vector<8x8xf32>
    %cst_211 = arith.constant dense<0.000000e+00> : vector<8xf32>
    %604 = vector.multi_reduction <add>, %603, %cst_211 [1] : vector<8x8xf32> to vector<8xf32>
    %605 = vector.shape_cast %604 : vector<8xf32> to vector<8x1xf32>
    %606 = tpu.reciprocal %605 {approx = true} : vector<8x1xf32> -> vector<8x1xf32>
    %607 = vector.broadcast %606 : vector<8x1xf32> to vector<8x8xf32>
    %608 = arith.mulf %603, %607 : vector<8x8xf32>
    %cst_212 = arith.constant dense<0.000000e+00> : vector<8x8xf32>
    %609 = tpu.matmul %608, %572, %cst_212 {dimension_numbers = #tpu.dot_dimension_numbers<[1], [0], [0], [1], [0, 0, 1, 1], [], []>} : vector<8x8xf32>, vector<8x8xf32>, vector<8x8xf32> -> vector<8x8xf32>
    %610 = vector.extract_strided_slice %391 {offsets = [8, 24], sizes = [8, 8], strides = [1, 1]} : vector<16x32xf32> to vector<8x8xf32>
    %611 = vector.extract_strided_slice %399 {offsets = [8, 24], sizes = [8, 8], strides = [1, 1]} : vector<16x32xf32> to vector<8x8xf32>
    %612 = vector.extract_strided_slice %400 {offsets = [8, 24], sizes = [8, 8], strides = [1, 1]} : vector<16x32xf32> to vector<8x8xf32>
    %613 = vector.extract_strided_slice %402 {offsets = [1, 0, 0], sizes = [1, 8, 8], strides = [1, 1, 1]} : vector<2x8x8xf32> to vector<1x8x8xf32>
    %614 = vector.shape_cast %613 : vector<1x8x8xf32> to vector<8x8xf32>
    %615 = arith.addf %610, %614 : vector<8x8xf32>
    %616 = vector.extract_strided_slice %404 {offsets = [1, 0, 0], sizes = [1, 8, 8], strides = [1, 1, 1]} : vector<2x8x8xf32> to vector<1x8x8xf32>
    %617 = vector.shape_cast %616 : vector<1x8x8xf32> to vector<8x8xf32>
    %618 = arith.addf %611, %617 : vector<8x8xf32>
    %619 = tpu.transpose %618, [1, 0] : vector<8x8xf32> -> vector<8x8xf32>
    %cst_213 = arith.constant dense<0.000000e+00> : vector<8x8xf32>
    %620 = tpu.matmul %615, %619, %cst_213 {dimension_numbers = #tpu.dot_dimension_numbers<[1], [0], [0], [1], [0, 0, 1, 1], [], []>} : vector<8x8xf32>, vector<8x8xf32>, vector<8x8xf32> -> vector<8x8xf32>
    %cst_214 = arith.constant 0.353553385 : f32
    %621 = vector.broadcast %cst_214 : f32 to vector<8x8xf32>
    %622 = arith.mulf %620, %621 : vector<8x8xf32>
    %623 = vector.extract_strided_slice %408 {offsets = [1, 0, 0], sizes = [1, 1, 8], strides = [1, 1, 1]} : vector<2x1x8xf32> to vector<1x1x8xf32>
    %624 = vector.shape_cast %623 : vector<1x1x8xf32> to vector<1x8xf32>
    %625 = vector.broadcast %624 : vector<1x8xf32> to vector<8x8xf32>
    %626 = arith.mulf %612, %625 : vector<8x8xf32>
    %cst_215 = arith.constant dense<0.000000e+00> : vector<8xf32>
    %627 = vector.multi_reduction <add>, %626, %cst_215 [1] : vector<8x8xf32> to vector<8xf32>
    %628 = vector.shape_cast %627 : vector<8xf32> to vector<8x1xf32>
    %629 = vector.extract_strided_slice %406 {offsets = [1, 0, 0], sizes = [1, 8, 8], strides = [1, 1, 1]} : vector<2x8x8xf32> to vector<1x8x8xf32>
    %630 = vector.shape_cast %629 : vector<1x8x8xf32> to vector<8x8xf32>
    %631 = arith.addf %622, %630 : vector<8x8xf32>
    %632 = vector.broadcast %628 : vector<8x1xf32> to vector<8x8xf32>
    %633 = arith.addf %631, %632 : vector<8x8xf32>
    %634 = tpu.transpose %628, [1, 0] : vector<8x1xf32> -> vector<1x8xf32>
    %635 = vector.broadcast %634 : vector<1x8xf32> to vector<8x8xf32>
    %636 = arith.addf %633, %635 : vector<8x8xf32>
    %cst_216 = arith.constant -1.000000e+04 : f32
    %637 = vector.broadcast %cst_216 : f32 to vector<8x8xf32>
    %638 = arith.select %6, %637, %636 : vector<8x8xi1>, vector<8x8xf32>
    %cst_217 = arith.constant dense<0xFF800000> : vector<8xf32>
    %639 = vector.multi_reduction <maximumf>, %638, %cst_217 [1] : vector<8x8xf32> to vector<8xf32>
    %640 = vector.shape_cast %639 : vector<8xf32> to vector<8x1xf32>
    %641 = vector.broadcast %640 : vector<8x1xf32> to vector<8x8xf32>
    %642 = arith.subf %638, %641 : vector<8x8xf32>
    %643 = math.exp %642 : vector<8x8xf32>
    %cst_218 = arith.constant dense<0.000000e+00> : vector<8xf32>
    %644 = vector.multi_reduction <add>, %643, %cst_218 [1] : vector<8x8xf32> to vector<8xf32>
    %645 = vector.shape_cast %644 : vector<8xf32> to vector<8x1xf32>
    %646 = tpu.reciprocal %645 {approx = true} : vector<8x1xf32> -> vector<8x1xf32>
    %647 = vector.broadcast %646 : vector<8x1xf32> to vector<8x8xf32>
    %648 = arith.mulf %643, %647 : vector<8x8xf32>
    %cst_219 = arith.constant dense<0.000000e+00> : vector<8x8xf32>
    %649 = tpu.matmul %648, %612, %cst_219 {dimension_numbers = #tpu.dot_dimension_numbers<[1], [0], [0], [1], [0, 0, 1, 1], [], []>} : vector<8x8xf32>, vector<8x8xf32>, vector<8x8xf32> -> vector<8x8xf32>
    %650 = tpu.concatenate %549, %569, %609, %649 in 1 : vector<8x8xf32>, vector<8x8xf32>, vector<8x8xf32>, vector<8x8xf32> -> vector<8x32xf32>
    %651 = tpu.concatenate %529, %650 in 0 : vector<8x32xf32>, vector<8x32xf32> -> vector<16x32xf32>
    %c1_220 = arith.constant 1 : index
    %c0_221 = arith.constant 0 : index
    %c0_222 = arith.constant 0 : index
    %652 = vector.load %arg9[%c1_220, %c0_221, %c0_222] : memref<2x32x32xf32, #tpu.memory_space<vmem>>, vector<1x32x32xf32>
    %653 = vector.shape_cast %652 : vector<1x32x32xf32> to vector<32x32xf32>
    %cst_223 = arith.constant dense<0.000000e+00> : vector<16x32xf32>
    %654 = tpu.matmul %651, %653, %cst_223 {dimension_numbers = #tpu.dot_dimension_numbers<[1], [0], [0], [1], [0, 0, 1, 1], [], []>} : vector<16x32xf32>, vector<32x32xf32>, vector<16x32xf32> -> vector<16x32xf32>
    %c1_224 = arith.constant 1 : index
    %c0_225 = arith.constant 0 : index
    %c0_226 = arith.constant 0 : index
    %655 = vector.load %arg10[%c1_224, %c0_225, %c0_226] : memref<2x1x32xf32, #tpu.memory_space<vmem>>, vector<1x1x32xf32>
    %656 = vector.shape_cast %655 : vector<1x1x32xf32> to vector<1x32xf32>
    %657 = vector.broadcast %656 : vector<1x32xf32> to vector<16x32xf32>
    %658 = arith.addf %654, %657 : vector<16x32xf32>
    %659 = arith.addf %384, %658 : vector<16x32xf32>
    %c1_227 = arith.constant 1 : index
    %c0_228 = arith.constant 0 : index
    %c0_229 = arith.constant 0 : index
    %660 = vector.load %arg11[%c1_227, %c0_228, %c0_229] : memref<2x1x32xf32, #tpu.memory_space<vmem>>, vector<1x1x32xf32>
    %661 = vector.shape_cast %660 : vector<1x1x32xf32> to vector<1x32xf32>
    %c1_230 = arith.constant 1 : index
    %c0_231 = arith.constant 0 : index
    %c0_232 = arith.constant 0 : index
    %662 = vector.load %arg12[%c1_230, %c0_231, %c0_232] : memref<2x1x32xf32, #tpu.memory_space<vmem>>, vector<1x1x32xf32>
    %663 = vector.shape_cast %662 : vector<1x1x32xf32> to vector<1x32xf32>
    %cst_233 = arith.constant dense<0.000000e+00> : vector<16xf32>
    %664 = vector.multi_reduction <add>, %659, %cst_233 [1] : vector<16x32xf32> to vector<16xf32>
    %665 = vector.shape_cast %664 : vector<16xf32> to vector<16x1xf32>
    %cst_234 = arith.constant 3.200000e+01 : f32
    %666 = vector.broadcast %cst_234 : f32 to vector<16x1xf32>
    %667 = arith.divf %665, %666 : vector<16x1xf32>
    %668 = vector.broadcast %667 : vector<16x1xf32> to vector<16x32xf32>
    %669 = arith.subf %659, %668 : vector<16x32xf32>
    %670 = vector.broadcast %667 : vector<16x1xf32> to vector<16x32xf32>
    %671 = arith.subf %659, %670 : vector<16x32xf32>
    %672 = arith.mulf %669, %671 : vector<16x32xf32>
    %cst_235 = arith.constant dense<0.000000e+00> : vector<16xf32>
    %673 = vector.multi_reduction <add>, %672, %cst_235 [1] : vector<16x32xf32> to vector<16xf32>
    %674 = vector.shape_cast %673 : vector<16xf32> to vector<16x1xf32>
    %cst_236 = arith.constant 3.200000e+01 : f32
    %675 = vector.broadcast %cst_236 : f32 to vector<16x1xf32>
    %676 = arith.divf %674, %675 : vector<16x1xf32>
    %677 = vector.broadcast %667 : vector<16x1xf32> to vector<16x32xf32>
    %678 = arith.subf %659, %677 : vector<16x32xf32>
    %cst_237 = arith.constant 9.99999993E-9 : f32
    %679 = vector.broadcast %cst_237 : f32 to vector<16x1xf32>
    %680 = arith.addf %676, %679 : vector<16x1xf32>
    %681 = math.rsqrt %680 : vector<16x1xf32>
    %682 = vector.broadcast %681 : vector<16x1xf32> to vector<16x32xf32>
    %683 = arith.mulf %678, %682 : vector<16x32xf32>
    %684 = vector.broadcast %661 : vector<1x32xf32> to vector<16x32xf32>
    %685 = arith.mulf %683, %684 : vector<16x32xf32>
    %686 = vector.broadcast %663 : vector<1x32xf32> to vector<16x32xf32>
    %687 = arith.addf %685, %686 : vector<16x32xf32>
    %c1_238 = arith.constant 1 : index
    %c0_239 = arith.constant 0 : index
    %c0_240 = arith.constant 0 : index
    %688 = vector.load %arg13[%c1_238, %c0_239, %c0_240] : memref<2x32x32xf32, #tpu.memory_space<vmem>>, vector<1x32x32xf32>
    %689 = vector.shape_cast %688 : vector<1x32x32xf32> to vector<32x32xf32>
    %cst_241 = arith.constant dense<0.000000e+00> : vector<16x32xf32>
    %690 = tpu.matmul %687, %689, %cst_241 {dimension_numbers = #tpu.dot_dimension_numbers<[1], [0], [0], [1], [0, 0, 1, 1], [], []>} : vector<16x32xf32>, vector<32x32xf32>, vector<16x32xf32> -> vector<16x32xf32>
    %c1_242 = arith.constant 1 : index
    %c0_243 = arith.constant 0 : index
    %c0_244 = arith.constant 0 : index
    %691 = vector.load %arg14[%c1_242, %c0_243, %c0_244] : memref<2x1x32xf32, #tpu.memory_space<vmem>>, vector<1x1x32xf32>
    %692 = vector.shape_cast %691 : vector<1x1x32xf32> to vector<1x32xf32>
    %693 = vector.broadcast %692 : vector<1x32xf32> to vector<16x32xf32>
    %694 = arith.addf %690, %693 : vector<16x32xf32>
    %cst_245 = arith.constant 0.000000e+00 : f32
    %695 = vector.broadcast %cst_245 : f32 to vector<16x32xf32>
    %696 = arith.maximumf %694, %695 : vector<16x32xf32>
    %c1_246 = arith.constant 1 : index
    %c0_247 = arith.constant 0 : index
    %c0_248 = arith.constant 0 : index
    %697 = vector.load %arg15[%c1_246, %c0_247, %c0_248] : memref<2x32x32xf32, #tpu.memory_space<vmem>>, vector<1x32x32xf32>
    %698 = vector.shape_cast %697 : vector<1x32x32xf32> to vector<32x32xf32>
    %cst_249 = arith.constant dense<0.000000e+00> : vector<16x32xf32>
    %699 = tpu.matmul %696, %698, %cst_249 {dimension_numbers = #tpu.dot_dimension_numbers<[1], [0], [0], [1], [0, 0, 1, 1], [], []>} : vector<16x32xf32>, vector<32x32xf32>, vector<16x32xf32> -> vector<16x32xf32>
    %c1_250 = arith.constant 1 : index
    %c0_251 = arith.constant 0 : index
    %c0_252 = arith.constant 0 : index
    %700 = vector.load %arg16[%c1_250, %c0_251, %c0_252] : memref<2x1x32xf32, #tpu.memory_space<vmem>>, vector<1x1x32xf32>
    %701 = vector.shape_cast %700 : vector<1x1x32xf32> to vector<1x32xf32>
    %702 = vector.broadcast %701 : vector<1x32xf32> to vector<16x32xf32>
    %703 = arith.addf %699, %702 : vector<16x32xf32>
    %704 = arith.addf %687, %703 : vector<16x32xf32>
    %705 = vector.broadcast %0 : vector<16x1xf32> to vector<16x32xf32>
    %706 = arith.mulf %704, %705 : vector<16x32xf32>
    %c0_253 = arith.constant 0 : index
    %c0_254 = arith.constant 0 : index
    %707 = vector.load %arg21[%c0_253, %c0_254] : memref<1x32xf32, #tpu.memory_space<vmem>>, vector<1x32xf32>
    %c0_255 = arith.constant 0 : index
    %c0_256 = arith.constant 0 : index
    %708 = vector.load %arg22[%c0_255, %c0_256] : memref<1x32xf32, #tpu.memory_space<vmem>>, vector<1x32xf32>
    %cst_257 = arith.constant dense<0.000000e+00> : vector<16xf32>
    %709 = vector.multi_reduction <add>, %706, %cst_257 [1] : vector<16x32xf32> to vector<16xf32>
    %710 = vector.shape_cast %709 : vector<16xf32> to vector<16x1xf32>
    %cst_258 = arith.constant 3.200000e+01 : f32
    %711 = vector.broadcast %cst_258 : f32 to vector<16x1xf32>
    %712 = arith.divf %710, %711 : vector<16x1xf32>
    %713 = vector.broadcast %712 : vector<16x1xf32> to vector<16x32xf32>
    %714 = arith.subf %706, %713 : vector<16x32xf32>
    %715 = vector.broadcast %712 : vector<16x1xf32> to vector<16x32xf32>
    %716 = arith.subf %706, %715 : vector<16x32xf32>
    %717 = arith.mulf %714, %716 : vector<16x32xf32>
    %cst_259 = arith.constant dense<0.000000e+00> : vector<16xf32>
    %718 = vector.multi_reduction <add>, %717, %cst_259 [1] : vector<16x32xf32> to vector<16xf32>
    %719 = vector.shape_cast %718 : vector<16xf32> to vector<16x1xf32>
    %cst_260 = arith.constant 3.200000e+01 : f32
    %720 = vector.broadcast %cst_260 : f32 to vector<16x1xf32>
    %721 = arith.divf %719, %720 : vector<16x1xf32>
    %722 = vector.broadcast %712 : vector<16x1xf32> to vector<16x32xf32>
    %723 = arith.subf %706, %722 : vector<16x32xf32>
    %cst_261 = arith.constant 9.99999993E-9 : f32
    %724 = vector.broadcast %cst_261 : f32 to vector<16x1xf32>
    %725 = arith.addf %721, %724 : vector<16x1xf32>
    %726 = math.rsqrt %725 : vector<16x1xf32>
    %727 = vector.broadcast %726 : vector<16x1xf32> to vector<16x32xf32>
    %728 = arith.mulf %723, %727 : vector<16x32xf32>
    %729 = vector.broadcast %707 : vector<1x32xf32> to vector<16x32xf32>
    %730 = arith.mulf %728, %729 : vector<16x32xf32>
    %731 = vector.broadcast %708 : vector<1x32xf32> to vector<16x32xf32>
    %732 = arith.addf %730, %731 : vector<16x32xf32>
    %c0_262 = arith.constant 0 : index
    %c0_263 = arith.constant 0 : index
    %733 = vector.load %arg23[%c0_262, %c0_263] : memref<16x32xf32, #tpu.memory_space<vmem>>, vector<16x32xf32>
    tpu.vector_store %arg23[%c0_262, %c0_263], %732 {strides = array<i32>} : memref<16x32xf32, #tpu.memory_space<vmem>>, vector<16x32xf32>,
    return
  }
  func.func @transform_0(%arg0: i32) -> (i32, i32) {
    %c0_i32 = arith.constant 0 : i32
    %c0_i32_0 = arith.constant 0 : i32
    %c0_i32_1 = arith.constant 0 : i32
    return %c0_i32, %c0_i32_0 : i32, i32
  }
  func.func @transform_1(%arg0: i32) -> (i32, i32) {
    %c0_i32 = arith.constant 0 : i32
    %c0_i32_0 = arith.constant 0 : i32
    %c0_i32_1 = arith.constant 0 : i32
    return %c0_i32, %c0_i32_0 : i32, i32
  }
  func.func @transform_2(%arg0: i32) -> (i32, i32, i32) {
    %c0_i32 = arith.constant 0 : i32
    %c0_i32_0 = arith.constant 0 : i32
    %c0_i32_1 = arith.constant 0 : i32
    %c0_i32_2 = arith.constant 0 : i32
    return %c0_i32, %c0_i32_0, %c0_i32_1 : i32, i32, i32
  }
  func.func @transform_3(%arg0: i32) -> (i32, i32, i32) {
    %c0_i32 = arith.constant 0 : i32
    %c0_i32_0 = arith.constant 0 : i32
    %c0_i32_1 = arith.constant 0 : i32
    %c0_i32_2 = arith.constant 0 : i32
    return %c0_i32, %c0_i32_0, %c0_i32_1 : i32, i32, i32
  }
  func.func @transform_4(%arg0: i32) -> (i32, i32, i32) {
    %c0_i32 = arith.constant 0 : i32
    %c0_i32_0 = arith.constant 0 : i32
    %c0_i32_1 = arith.constant 0 : i32
    %c0_i32_2 = arith.constant 0 : i32
    return %c0_i32, %c0_i32_0, %c0_i32_1 : i32, i32, i32
  }
  func.func @transform_5(%arg0: i32) -> (i32, i32, i32) {
    %c0_i32 = arith.constant 0 : i32
    %c0_i32_0 = arith.constant 0 : i32
    %c0_i32_1 = arith.constant 0 : i32
    %c0_i32_2 = arith.constant 0 : i32
    return %c0_i32, %c0_i32_0, %c0_i32_1 : i32, i32, i32
  }
  func.func @transform_6(%arg0: i32) -> (i32, i32, i32) {
    %c0_i32 = arith.constant 0 : i32
    %c0_i32_0 = arith.constant 0 : i32
    %c0_i32_1 = arith.constant 0 : i32
    %c0_i32_2 = arith.constant 0 : i32
    return %c0_i32, %c0_i32_0, %c0_i32_1 : i32, i32, i32
  }
  func.func @transform_7(%arg0: i32) -> (i32, i32, i32) {
    %c0_i32 = arith.constant 0 : i32
    %c0_i32_0 = arith.constant 0 : i32
    %c0_i32_1 = arith.constant 0 : i32
    %c0_i32_2 = arith.constant 0 : i32
    return %c0_i32, %c0_i32_0, %c0_i32_1 : i32, i32, i32
  }
  func.func @transform_8(%arg0: i32) -> (i32, i32, i32) {
    %c0_i32 = arith.constant 0 : i32
    %c0_i32_0 = arith.constant 0 : i32
    %c0_i32_1 = arith.constant 0 : i32
    %c0_i32_2 = arith.constant 0 : i32
    return %c0_i32, %c0_i32_0, %c0_i32_1 : i32, i32, i32
  }
  func.func @transform_9(%arg0: i32) -> (i32, i32, i32) {
    %c0_i32 = arith.constant 0 : i32
    %c0_i32_0 = arith.constant 0 : i32
    %c0_i32_1 = arith.constant 0 : i32
    %c0_i32_2 = arith.constant 0 : i32
    return %c0_i32, %c0_i32_0, %c0_i32_1 : i32, i32, i32
  }
  func.func @transform_10(%arg0: i32) -> (i32, i32, i32) {
    %c0_i32 = arith.constant 0 : i32
    %c0_i32_0 = arith.constant 0 : i32
    %c0_i32_1 = arith.constant 0 : i32
    %c0_i32_2 = arith.constant 0 : i32
    return %c0_i32, %c0_i32_0, %c0_i32_1 : i32, i32, i32
  }
  func.func @transform_11(%arg0: i32) -> (i32, i32, i32) {
    %c0_i32 = arith.constant 0 : i32
    %c0_i32_0 = arith.constant 0 : i32
    %c0_i32_1 = arith.constant 0 : i32
    %c0_i32_2 = arith.constant 0 : i32
    return %c0_i32, %c0_i32_0, %c0_i32_1 : i32, i32, i32
  }
  func.func @transform_12(%arg0: i32) -> (i32, i32, i32) {
    %c0_i32 = arith.constant 0 : i32
    %c0_i32_0 = arith.constant 0 : i32
    %c0_i32_1 = arith.constant 0 : i32
    %c0_i32_2 = arith.constant 0 : i32
    return %c0_i32, %c0_i32_0, %c0_i32_1 : i32, i32, i32
  }
  func.func @transform_13(%arg0: i32) -> (i32, i32, i32) {
    %c0_i32 = arith.constant 0 : i32
    %c0_i32_0 = arith.constant 0 : i32
    %c0_i32_1 = arith.constant 0 : i32
    %c0_i32_2 = arith.constant 0 : i32
    return %c0_i32, %c0_i32_0, %c0_i32_1 : i32, i32, i32
  }
  func.func @transform_14(%arg0: i32) -> (i32, i32, i32) {
    %c0_i32 = arith.constant 0 : i32
    %c0_i32_0 = arith.constant 0 : i32
    %c0_i32_1 = arith.constant 0 : i32
    %c0_i32_2 = arith.constant 0 : i32
    return %c0_i32, %c0_i32_0, %c0_i32_1 : i32, i32, i32
  }
  func.func @transform_15(%arg0: i32) -> (i32, i32, i32) {
    %c0_i32 = arith.constant 0 : i32
    %c0_i32_0 = arith.constant 0 : i32
    %c0_i32_1 = arith.constant 0 : i32
    %c0_i32_2 = arith.constant 0 : i32
    return %c0_i32, %c0_i32_0, %c0_i32_1 : i32, i32, i32
  }
  func.func @transform_16(%arg0: i32) -> (i32, i32, i32, i32) {
    %c0_i32 = arith.constant 0 : i32
    %c0_i32_0 = arith.constant 0 : i32
    %c0_i32_1 = arith.constant 0 : i32
    %c0_i32_2 = arith.constant 0 : i32
    %c0_i32_3 = arith.constant 0 : i32
    return %c0_i32, %c0_i32_0, %c0_i32_1, %c0_i32_2 : i32, i32, i32, i32
  }
  func.func @transform_17(%arg0: i32) -> (i32, i32, i32, i32) {
    %c0_i32 = arith.constant 0 : i32
    %c0_i32_0 = arith.constant 0 : i32
    %c0_i32_1 = arith.constant 0 : i32
    %c0_i32_2 = arith.constant 0 : i32
    %c0_i32_3 = arith.constant 0 : i32
    return %c0_i32, %c0_i32_0, %c0_i32_1, %c0_i32_2 : i32, i32, i32, i32
  }
  func.func @transform_18(%arg0: i32) -> (i32, i32, i32, i32) {
    %c0_i32 = arith.constant 0 : i32
    %c0_i32_0 = arith.constant 0 : i32
    %c0_i32_1 = arith.constant 0 : i32
    %c0_i32_2 = arith.constant 0 : i32
    %c0_i32_3 = arith.constant 0 : i32
    return %c0_i32, %c0_i32_0, %c0_i32_1, %c0_i32_2 : i32, i32, i32, i32
  }
  func.func @transform_19(%arg0: i32) -> (i32, i32, i32, i32) {
    %c0_i32 = arith.constant 0 : i32
    %c0_i32_0 = arith.constant 0 : i32
    %c0_i32_1 = arith.constant 0 : i32
    %c0_i32_2 = arith.constant 0 : i32
    %c0_i32_3 = arith.constant 0 : i32
    return %c0_i32, %c0_i32_0, %c0_i32_1, %c0_i32_2 : i32, i32, i32, i32
  }
  func.func @transform_20(%arg0: i32) -> (i32, i32) {
    %c0_i32 = arith.constant 0 : i32
    %c0_i32_0 = arith.constant 0 : i32
    %c0_i32_1 = arith.constant 0 : i32
    return %c0_i32, %c0_i32_0 : i32, i32
  }
  func.func @transform_21(%arg0: i32) -> (i32, i32) {
    %c0_i32 = arith.constant 0 : i32
    %c0_i32_0 = arith.constant 0 : i32
    %c0_i32_1 = arith.constant 0 : i32
    return %c0_i32, %c0_i32_0 : i32, i32
  }
  func.func @transform_22(%arg0: i32) -> (i32, i32) {
    %c0_i32 = arith.constant 0 : i32
    %c0_i32_0 = arith.constant 0 : i32
    %c0_i32_1 = arith.constant 0 : i32
    return %c0_i32, %c0_i32_0 : i32, i32
  }
}

</mosaic_0001>

<llo_original>
// kernel: local_self_attention_forward.1
$region0: #{local_self_attention_forward.1}
  #allocation0 [shape = 'u32[]', space=smem, size = 0x4, offset = 0x4, fixed_abs, tag = 'smem constant byte address 0x4 - core index']
  #allocation1 [shape = 'u32[144,128]{1,0:T(1,128)}', space=vmem, size = 0x12000, scoped, tag = 'internal scratch']
  %s0 = inlined_call_operand.vmem [shape: f32[16,32], index: 0, kind: input, shape index: {}]
  %s1 = inlined_call_operand.vmem [shape: f32[16,1], index: 1, kind: input, shape index: {}]
  %s2 = inlined_call_operand.vmem [shape: f32[2,1,32], index: 2, kind: input, shape index: {}]
  %s3 = inlined_call_operand.vmem [shape: f32[2,1,32], index: 3, kind: input, shape index: {}]
  %s4 = inlined_call_operand.vmem [shape: f32[2,32,32], index: 4, kind: input, shape index: {}]
  %s5 = inlined_call_operand.vmem [shape: f32[2,1,32], index: 5, kind: input, shape index: {}]
  %s6 = inlined_call_operand.vmem [shape: f32[2,32,64], index: 6, kind: input, shape index: {}]
  %s7 = inlined_call_operand.vmem [shape: f32[2,1,64], index: 7, kind: input, shape index: {}]
  %s8 = inlined_call_operand.vmem [shape: f32[2,32,32], index: 8, kind: input, shape index: {}]
  %s9 = inlined_call_operand.vmem [shape: f32[2,1,32], index: 9, kind: input, shape index: {}]
  %s10 = inlined_call_operand.vmem [shape: f32[2,1,32], index: 10, kind: input, shape index: {}]
  %s11 = inlined_call_operand.vmem [shape: f32[2,1,32], index: 11, kind: input, shape index: {}]
  %s12 = inlined_call_operand.vmem [shape: f32[2,32,32], index: 12, kind: input, shape index: {}]
  %s13 = inlined_call_operand.vmem [shape: f32[2,1,32], index: 13, kind: input, shape index: {}]
  %s14 = inlined_call_operand.vmem [shape: f32[2,32,32], index: 14, kind: input, shape index: {}]
  %s15 = inlined_call_operand.vmem [shape: f32[2,1,32], index: 15, kind: input, shape index: {}]
  %s16 = inlined_call_operand.vmem [shape: f32[2,2,8,8], index: 16, kind: input, shape index: {}]
  %s17 = inlined_call_operand.vmem [shape: f32[2,2,8,8], index: 17, kind: input, shape index: {}]
  %s18 = inlined_call_operand.vmem [shape: f32[2,2,8,8], index: 18, kind: input, shape index: {}]
  %s19 = inlined_call_operand.vmem [shape: f32[2,2,1,8], index: 19, kind: input, shape index: {}]
  %s20 = inlined_call_operand.vmem [shape: f32[1,32], index: 20, kind: input, shape index: {}]
  %s21 = inlined_call_operand.vmem [shape: f32[1,32], index: 21, kind: input, shape index: {}]
  %s22 = inlined_call_operand.hbm [shape: f32[16,32], index: 22, kind: output, shape index: {}]
  %s23 = sld [smem:[#allocation0]]
  $region98: #{local_self_attention_forward.1} parent=0
    _
  %s25 = ssub.s32 1, %s23
  %s26 = scalar_select 0, %s25, %s23
  $region1: #{local_self_attention_forward.1} parent=0
    #allocation2 [shape = 'u8[8192]{0}', space=vmem, size = 0x2000, scoped, tag = 'output window, operand 0, single buffered']
    #allocation3 [shape = 's32[1]{0}', space=sflag, size = 0x4, scoped, tag = 'scoped memory for local_self_attention_forward.1']
    %27 = vsyncpa [#allocation3], 0
    // Predicated region
    $region2: #{local_self_attention_forward.1} parent=1 // pred_check
      _
    $region3: #{local_self_attention_forward.1} parent=1 // pred_check_branch
      %29 = sbr.rel (0) target = $region5
    $region4: #{local_self_attention_forward.1} parent=1 // pred_region
      _
    $region5: #{local_self_attention_forward.1} parent=1 // pred_fallthru
      _
    // Predicated region
    $region6: #{local_self_attention_forward.1} parent=1 // pred_check
      _
    $region7: #{local_self_attention_forward.1} parent=1 // pred_check_branch
      %31 = sbr.rel (0) target = $region9
    $region8: #{local_self_attention_forward.1} parent=1 // pred_region
      _
    $region9: #{local_self_attention_forward.1} parent=1 // pred_fallthru
      _
    // Predicated region
    $region10: #{local_self_attention_forward.1} parent=1 // pred_check
      _
    $region11: #{local_self_attention_forward.1} parent=1 // pred_check_branch
      %33 = sbr.rel (0) target = $region13
    $region12: #{local_self_attention_forward.1} parent=1 // pred_region
      _
    $region13: #{local_self_attention_forward.1} parent=1 // pred_fallthru
      _
    // Predicated region
    $region14: #{local_self_attention_forward.1} parent=1 // pred_check
      _
    $region15: #{local_self_attention_forward.1} parent=1 // pred_check_branch
      %35 = sbr.rel (0) target = $region17
    $region16: #{local_self_attention_forward.1} parent=1 // pred_region
      _
    $region17: #{local_self_attention_forward.1} parent=1 // pred_fallthru
      _
    // Predicated region
    $region18: #{local_self_attention_forward.1} parent=1 // pred_check
      _
    $region19: #{local_self_attention_forward.1} parent=1 // pred_check_branch
      %37 = sbr.rel (0) target = $region21
    $region20: #{local_self_attention_forward.1} parent=1 // pred_region
      _
    $region21: #{local_self_attention_forward.1} parent=1 // pred_fallthru
      _
    // Predicated region
    $region22: #{local_self_attention_forward.1} parent=1 // pred_check
      _
    $region23: #{local_self_attention_forward.1} parent=1 // pred_check_branch
      %39 = sbr.rel (0) target = $region25
    $region24: #{local_self_attention_forward.1} parent=1 // pred_region
      _
    $region25: #{local_self_attention_forward.1} parent=1 // pred_fallthru
      _
    // Predicated region
    $region26: #{local_self_attention_forward.1} parent=1 // pred_check
      _
    $region27: #{local_self_attention_forward.1} parent=1 // pred_check_branch
      %41 = sbr.rel (0) target = $region29
    $region28: #{local_self_attention_forward.1} parent=1 // pred_region
      _
    $region29: #{local_self_attention_forward.1} parent=1 // pred_fallthru
      _
    // Predicated region
    $region30: #{local_self_attention_forward.1} parent=1 // pred_check
      _
    $region31: #{local_self_attention_forward.1} parent=1 // pred_check_branch
      %43 = sbr.rel (0) target = $region33
    $region32: #{local_self_attention_forward.1} parent=1 // pred_region
      _
    $region33: #{local_self_attention_forward.1} parent=1 // pred_fallthru
      _
    // Predicated region
    $region34: #{local_self_attention_forward.1} parent=1 // pred_check
      _
    $region35: #{local_self_attention_forward.1} parent=1 // pred_check_branch
      %45 = sbr.rel (0) target = $region37
    $region36: #{local_self_attention_forward.1} parent=1 // pred_region
      _
    $region37: #{local_self_attention_forward.1} parent=1 // pred_fallthru
      _
    // Predicated region
    $region38: #{local_self_attention_forward.1} parent=1 // pred_check
      _
    $region39: #{local_self_attention_forward.1} parent=1 // pred_check_branch
      %47 = sbr.rel (0) target = $region41
    $region40: #{local_self_attention_forward.1} parent=1 // pred_region
      _
    $region41: #{local_self_attention_forward.1} parent=1 // pred_fallthru
      _
    // Predicated region
    $region42: #{local_self_attention_forward.1} parent=1 // pred_check
      _
    $region43: #{local_self_attention_forward.1} parent=1 // pred_check_branch
      %49 = sbr.rel (0) target = $region45
    $region44: #{local_self_attention_forward.1} parent=1 // pred_region
      _
    $region45: #{local_self_attention_forward.1} parent=1 // pred_fallthru
      _
    // Predicated region
    $region46: #{local_self_attention_forward.1} parent=1 // pred_check
      _
    $region47: #{local_self_attention_forward.1} parent=1 // pred_check_branch
      %51 = sbr.rel (0) target = $region49
    $region48: #{local_self_attention_forward.1} parent=1 // pred_region
      _
    $region49: #{local_self_attention_forward.1} parent=1 // pred_fallthru
      _
    // Predicated region
    $region50: #{local_self_attention_forward.1} parent=1 // pred_check
      _
    $region51: #{local_self_attention_forward.1} parent=1 // pred_check_branch
      %53 = sbr.rel (0) target = $region53
    $region52: #{local_self_attention_forward.1} parent=1 // pred_region
      _
    $region53: #{local_self_attention_forward.1} parent=1 // pred_fallthru
      _
    // Predicated region
    $region54: #{local_self_attention_forward.1} parent=1 // pred_check
      _
    $region55: #{local_self_attention_forward.1} parent=1 // pred_check_branch
      %55 = sbr.rel (0) target = $region57
    $region56: #{local_self_attention_forward.1} parent=1 // pred_region
      _
    $region57: #{local_self_attention_forward.1} parent=1 // pred_fallthru
      _
    // Predicated region
    $region58: #{local_self_attention_forward.1} parent=1 // pred_check
      _
    $region59: #{local_self_attention_forward.1} parent=1 // pred_check_branch
      %57 = sbr.rel (0) target = $region61
    $region60: #{local_self_attention_forward.1} parent=1 // pred_region
      _
    $region61: #{local_self_attention_forward.1} parent=1 // pred_fallthru
      _
    // Predicated region
    $region62: #{local_self_attention_forward.1} parent=1 // pred_check
      _
    $region63: #{local_self_attention_forward.1} parent=1 // pred_check_branch
      %59 = sbr.rel (0) target = $region65
    $region64: #{local_self_attention_forward.1} parent=1 // pred_region
      _
    $region65: #{local_self_attention_forward.1} parent=1 // pred_fallthru
      _
    // Predicated region
    $region66: #{local_self_attention_forward.1} parent=1 // pred_check
      _
    $region67: #{local_self_attention_forward.1} parent=1 // pred_check_branch
      %61 = sbr.rel (0) target = $region69
    $region68: #{local_self_attention_forward.1} parent=1 // pred_region
      _
    $region69: #{local_self_attention_forward.1} parent=1 // pred_fallthru
      _
    // Predicated region
    $region70: #{local_self_attention_forward.1} parent=1 // pred_check
      _
    $region71: #{local_self_attention_forward.1} parent=1 // pred_check_branch
      %63 = sbr.rel (0) target = $region73
    $region72: #{local_self_attention_forward.1} parent=1 // pred_region
      _
    $region73: #{local_self_attention_forward.1} parent=1 // pred_fallthru
      _
    // Predicated region
    $region74: #{local_self_attention_forward.1} parent=1 // pred_check
      _
    $region75: #{local_self_attention_forward.1} parent=1 // pred_check_branch
      %65 = sbr.rel (0) target = $region77
    $region76: #{local_self_attention_forward.1} parent=1 // pred_region
      _
    $region77: #{local_self_attention_forward.1} parent=1 // pred_fallthru
      _
    // Predicated region
    $region78: #{local_self_attention_forward.1} parent=1 // pred_check
      _
    $region79: #{local_self_attention_forward.1} parent=1 // pred_check_branch
      %67 = sbr.rel (0) target = $region81
    $region80: #{local_self_attention_forward.1} parent=1 // pred_region
      _
    $region81: #{local_self_attention_forward.1} parent=1 // pred_fallthru
      _
    // Predicated region
    $region82: #{local_self_attention_forward.1} parent=1 // pred_check
      _
    $region83: #{local_self_attention_forward.1} parent=1 // pred_check_branch
      %69 = sbr.rel (0) target = $region85
    $region84: #{local_self_attention_forward.1} parent=1 // pred_region
      _
    $region85: #{local_self_attention_forward.1} parent=1 // pred_fallthru
      _
    // Predicated region
    $region86: #{local_self_attention_forward.1} parent=1 // pred_check
      _
    $region87: #{local_self_attention_forward.1} parent=1 // pred_check_branch
      %71 = sbr.rel (0) target = $region89
    $region88: #{local_self_attention_forward.1} parent=1 // pred_region
      _
    $region89: #{local_self_attention_forward.1} parent=1 // pred_fallthru
      _
    %v72 = vld [vmem:[%s1] sm:$0xff]
    %v73 = vld [vmem:[%s1 + $0x8] sm:$0xff]
    %v74 = vld [vmem:[%s0] sm:$0xff]
    %v75 = vld [vmem:[%s0 + $0x8] sm:$0xff]
    %77 = vset.pattern.permute.xlu0 0
    %78 = vperm.xlu0 %77, %v72
    %v79 = vpop.permute.xlu0 %78
    %82 = vset.pattern.permute.xlu0 0
    %83 = vperm.xlu0 %82, %v73
    %v84 = vpop.permute.xlu0 %83
    %v86 = vmul.f32 %v74, %v79
    %v87 = vmul.f32 %v75, %v84
    %v88 = vlaneseq
    %v89 = vshrl.u32 %v88, 7
    %v90 = vlaneseq
    %v91 = vand.u32 %v90, 127
    %vm92 = vcmp.gt.s32.totalorder %v91, %v89
    %v93 = vld [vmem:[%s2] sm:$0x1]
    %v94 = vld [vmem:[%s3] sm:$0x1]
    %vm95 = vcmask 261120
    %v96 = vsel %vm95, %v86, 0.0
    %97 = vadd.xlane.f32.xlu0 %v96
    %v98 = vpop.xlane.xlu0 %97
    %v99 = vsel %vm95, %v87, 0.0
    %100 = vadd.xlane.f32.xlu0 %v99
    %v101 = vpop.xlane.xlu0 %100
    %v102 = vrcp.pop 32.0
    %v103 = vmul.f32 %v98, %v102
    %v104 = vmul.f32 %v101, %v102
    %v105 = vsub.f32 %v86, %v103
    %v106 = vsub.f32 %v87, %v104
    %v107 = vmul.f32 %v105, %v105
    %v108 = vmul.f32 %v106, %v106
    %v109 = vsel %vm95, %v107, 0.0
    %110 = vadd.xlane.f32.xlu0 %v109
    %v111 = vpop.xlane.xlu0 %110
    %v112 = vsel %vm95, %v108, 0.0
    %113 = vadd.xlane.f32.xlu0 %v112
    %v114 = vpop.xlane.xlu0 %113
    %v115 = vmul.f32 %v111, %v102
    %v116 = vmul.f32 %v114, %v102
    %v117 = vadd.f32 %v115, 1e-08
    %v118 = vadd.f32 %v116, 1e-08
    %v119 = vrsqrt.pop %v117
    %v120 = vrsqrt.pop %v118
    %v121 = vmul.f32 %v105, %v119
    %v122 = vmul.f32 %v106, %v120
    %v124 = vlaneseq
    %v125 = vshrl.u32 %v124, 7
    %v126 = vsub.s32 0, %v125
    %v127 = vrot.slane %v93, %v126
    %v129 = vmul.f32 %v121, %v127
    %v130 = vmul.f32 %v122, %v127
    %v132 = vlaneseq
    %v133 = vshrl.u32 %v132, 7
    %v134 = vsub.s32 0, %v133
    %v135 = vrot.slane %v94, %v134
    %v137 = vadd.f32 %v129, %v135
    %v138 = vadd.f32 %v130, %v135
    %v139 = vld [vmem:[%s4] sm:$0xff]
    %v140 = vld [vmem:[%s4 + $0x8] sm:$0xff]
    %v141 = vld [vmem:[%s4 + $0x10] sm:$0xff]
    %v142 = vld [vmem:[%s4 + $0x18] sm:$0xff]
    %v143 = vld [vmem:[%s5] sm:$0x1]
    %v145 = vlaneseq
    %v146 = vshrl.u32 %v145, 7
    %v147 = vsub.s32 0, %v146
    %v148 = vrot.slane %v143, %v147
    %v151 = vsel %vm95, %v137, 0
    %v154 = vsel %vm95, %v138, 0
    %156 = vmatprep.subr.mxu0 0.0
    %157 = vmatpush1.msra.mxu0 %v139
    %158 = vmatprep.subr.mxu0 0.0
    %159 = vmatpush1.msra.mxu0 %v140
    %160 = vmatprep.subr.mxu0 0.0
    %161 = vmatpush1.msra.mxu0 %v141
    %162 = vmatprep.subr.mxu0 0.0
    %163 = vmatpush1.msra.mxu0 %v142
    %164 = vmatprep.subr.mxu0 0.0
    %165 = vmatpush1.msra.mxu0 0.0
    %166 = vmatprep.subr.mxu0 0.0
    %167 = vmatpush1.msra.mxu0 0.0
    %168 = vmatprep.subr.mxu0 0.0
    %169 = vmatpush1.msra.mxu0 0.0
    %170 = vmatprep.subr.mxu0 0.0
    %171 = vmatpush1.msra.mxu0 0.0
    %172 = vmatprep.subr.mxu0 0.0
    %173 = vmatpush1.msra.mxu0 0.0
    %174 = vmatprep.subr.mxu0 0.0
    %175 = vmatpush1.msra.mxu0 0.0
    %176 = vmatprep.subr.mxu0 0.0
    %177 = vmatpush1.msra.mxu0 0.0
    %178 = vmatprep.subr.mxu0 0.0
    %179 = vmatpush1.msra.mxu0 0.0
    %180 = vmatprep.subr.mxu0 0.0
    %181 = vmatpush1.msra.mxu0 0.0
    %182 = vmatprep.subr.mxu0 0.0
    %183 = vmatpush1.msra.mxu0 0.0
    %184 = vmatprep.subr.mxu0 0.0
    %185 = vmatpush1.msra.mxu0 0.0
    %186 = vmatprep.subr.mxu0 0.0
    %187 = vmatpush1.msra.mxu0 0.0
    %188 = vmatprep.subr.mxu0 0.0
    %189 = vmatpush1.msra.mxu0 0.0
    %190 = vmatprep.subr.mxu0 0.0
    %191 = vmatpush1.msra.mxu0 0.0
    %192 = vmatprep.subr.mxu0 0.0
    %193 = vmatpush1.msra.mxu0 0.0
    %194 = vmatprep.subr.mxu0 0.0
    %195 = vmatpush1.msra.mxu0 0.0
    %196 = vmatprep.subr.mxu0 0.0
    %197 = vmatpush1.msra.mxu0 0.0
    %198 = vmatprep.subr.mxu0 0.0
    %199 = vmatpush1.msra.mxu0 0.0
    %200 = vmatprep.subr.mxu0 0.0
    %201 = vmatpush1.msra.mxu0 0.0
    %202 = vmatprep.subr.mxu0 0.0
    %203 = vmatpush1.msra.mxu0 0.0
    %204 = vmatprep.subr.mxu0 0.0
    %205 = vmatpush1.msra.mxu0 0.0
    %206 = vmatprep.subr.mxu0 0.0
    %207 = vmatpush1.msra.mxu0 0.0
    %208 = vmatprep.subr.mxu0 0.0
    %209 = vmatpush1.msra.mxu0 0.0
    %210 = vmatprep.subr.mxu0 0.0
    %211 = vmatpush1.msra.mxu0 0.0
    %212 = vmatprep.subr.mxu0 0.0
    %213 = vmatpush1.msra.mxu0 0.0
    %214 = vmatprep.subr.mxu0 0.0
    %215 = vmatpush1.msra.mxu0 0.0
    %216 = vmatprep.subr.mxu0 0.0
    %217 = vmatpush1.msra.mxu0 0.0
    %218 = vmatprep.subr.mxu0 0.0
    %219 = vmatpush1.msra.mxu0 0.0
    %220 = vmatprep.mubr.f32.mxu0 0.0
    %221 = vmatmul.mubr.f32.gmra.mrb[0].mxu0 %v151
    %v222 = vpop.f32.mrb[0].mxu0
    %v223 = vadd.f32 %v148, %v222
    %v224 = vpop.f32.mrb[0].mxu0
    %225 = vmatprep.mubr.f32.mxu0 0.0
    %226 = vmatmul.mubr.f32.gmra.mrb[0].mxu0 %v154
    %v227 = vpop.f32.mrb[0].mxu0
    %v228 = vadd.f32 %v148, %v227
    %v229 = vpop.f32.mrb[0].mxu0
    %230 = vdwg.mxu0
    %v231 = vld [vmem:[%s6] sm:$0xff]
    %v232 = vld [vmem:[%s6 + $0x8] sm:$0xff]
    %v233 = vld [vmem:[%s6 + $0x10] sm:$0xff]
    %v234 = vld [vmem:[%s6 + $0x18] sm:$0xff]
    %v235 = vld [vmem:[%s7] sm:$0x1]
    %v237 = vlaneseq
    %v238 = vshrl.u32 %v237, 7
    %v239 = vsub.s32 0, %v238
    %v240 = vrot.slane %v235, %v239
    %v243 = vsel %vm95, %v86, 0
    %v246 = vsel %vm95, %v87, 0
    %248 = vmatprep.subr.mxu0 0.0
    %249 = vmatpush1.msra.mxu0 %v231
    %250 = vmatprep.subr.mxu0 0.0
    %251 = vmatpush1.msra.mxu0 %v232
    %252 = vmatprep.subr.mxu0 0.0
    %253 = vmatpush1.msra.mxu0 %v233
    %254 = vmatprep.subr.mxu0 0.0
    %255 = vmatpush1.msra.mxu0 %v234
    %256 = vmatprep.subr.mxu0 0.0
    %257 = vmatpush1.msra.mxu0 0.0
    %258 = vmatprep.subr.mxu0 0.0
    %259 = vmatpush1.msra.mxu0 0.0
    %260 = vmatprep.subr.mxu0 0.0
    %261 = vmatpush1.msra.mxu0 0.0
    %262 = vmatprep.subr.mxu0 0.0
    %263 = vmatpush1.msra.mxu0 0.0
    %264 = vmatprep.subr.mxu0 0.0
    %265 = vmatpush1.msra.mxu0 0.0
    %266 = vmatprep.subr.mxu0 0.0
    %267 = vmatpush1.msra.mxu0 0.0
    %268 = vmatprep.subr.mxu0 0.0
    %269 = vmatpush1.msra.mxu0 0.0
    %270 = vmatprep.subr.mxu0 0.0
    %271 = vmatpush1.msra.mxu0 0.0
    %272 = vmatprep.subr.mxu0 0.0
    %273 = vmatpush1.msra.mxu0 0.0
    %274 = vmatprep.subr.mxu0 0.0
    %275 = vmatpush1.msra.mxu0 0.0
    %276 = vmatprep.subr.mxu0 0.0
    %277 = vmatpush1.msra.mxu0 0.0
    %278 = vmatprep.subr.mxu0 0.0
    %279 = vmatpush1.msra.mxu0 0.0
    %280 = vmatprep.subr.mxu0 0.0
    %281 = vmatpush1.msra.mxu0 0.0
    %282 = vmatprep.subr.mxu0 0.0
    %283 = vmatpush1.msra.mxu0 0.0
    %284 = vmatprep.subr.mxu0 0.0
    %285 = vmatpush1.msra.mxu0 0.0
    %286 = vmatprep.subr.mxu0 0.0
    %287 = vmatpush1.msra.mxu0 0.0
    %288 = vmatprep.subr.mxu0 0.0
    %289 = vmatpush1.msra.mxu0 0.0
    %290 = vmatprep.subr.mxu0 0.0
    %291 = vmatpush1.msra.mxu0 0.0
    %292 = vmatprep.subr.mxu0 0.0
    %293 = vmatpush1.msra.mxu0 0.0
    %294 = vmatprep.subr.mxu0 0.0
    %295 = vmatpush1.msra.mxu0 0.0
    %296 = vmatprep.subr.mxu0 0.0
    %297 = vmatpush1.msra.mxu0 0.0
    %298 = vmatprep.subr.mxu0 0.0
    %299 = vmatpush1.msra.mxu0 0.0
    %300 = vmatprep.subr.mxu0 0.0
    %301 = vmatpush1.msra.mxu0 0.0
    %302 = vmatprep.subr.mxu0 0.0
    %303 = vmatpush1.msra.mxu0 0.0
    %304 = vmatprep.subr.mxu0 0.0
    %305 = vmatpush1.msra.mxu0 0.0
    %306 = vmatprep.subr.mxu0 0.0
    %307 = vmatpush1.msra.mxu0 0.0
    %308 = vmatprep.subr.mxu0 0.0
    %309 = vmatpush1.msra.mxu0 0.0
    %310 = vmatprep.subr.mxu0 0.0
    %311 = vmatpush1.msra.mxu0 0.0
    %312 = vmatprep.mubr.f32.mxu0 0.0
    %313 = vmatmul.mubr.f32.gmra.mrb[0].mxu0 %v243
    %v314 = vpop.f32.mrb[0].mxu0
    %v315 = vadd.f32 %v240, %v314
    %v316 = vpop.f32.mrb[0].mxu0
    %317 = vmatprep.mubr.f32.mxu0 0.0
    %318 = vmatmul.mubr.f32.gmra.mrb[0].mxu0 %v246
    %v319 = vpop.f32.mrb[0].mxu0
    %v320 = vadd.f32 %v240, %v319
    %v321 = vpop.f32.mrb[0].mxu0
    %322 = vdwg.mxu0
    %v323 = vld [vmem:[%s16] sm:$0xff]
    %v324 = vld [vmem:[%s16 + $0x8] sm:$0xff]
    %v325 = vld [vmem:[%s17] sm:$0xff]
    %v326 = vld [vmem:[%s17 + $0x8] sm:$0xff]
    %v327 = vld [vmem:[%s18] sm:$0xff]
    %v328 = vld [vmem:[%s18 + $0x8] sm:$0xff]
    %v329 = vld [vmem:[%s19] sm:$0x1]
    %v330 = vld [vmem:[%s19 + $0x1] sm:$0x1]
    %vm331 = vcmask 64512
    %v333 = vsel %vm331, %v223, 0
    %v336 = vsel %vm331, %v315, 0
    %338 = vmatprep.subr.mxu0 0.0
    %339 = vmatpush1.xpose.msra.mxu0 %v336
    %340 = vmatprep.subr.mxu0 0.0
    %341 = vmatpush1.xpose.msra.mxu0 0.0
    %342 = vmatprep.subr.mxu0 0.0
    %343 = vmatpush1.xpose.msra.mxu0 0.0
    %344 = vmatprep.subr.mxu0 0.0
    %345 = vmatpush1.xpose.msra.mxu0 0.0
    %346 = vmatprep.subr.mxu0 0.0
    %347 = vmatpush1.xpose.msra.mxu0 0.0
    %348 = vmatprep.subr.mxu0 0.0
    %349 = vmatpush1.xpose.msra.mxu0 0.0
    %350 = vmatprep.subr.mxu0 0.0
    %351 = vmatpush1.xpose.msra.mxu0 0.0
    %352 = vmatprep.subr.mxu0 0.0
    %353 = vmatpush1.xpose.msra.mxu0 0.0
    %354 = vmatprep.subr.mxu0 0.0
    %355 = vmatpush1.xpose.msra.mxu0 0.0
    %356 = vmatprep.subr.mxu0 0.0
    %357 = vmatpush1.xpose.msra.mxu0 0.0
    %358 = vmatprep.subr.mxu0 0.0
    %359 = vmatpush1.xpose.msra.mxu0 0.0
    %360 = vmatprep.subr.mxu0 0.0
    %361 = vmatpush1.xpose.msra.mxu0 0.0
    %362 = vmatprep.subr.mxu0 0.0
    %363 = vmatpush1.xpose.msra.mxu0 0.0
    %364 = vmatprep.subr.mxu0 0.0
    %365 = vmatpush1.xpose.msra.mxu0 0.0
    %366 = vmatprep.subr.mxu0 0.0
    %367 = vmatpush1.xpose.msra.mxu0 0.0
    %368 = vmatprep.subr.mxu0 0.0
    %369 = vmatpush1.xpose.msra.mxu0 0.0
    %370 = vmatprep.subr.mxu0 0.0
    %371 = vmatpush1.xpose.msra.mxu0 0.0
    %372 = vmatprep.subr.mxu0 0.0
    %373 = vmatpush1.xpose.msra.mxu0 0.0
    %374 = vmatprep.subr.mxu0 0.0
    %375 = vmatpush1.xpose.msra.mxu0 0.0
    %376 = vmatprep.subr.mxu0 0.0
    %377 = vmatpush1.xpose.msra.mxu0 0.0
    %378 = vmatprep.subr.mxu0 0.0
    %379 = vmatpush1.xpose.msra.mxu0 0.0
    %380 = vmatprep.subr.mxu0 0.0
    %381 = vmatpush1.xpose.msra.mxu0 0.0
    %382 = vmatprep.subr.mxu0 0.0
    %383 = vmatpush1.xpose.msra.mxu0 0.0
    %384 = vmatprep.subr.mxu0 0.0
    %385 = vmatpush1.xpose.msra.mxu0 0.0
    %386 = vmatprep.subr.mxu0 0.0
    %387 = vmatpush1.xpose.msra.mxu0 0.0
    %388 = vmatprep.subr.mxu0 0.0
    %389 = vmatpush1.xpose.msra.mxu0 0.0
    %390 = vmatprep.subr.mxu0 0.0
    %391 = vmatpush1.xpose.msra.mxu0 0.0
    %392 = vmatprep.subr.mxu0 0.0
    %393 = vmatpush1.xpose.msra.mxu0 0.0
    %394 = vmatprep.subr.mxu0 0.0
    %395 = vmatpush1.xpose.msra.mxu0 0.0
    %396 = vmatprep.subr.mxu0 0.0
    %397 = vmatpush1.xpose.msra.mxu0 0.0
    %398 = vmatprep.subr.mxu0 0.0
    %399 = vmatpush1.xpose.msra.mxu0 0.0
    %400 = vmatprep.subr.mxu0 0.0
    %401 = vmatpush1.xpose.msra.mxu0 0.0
    %402 = vmatprep.mubr.f32.mxu0 0.0
    %403 = vmatmul.mubr.f32.gmra.mrb[0].mxu0 %v333
    %v404 = vpop.f32.mrb[0].mxu0
    %v405 = vadd.f32 0.0, %v404
    %v406 = vpop.f32.mrb[0].mxu0
    %407 = vdwg.mxu0
    %v408 = vmul.f32 %v405, 0.35355338
    %v409 = vsel %vm92, -10000.0, %v408
    %v410 = vsel %vm331, %v409, -inf
    %411 = vmax.xlane.f32.xlu0 %v410
    %v412 = vpop.xlane.xlu0 %411
    %v413 = vsub.f32 %v409, %v412
    %v414 = vmul.f32 %v413, 1.442695
    %v415 = vpow.pop %v414
    %v416 = vsel %vm331, %v415, 0.0
    %417 = vadd.xlane.f32.xlu0 %v416
    %v418 = vpop.xlane.xlu0 %417
    %v419 = vrcp.pop %v418
    %v420 = vmul.f32 %v415, %v419
    %421 = vrot.lane.b32.xlu0 %v315, 96
    %v422 = vpop.permute.xlu0 %421
    %v425 = vsel %vm331, %v420, 0
    %427 = vmatprep.subr.mxu0 0.0
    %428 = vmatpush1.msra.mxu0 %v422
    %429 = vmatprep.subr.mxu0 0.0
    %430 = vmatpush1.msra.mxu0 0.0
    %431 = vmatprep.subr.mxu0 0.0
    %432 = vmatpush1.msra.mxu0 0.0
    %433 = vmatprep.subr.mxu0 0.0
    %434 = vmatpush1.msra.mxu0 0.0
    %435 = vmatprep.subr.mxu0 0.0
    %436 = vmatpush1.msra.mxu0 0.0
    %437 = vmatprep.subr.mxu0 0.0
    %438 = vmatpush1.msra.mxu0 0.0
    %439 = vmatprep.subr.mxu0 0.0
    %440 = vmatpush1.msra.mxu0 0.0
    %441 = vmatprep.subr.mxu0 0.0
    %442 = vmatpush1.msra.mxu0 0.0
    %443 = vmatprep.subr.mxu0 0.0
    %444 = vmatpush1.msra.mxu0 0.0
    %445 = vmatprep.subr.mxu0 0.0
    %446 = vmatpush1.msra.mxu0 0.0
    %447 = vmatprep.subr.mxu0 0.0
    %448 = vmatpush1.msra.mxu0 0.0
    %449 = vmatprep.subr.mxu0 0.0
    %450 = vmatpush1.msra.mxu0 0.0
    %451 = vmatprep.subr.mxu0 0.0
    %452 = vmatpush1.msra.mxu0 0.0
    %453 = vmatprep.subr.mxu0 0.0
    %454 = vmatpush1.msra.mxu0 0.0
    %455 = vmatprep.subr.mxu0 0.0
    %456 = vmatpush1.msra.mxu0 0.0
    %457 = vmatprep.subr.mxu0 0.0
    %458 = vmatpush1.msra.mxu0 0.0
    %459 = vmatprep.subr.mxu0 0.0
    %460 = vmatpush1.msra.mxu0 0.0
    %461 = vmatprep.subr.mxu0 0.0
    %462 = vmatpush1.msra.mxu0 0.0
    %463 = vmatprep.subr.mxu0 0.0
    %464 = vmatpush1.msra.mxu0 0.0
    %465 = vmatprep.subr.mxu0 0.0
    %466 = vmatpush1.msra.mxu0 0.0
    %467 = vmatprep.subr.mxu0 0.0
    %468 = vmatpush1.msra.mxu0 0.0
    %469 = vmatprep.subr.mxu0 0.0
    %470 = vmatpush1.msra.mxu0 0.0
    %471 = vmatprep.subr.mxu0 0.0
    %472 = vmatpush1.msra.mxu0 0.0
    %473 = vmatprep.subr.mxu0 0.0
    %474 = vmatpush1.msra.mxu0 0.0
    %475 = vmatprep.subr.mxu0 0.0
    %476 = vmatpush1.msra.mxu0 0.0
    %477 = vmatprep.subr.mxu0 0.0
    %478 = vmatpush1.msra.mxu0 0.0
    %479 = vmatprep.subr.mxu0 0.0
    %480 = vmatpush1.msra.mxu0 0.0
    %481 = vmatprep.subr.mxu0 0.0
    %482 = vmatpush1.msra.mxu0 0.0
    %483 = vmatprep.subr.mxu0 0.0
    %484 = vmatpush1.msra.mxu0 0.0
    %485 = vmatprep.subr.mxu0 0.0
    %486 = vmatpush1.msra.mxu0 0.0
    %487 = vmatprep.subr.mxu0 0.0
    %488 = vmatpush1.msra.mxu0 0.0
    %489 = vmatprep.subr.mxu0 0.0
    %490 = vmatpush1.msra.mxu0 0.0
    %491 = vmatprep.mubr.f32.mxu0 0.0
    %492 = vmatmul.mubr.f32.gmra.mrb[0].mxu0 %v425
    %v493 = vpop.f32.mrb[0].mxu0
    %v494 = vadd.f32 0.0, %v493
    %v495 = vpop.f32.mrb[0].mxu0
    %496 = vdwg.mxu0
    %497 = vrot.lane.b32.xlu0 %v223, 120
    %v498 = vpop.permute.xlu0 %497
    %499 = vrot.lane.b32.xlu0 %v315, 120
    %v500 = vpop.permute.xlu0 %499
    %v501 = vsel %vm331, %v498, 0
    %v503 = vsel %vm331, %v500, 0
    %505 = vmatprep.subr.mxu0 0.0
    %506 = vmatpush1.xpose.msra.mxu0 %v503
    %507 = vmatprep.subr.mxu0 0.0
    %508 = vmatpush1.xpose.msra.mxu0 0.0
    %509 = vmatprep.subr.mxu0 0.0
    %510 = vmatpush1.xpose.msra.mxu0 0.0
    %511 = vmatprep.subr.mxu0 0.0
    %512 = vmatpush1.xpose.msra.mxu0 0.0
    %513 = vmatprep.subr.mxu0 0.0
    %514 = vmatpush1.xpose.msra.mxu0 0.0
    %515 = vmatprep.subr.mxu0 0.0
    %516 = vmatpush1.xpose.msra.mxu0 0.0
    %517 = vmatprep.subr.mxu0 0.0
    %518 = vmatpush1.xpose.msra.mxu0 0.0
    %519 = vmatprep.subr.mxu0 0.0
    %520 = vmatpush1.xpose.msra.mxu0 0.0
    %521 = vmatprep.subr.mxu0 0.0
    %522 = vmatpush1.xpose.msra.mxu0 0.0
    %523 = vmatprep.subr.mxu0 0.0
    %524 = vmatpush1.xpose.msra.mxu0 0.0
    %525 = vmatprep.subr.mxu0 0.0
    %526 = vmatpush1.xpose.msra.mxu0 0.0
    %527 = vmatprep.subr.mxu0 0.0
    %528 = vmatpush1.xpose.msra.mxu0 0.0
    %529 = vmatprep.subr.mxu0 0.0
    %530 = vmatpush1.xpose.msra.mxu0 0.0
    %531 = vmatprep.subr.mxu0 0.0
    %532 = vmatpush1.xpose.msra.mxu0 0.0
    %533 = vmatprep.subr.mxu0 0.0
    %534 = vmatpush1.xpose.msra.mxu0 0.0
    %535 = vmatprep.subr.mxu0 0.0
    %536 = vmatpush1.xpose.msra.mxu0 0.0
    %537 = vmatprep.subr.mxu0 0.0
    %538 = vmatpush1.xpose.msra.mxu0 0.0
    %539 = vmatprep.subr.mxu0 0.0
    %540 = vmatpush1.xpose.msra.mxu0 0.0
    %541 = vmatprep.subr.mxu0 0.0
    %542 = vmatpush1.xpose.msra.mxu0 0.0
    %543 = vmatprep.subr.mxu0 0.0
    %544 = vmatpush1.xpose.msra.mxu0 0.0
    %545 = vmatprep.subr.mxu0 0.0
    %546 = vmatpush1.xpose.msra.mxu0 0.0
    %547 = vmatprep.subr.mxu0 0.0
    %548 = vmatpush1.xpose.msra.mxu0 0.0
    %549 = vmatprep.subr.mxu0 0.0
    %550 = vmatpush1.xpose.msra.mxu0 0.0
    %551 = vmatprep.subr.mxu0 0.0
    %552 = vmatpush1.xpose.msra.mxu0 0.0
    %553 = vmatprep.subr.mxu0 0.0
    %554 = vmatpush1.xpose.msra.mxu0 0.0
    %555 = vmatprep.subr.mxu0 0.0
    %556 = vmatpush1.xpose.msra.mxu0 0.0
    %557 = vmatprep.subr.mxu0 0.0
    %558 = vmatpush1.xpose.msra.mxu0 0.0
    %559 = vmatprep.subr.mxu0 0.0
    %560 = vmatpush1.xpose.msra.mxu0 0.0
    %561 = vmatprep.subr.mxu0 0.0
    %562 = vmatpush1.xpose.msra.mxu0 0.0
    %563 = vmatprep.subr.mxu0 0.0
    %564 = vmatpush1.xpose.msra.mxu0 0.0
    %565 = vmatprep.subr.mxu0 0.0
    %566 = vmatpush1.xpose.msra.mxu0 0.0
    %567 = vmatprep.subr.mxu0 0.0
    %568 = vmatpush1.xpose.msra.mxu0 0.0
    %569 = vmatprep.mubr.f32.mxu0 0.0
    %570 = vmatmul.mubr.f32.gmra.mrb[0].mxu0 %v501
    %v571 = vpop.f32.mrb[0].mxu0
    %v572 = vadd.f32 0.0, %v571
    %v573 = vpop.f32.mrb[0].mxu0
    %574 = vdwg.mxu0
    %v575 = vmul.f32 %v572, 0.35355338
    %v576 = vsel %vm92, -10000.0, %v575
    %v577 = vsel %vm331, %v576, -inf
    %578 = vmax.xlane.f32.xlu0 %v577
    %v579 = vpop.xlane.xlu0 %578
    %v580 = vsub.f32 %v576, %v579
    %v581 = vmul.f32 %v580, 1.442695
    %v582 = vpow.pop %v581
    %v583 = vsel %vm331, %v582, 0.0
    %584 = vadd.xlane.f32.xlu0 %v583
    %v585 = vpop.xlane.xlu0 %584
    %v586 = vrcp.pop %v585
    %v587 = vmul.f32 %v582, %v586
    %588 = vrot.lane.b32.xlu0 %v315, 88
    %v589 = vpop.permute.xlu0 %588
    %v592 = vsel %vm331, %v587, 0
    %594 = vmatprep.subr.mxu0 0.0
    %595 = vmatpush1.msra.mxu0 %v589
    %596 = vmatprep.subr.mxu0 0.0
    %597 = vmatpush1.msra.mxu0 0.0
    %598 = vmatprep.subr.mxu0 0.0
    %599 = vmatpush1.msra.mxu0 0.0
    %600 = vmatprep.subr.mxu0 0.0
    %601 = vmatpush1.msra.mxu0 0.0
    %602 = vmatprep.subr.mxu0 0.0
    %603 = vmatpush1.msra.mxu0 0.0
    %604 = vmatprep.subr.mxu0 0.0
    %605 = vmatpush1.msra.mxu0 0.0
    %606 = vmatprep.subr.mxu0 0.0
    %607 = vmatpush1.msra.mxu0 0.0
    %608 = vmatprep.subr.mxu0 0.0
    %609 = vmatpush1.msra.mxu0 0.0
    %610 = vmatprep.subr.mxu0 0.0
    %611 = vmatpush1.msra.mxu0 0.0
    %612 = vmatprep.subr.mxu0 0.0
    %613 = vmatpush1.msra.mxu0 0.0
    %614 = vmatprep.subr.mxu0 0.0
    %615 = vmatpush1.msra.mxu0 0.0
    %616 = vmatprep.subr.mxu0 0.0
    %617 = vmatpush1.msra.mxu0 0.0
    %618 = vmatprep.subr.mxu0 0.0
    %619 = vmatpush1.msra.mxu0 0.0
    %620 = vmatprep.subr.mxu0 0.0
    %621 = vmatpush1.msra.mxu0 0.0
    %622 = vmatprep.subr.mxu0 0.0
    %623 = vmatpush1.msra.mxu0 0.0
    %624 = vmatprep.subr.mxu0 0.0
    %625 = vmatpush1.msra.mxu0 0.0
    %626 = vmatprep.subr.mxu0 0.0
    %627 = vmatpush1.msra.mxu0 0.0
    %628 = vmatprep.subr.mxu0 0.0
    %629 = vmatpush1.msra.mxu0 0.0
    %630 = vmatprep.subr.mxu0 0.0
    %631 = vmatpush1.msra.mxu0 0.0
    %632 = vmatprep.subr.mxu0 0.0
    %633 = vmatpush1.msra.mxu0 0.0
    %634 = vmatprep.subr.mxu0 0.0
    %635 = vmatpush1.msra.mxu0 0.0
    %636 = vmatprep.subr.mxu0 0.0
    %637 = vmatpush1.msra.mxu0 0.0
    %638 = vmatprep.subr.mxu0 0.0
    %639 = vmatpush1.msra.mxu0 0.0
    %640 = vmatprep.subr.mxu0 0.0
    %641 = vmatpush1.msra.mxu0 0.0
    %642 = vmatprep.subr.mxu0 0.0
    %643 = vmatpush1.msra.mxu0 0.0
    %644 = vmatprep.subr.mxu0 0.0
    %645 = vmatpush1.msra.mxu0 0.0
    %646 = vmatprep.subr.mxu0 0.0
    %647 = vmatpush1.msra.mxu0 0.0
    %648 = vmatprep.subr.mxu0 0.0
    %649 = vmatpush1.msra.mxu0 0.0
    %650 = vmatprep.subr.mxu0 0.0
    %651 = vmatpush1.msra.mxu0 0.0
    %652 = vmatprep.subr.mxu0 0.0
    %653 = vmatpush1.msra.mxu0 0.0
    %654 = vmatprep.subr.mxu0 0.0
    %655 = vmatpush1.msra.mxu0 0.0
    %656 = vmatprep.subr.mxu0 0.0
    %657 = vmatpush1.msra.mxu0 0.0
    %658 = vmatprep.mubr.f32.mxu0 0.0
    %659 = vmatmul.mubr.f32.gmra.mrb[0].mxu0 %v592
    %v660 = vpop.f32.mrb[0].mxu0
    %v661 = vadd.f32 0.0, %v660
    %v662 = vpop.f32.mrb[0].mxu0
    %663 = vdwg.mxu0
    %665 = vrot.lane.b32.xlu0 %v323, 16
    %v666 = vpop.permute.xlu0 %665
    %v668 = vadd.f32 %v223, %v666
    %670 = vrot.lane.b32.xlu0 %v325, 16
    %v671 = vpop.permute.xlu0 %670
    %v673 = vadd.f32 %v315, %v671
    %675 = vrot.lane.b32.xlu0 %v668, 112
    %v676 = vpop.permute.xlu0 %675
    %678 = vrot.lane.b32.xlu0 %v673, 112
    %v679 = vpop.permute.xlu0 %678
    %v680 = vsel %vm331, %v676, 0
    %v682 = vsel %vm331, %v679, 0
    %684 = vmatprep.subr.mxu0 0.0
    %685 = vmatpush1.xpose.msra.mxu0 %v682
    %686 = vmatprep.subr.mxu0 0.0
    %687 = vmatpush1.xpose.msra.mxu0 0.0
    %688 = vmatprep.subr.mxu0 0.0
    %689 = vmatpush1.xpose.msra.mxu0 0.0
    %690 = vmatprep.subr.mxu0 0.0
    %691 = vmatpush1.xpose.msra.mxu0 0.0
    %692 = vmatprep.subr.mxu0 0.0
    %693 = vmatpush1.xpose.msra.mxu0 0.0
    %694 = vmatprep.subr.mxu0 0.0
    %695 = vmatpush1.xpose.msra.mxu0 0.0
    %696 = vmatprep.subr.mxu0 0.0
    %697 = vmatpush1.xpose.msra.mxu0 0.0
    %698 = vmatprep.subr.mxu0 0.0
    %699 = vmatpush1.xpose.msra.mxu0 0.0
    %700 = vmatprep.subr.mxu0 0.0
    %701 = vmatpush1.xpose.msra.mxu0 0.0
    %702 = vmatprep.subr.mxu0 0.0
    %703 = vmatpush1.xpose.msra.mxu0 0.0
    %704 = vmatprep.subr.mxu0 0.0
    %705 = vmatpush1.xpose.msra.mxu0 0.0
    %706 = vmatprep.subr.mxu0 0.0
    %707 = vmatpush1.xpose.msra.mxu0 0.0
    %708 = vmatprep.subr.mxu0 0.0
    %709 = vmatpush1.xpose.msra.mxu0 0.0
    %710 = vmatprep.subr.mxu0 0.0
    %711 = vmatpush1.xpose.msra.mxu0 0.0
    %712 = vmatprep.subr.mxu0 0.0
    %713 = vmatpush1.xpose.msra.mxu0 0.0
    %714 = vmatprep.subr.mxu0 0.0
    %715 = vmatpush1.xpose.msra.mxu0 0.0
    %716 = vmatprep.subr.mxu0 0.0
    %717 = vmatpush1.xpose.msra.mxu0 0.0
    %718 = vmatprep.subr.mxu0 0.0
    %719 = vmatpush1.xpose.msra.mxu0 0.0
    %720 = vmatprep.subr.mxu0 0.0
    %721 = vmatpush1.xpose.msra.mxu0 0.0
    %722 = vmatprep.subr.mxu0 0.0
    %723 = vmatpush1.xpose.msra.mxu0 0.0
    %724 = vmatprep.subr.mxu0 0.0
    %725 = vmatpush1.xpose.msra.mxu0 0.0
    %726 = vmatprep.subr.mxu0 0.0
    %727 = vmatpush1.xpose.msra.mxu0 0.0
    %728 = vmatprep.subr.mxu0 0.0
    %729 = vmatpush1.xpose.msra.mxu0 0.0
    %730 = vmatprep.subr.mxu0 0.0
    %731 = vmatpush1.xpose.msra.mxu0 0.0
    %732 = vmatprep.subr.mxu0 0.0
    %733 = vmatpush1.xpose.msra.mxu0 0.0
    %734 = vmatprep.subr.mxu0 0.0
    %735 = vmatpush1.xpose.msra.mxu0 0.0
    %736 = vmatprep.subr.mxu0 0.0
    %737 = vmatpush1.xpose.msra.mxu0 0.0
    %738 = vmatprep.subr.mxu0 0.0
    %739 = vmatpush1.xpose.msra.mxu0 0.0
    %740 = vmatprep.subr.mxu0 0.0
    %741 = vmatpush1.xpose.msra.mxu0 0.0
    %742 = vmatprep.subr.mxu0 0.0
    %743 = vmatpush1.xpose.msra.mxu0 0.0
    %744 = vmatprep.subr.mxu0 0.0
    %745 = vmatpush1.xpose.msra.mxu0 0.0
    %746 = vmatprep.subr.mxu0 0.0
    %747 = vmatpush1.xpose.msra.mxu0 0.0
    %748 = vmatprep.mubr.f32.mxu0 0.0
    %749 = vmatmul.mubr.f32.gmra.mrb[0].mxu0 %v680
    %v750 = vpop.f32.mrb[0].mxu0
    %v751 = vadd.f32 0.0, %v750
    %v752 = vpop.f32.mrb[0].mxu0
    %753 = vdwg.mxu0
    %v754 = vmul.f32 %v751, 0.35355338
    %v756 = vlaneseq
    %v757 = vshrl.u32 %v756, 7
    %v758 = vsub.s32 0, %v757
    %v759 = vrot.slane %v329, %v758
    %760 = vrot.lane.b32.xlu0 %v759, 48
    %v761 = vpop.permute.xlu0 %760
    %v763 = vmul.f32 %v315, %v761
    %765 = vrot.lane.b32.xlu0 %v763, 80
    %v766 = vpop.permute.xlu0 %765
    %v768 = vsel %vm331, %v766, 0.0
    %769 = vadd.xlane.f32.xlu0 %v768
    %v770 = vpop.xlane.xlu0 %769
    %v771 = vadd.f32 %v754, %v327
    %v772 = vadd.f32 %v771, %v770
    %773 = vxpose.xlu0.b32.start [1/16] %v770, 128
    %774 = vxpose.xlu0.b32.cont [2/16] 0.0, 128
    %775 = vxpose.xlu0.b32.cont [3/16] 0.0, 128
    %776 = vxpose.xlu0.b32.cont [4/16] 0.0, 128
    %777 = vxpose.xlu0.b32.cont [5/16] 0.0, 128
    %778 = vxpose.xlu0.b32.cont [6/16] 0.0, 128
    %779 = vxpose.xlu0.b32.cont [7/16] 0.0, 128
    %780 = vxpose.xlu0.b32.cont [8/16] 0.0, 128
    %781 = vxpose.xlu0.b32.cont [9/16] 0.0, 128
    %782 = vxpose.xlu0.b32.cont [10/16] 0.0, 128
    %783 = vxpose.xlu0.b32.cont [11/16] 0.0, 128
    %784 = vxpose.xlu0.b32.cont [12/16] 0.0, 128
    %785 = vxpose.xlu0.b32.cont [13/16] 0.0, 128
    %786 = vxpose.xlu0.b32.cont [14/16] 0.0, 128
    %787 = vxpose.xlu0.b32.cont [15/16] 0.0, 128
    %788 = vxpose.xlu0.b32.end [16/16] 0.0, 128
    %v789 = vpop.trf.xlu0
    %v790 = vpop.trf.xlu0
    %v791 = vpop.trf.xlu0
    %v792 = vpop.trf.xlu0
    %v793 = vpop.trf.xlu0
    %v794 = vpop.trf.xlu0
    %v795 = vpop.trf.xlu0
    %v796 = vpop.trf.xlu0
    %v797 = vpop.trf.xlu0
    %v798 = vpop.trf.xlu0
    %v799 = vpop.trf.xlu0
    %v800 = vpop.trf.xlu0
    %v801 = vpop.trf.xlu0
    %v802 = vpop.trf.xlu0
    %v803 = vpop.trf.xlu0
    %v804 = vpop.trf.xlu0
    %v805 = vlaneseq
    %v806 = vshrl.u32 %v805, 7
    %v807 = vsub.s32 0, %v806
    %v808 = vrot.slane %v789, %v807
    %v809 = vadd.f32 %v772, %v808
    %v810 = vsel %vm92, -10000.0, %v809
    %v811 = vsel %vm331, %v810, -inf
    %812 = vmax.xlane.f32.xlu0 %v811
    %v813 = vpop.xlane.xlu0 %812
    %v814 = vsub.f32 %v810, %v813
    %v815 = vmul.f32 %v814, 1.442695
    %v816 = vpow.pop %v815
    %v817 = vsel %vm331, %v816, 0.0
    %818 = vadd.xlane.f32.xlu0 %v817
    %v819 = vpop.xlane.xlu0 %818
    %v820 = vrcp.pop %v819
    %v821 = vmul.f32 %v816, %v820
    %822 = vrot.lane.b32.xlu0 %v315, 80
    %v823 = vpop.permute.xlu0 %822
    %v826 = vsel %vm331, %v821, 0
    %828 = vmatprep.subr.mxu0 0.0
    %829 = vmatpush1.msra.mxu0 %v823
    %830 = vmatprep.subr.mxu0 0.0
    %831 = vmatpush1.msra.mxu0 0.0
    %832 = vmatprep.subr.mxu0 0.0
    %833 = vmatpush1.msra.mxu0 0.0
    %834 = vmatprep.subr.mxu0 0.0
    %835 = vmatpush1.msra.mxu0 0.0
    %836 = vmatprep.subr.mxu0 0.0
    %837 = vmatpush1.msra.mxu0 0.0
    %838 = vmatprep.subr.mxu0 0.0
    %839 = vmatpush1.msra.mxu0 0.0
    %840 = vmatprep.subr.mxu0 0.0
    %841 = vmatpush1.msra.mxu0 0.0
    %842 = vmatprep.subr.mxu0 0.0
    %843 = vmatpush1.msra.mxu0 0.0
    %844 = vmatprep.subr.mxu0 0.0
    %845 = vmatpush1.msra.mxu0 0.0
    %846 = vmatprep.subr.mxu0 0.0
    %847 = vmatpush1.msra.mxu0 0.0
    %848 = vmatprep.subr.mxu0 0.0
    %849 = vmatpush1.msra.mxu0 0.0
    %850 = vmatprep.subr.mxu0 0.0
    %851 = vmatpush1.msra.mxu0 0.0
    %852 = vmatprep.subr.mxu0 0.0
    %853 = vmatpush1.msra.mxu0 0.0
    %854 = vmatprep.subr.mxu0 0.0
    %855 = vmatpush1.msra.mxu0 0.0
    %856 = vmatprep.subr.mxu0 0.0
    %857 = vmatpush1.msra.mxu0 0.0
    %858 = vmatprep.subr.mxu0 0.0
    %859 = vmatpush1.msra.mxu0 0.0
    %860 = vmatprep.subr.mxu0 0.0
    %861 = vmatpush1.msra.mxu0 0.0
    %862 = vmatprep.subr.mxu0 0.0
    %863 = vmatpush1.msra.mxu0 0.0
    %864 = vmatprep.subr.mxu0 0.0
    %865 = vmatpush1.msra.mxu0 0.0
    %866 = vmatprep.subr.mxu0 0.0
    %867 = vmatpush1.msra.mxu0 0.0
    %868 = vmatprep.subr.mxu0 0.0
    %869 = vmatpush1.msra.mxu0 0.0
    %870 = vmatprep.subr.mxu0 0.0
    %871 = vmatpush1.msra.mxu0 0.0
    %872 = vmatprep.subr.mxu0 0.0
    %873 = vmatpush1.msra.mxu0 0.0
    %874 = vmatprep.subr.mxu0 0.0
    %875 = vmatpush1.msra.mxu0 0.0
    %876 = vmatprep.subr.mxu0 0.0
    %877 = vmatpush1.msra.mxu0 0.0
    %878 = vmatprep.subr.mxu0 0.0
    %879 = vmatpush1.msra.mxu0 0.0
    %880 = vmatprep.subr.mxu0 0.0
    %881 = vmatpush1.msra.mxu0 0.0
    %882 = vmatprep.subr.mxu0 0.0
    %883 = vmatpush1.msra.mxu0 0.0
    %884 = vmatprep.subr.mxu0 0.0
    %885 = vmatpush1.msra.mxu0 0.0
    %886 = vmatprep.subr.mxu0 0.0
    %887 = vmatpush1.msra.mxu0 0.0
    %888 = vmatprep.subr.mxu0 0.0
    %889 = vmatpush1.msra.mxu0 0.0
    %890 = vmatprep.subr.mxu0 0.0
    %891 = vmatpush1.msra.mxu0 0.0
    %892 = vmatprep.mubr.f32.mxu0 0.0
    %893 = vmatmul.mubr.f32.gmra.mrb[0].mxu0 %v826
    %v894 = vpop.f32.mrb[0].mxu0
    %v895 = vadd.f32 0.0, %v894
    %v896 = vpop.f32.mrb[0].mxu0
    %897 = vdwg.mxu0
    %899 = vrot.lane.b32.xlu0 %v324, 24
    %v900 = vpop.permute.xlu0 %899
    %v902 = vadd.f32 %v223, %v900
    %904 = vrot.lane.b32.xlu0 %v326, 24
    %v905 = vpop.permute.xlu0 %904
    %v907 = vadd.f32 %v315, %v905
    %909 = vrot.lane.b32.xlu0 %v902, 104
    %v910 = vpop.permute.xlu0 %909
    %912 = vrot.lane.b32.xlu0 %v907, 104
    %v913 = vpop.permute.xlu0 %912
    %v914 = vsel %vm331, %v910, 0
    %v916 = vsel %vm331, %v913, 0
    %918 = vmatprep.subr.mxu0 0.0
    %919 = vmatpush1.xpose.msra.mxu0 %v916
    %920 = vmatprep.subr.mxu0 0.0
    %921 = vmatpush1.xpose.msra.mxu0 0.0
    %922 = vmatprep.subr.mxu0 0.0
    %923 = vmatpush1.xpose.msra.mxu0 0.0
    %924 = vmatprep.subr.mxu0 0.0
    %925 = vmatpush1.xpose.msra.mxu0 0.0
    %926 = vmatprep.subr.mxu0 0.0
    %927 = vmatpush1.xpose.msra.mxu0 0.0
    %928 = vmatprep.subr.mxu0 0.0
    %929 = vmatpush1.xpose.msra.mxu0 0.0
    %930 = vmatprep.subr.mxu0 0.0
    %931 = vmatpush1.xpose.msra.mxu0 0.0
    %932 = vmatprep.subr.mxu0 0.0
    %933 = vmatpush1.xpose.msra.mxu0 0.0
    %934 = vmatprep.subr.mxu0 0.0
    %935 = vmatpush1.xpose.msra.mxu0 0.0
    %936 = vmatprep.subr.mxu0 0.0
    %937 = vmatpush1.xpose.msra.mxu0 0.0
    %938 = vmatprep.subr.mxu0 0.0
    %939 = vmatpush1.xpose.msra.mxu0 0.0
    %940 = vmatprep.subr.mxu0 0.0
    %941 = vmatpush1.xpose.msra.mxu0 0.0
    %942 = vmatprep.subr.mxu0 0.0
    %943 = vmatpush1.xpose.msra.mxu0 0.0
    %944 = vmatprep.subr.mxu0 0.0
    %945 = vmatpush1.xpose.msra.mxu0 0.0
    %946 = vmatprep.subr.mxu0 0.0
    %947 = vmatpush1.xpose.msra.mxu0 0.0
    %948 = vmatprep.subr.mxu0 0.0
    %949 = vmatpush1.xpose.msra.mxu0 0.0
    %950 = vmatprep.subr.mxu0 0.0
    %951 = vmatpush1.xpose.msra.mxu0 0.0
    %952 = vmatprep.subr.mxu0 0.0
    %953 = vmatpush1.xpose.msra.mxu0 0.0
    %954 = vmatprep.subr.mxu0 0.0
    %955 = vmatpush1.xpose.msra.mxu0 0.0
    %956 = vmatprep.subr.mxu0 0.0
    %957 = vmatpush1.xpose.msra.mxu0 0.0
    %958 = vmatprep.subr.mxu0 0.0
    %959 = vmatpush1.xpose.msra.mxu0 0.0
    %960 = vmatprep.subr.mxu0 0.0
    %961 = vmatpush1.xpose.msra.mxu0 0.0
    %962 = vmatprep.subr.mxu0 0.0
    %963 = vmatpush1.xpose.msra.mxu0 0.0
    %964 = vmatprep.subr.mxu0 0.0
    %965 = vmatpush1.xpose.msra.mxu0 0.0
    %966 = vmatprep.subr.mxu0 0.0
    %967 = vmatpush1.xpose.msra.mxu0 0.0
    %968 = vmatprep.subr.mxu0 0.0
    %969 = vmatpush1.xpose.msra.mxu0 0.0
    %970 = vmatprep.subr.mxu0 0.0
    %971 = vmatpush1.xpose.msra.mxu0 0.0
    %972 = vmatprep.subr.mxu0 0.0
    %973 = vmatpush1.xpose.msra.mxu0 0.0
    %974 = vmatprep.subr.mxu0 0.0
    %975 = vmatpush1.xpose.msra.mxu0 0.0
    %976 = vmatprep.subr.mxu0 0.0
    %977 = vmatpush1.xpose.msra.mxu0 0.0
    %978 = vmatprep.subr.mxu0 0.0
    %979 = vmatpush1.xpose.msra.mxu0 0.0
    %980 = vmatprep.subr.mxu0 0.0
    %981 = vmatpush1.xpose.msra.mxu0 0.0
    %982 = vmatprep.mubr.f32.mxu0 0.0
    %983 = vmatmul.mubr.f32.gmra.mrb[0].mxu0 %v914
    %v984 = vpop.f32.mrb[0].mxu0
    %v985 = vadd.f32 0.0, %v984
    %v986 = vpop.f32.mrb[0].mxu0
    %987 = vdwg.mxu0
    %v988 = vmul.f32 %v985, 0.35355338
    %v990 = vlaneseq
    %v991 = vshrl.u32 %v990, 7
    %v992 = vsub.s32 0, %v991
    %v993 = vrot.slane %v330, %v992
    %994 = vrot.lane.b32.xlu0 %v993, 56
    %v995 = vpop.permute.xlu0 %994
    %v997 = vmul.f32 %v315, %v995
    %999 = vrot.lane.b32.xlu0 %v997, 72
    %v1000 = vpop.permute.xlu0 %999
    %v1002 = vsel %vm331, %v1000, 0.0
    %1003 = vadd.xlane.f32.xlu0 %v1002
    %v1004 = vpop.xlane.xlu0 %1003
    %v1005 = vadd.f32 %v988, %v328
    %v1006 = vadd.f32 %v1005, %v1004
    %1007 = vxpose.xlu0.b32.start [1/16] %v1004, 128
    %1008 = vxpose.xlu0.b32.cont [2/16] 0.0, 128
    %1009 = vxpose.xlu0.b32.cont [3/16] 0.0, 128
    %1010 = vxpose.xlu0.b32.cont [4/16] 0.0, 128
    %1011 = vxpose.xlu0.b32.cont [5/16] 0.0, 128
    %1012 = vxpose.xlu0.b32.cont [6/16] 0.0, 128
    %1013 = vxpose.xlu0.b32.cont [7/16] 0.0, 128
    %1014 = vxpose.xlu0.b32.cont [8/16] 0.0, 128
    %1015 = vxpose.xlu0.b32.cont [9/16] 0.0, 128
    %1016 = vxpose.xlu0.b32.cont [10/16] 0.0, 128
    %1017 = vxpose.xlu0.b32.cont [11/16] 0.0, 128
    %1018 = vxpose.xlu0.b32.cont [12/16] 0.0, 128
    %1019 = vxpose.xlu0.b32.cont [13/16] 0.0, 128
    %1020 = vxpose.xlu0.b32.cont [14/16] 0.0, 128
    %1021 = vxpose.xlu0.b32.cont [15/16] 0.0, 128
    %1022 = vxpose.xlu0.b32.end [16/16] 0.0, 128
    %v1023 = vpop.trf.xlu0
    %v1024 = vpop.trf.xlu0
    %v1025 = vpop.trf.xlu0
    %v1026 = vpop.trf.xlu0
    %v1027 = vpop.trf.xlu0
    %v1028 = vpop.trf.xlu0
    %v1029 = vpop.trf.xlu0
    %v1030 = vpop.trf.xlu0
    %v1031 = vpop.trf.xlu0
    %v1032 = vpop.trf.xlu0
    %v1033 = vpop.trf.xlu0
    %v1034 = vpop.trf.xlu0
    %v1035 = vpop.trf.xlu0
    %v1036 = vpop.trf.xlu0
    %v1037 = vpop.trf.xlu0
    %v1038 = vpop.trf.xlu0
    %v1039 = vlaneseq
    %v1040 = vshrl.u32 %v1039, 7
    %v1041 = vsub.s32 0, %v1040
    %v1042 = vrot.slane %v1023, %v1041
    %v1043 = vadd.f32 %v1006, %v1042
    %v1044 = vsel %vm92, -10000.0, %v1043
    %v1045 = vsel %vm331, %v1044, -inf
    %1046 = vmax.xlane.f32.xlu0 %v1045
    %v1047 = vpop.xlane.xlu0 %1046
    %v1048 = vsub.f32 %v1044, %v1047
    %v1049 = vmul.f32 %v1048, 1.442695
    %v1050 = vpow.pop %v1049
    %v1051 = vsel %vm331, %v1050, 0.0
    %1052 = vadd.xlane.f32.xlu0 %v1051
    %v1053 = vpop.xlane.xlu0 %1052
    %v1054 = vrcp.pop %v1053
    %v1055 = vmul.f32 %v1050, %v1054
    %1056 = vrot.lane.b32.xlu0 %v315, 72
    %v1057 = vpop.permute.xlu0 %1056
    %v1060 = vsel %vm331, %v1055, 0
    %1062 = vmatprep.subr.mxu0 0.0
    %1063 = vmatpush1.msra.mxu0 %v1057
    %1064 = vmatprep.subr.mxu0 0.0
    %1065 = vmatpush1.msra.mxu0 0.0
    %1066 = vmatprep.subr.mxu0 0.0
    %1067 = vmatpush1.msra.mxu0 0.0
    %1068 = vmatprep.subr.mxu0 0.0
    %1069 = vmatpush1.msra.mxu0 0.0
    %1070 = vmatprep.subr.mxu0 0.0
    %1071 = vmatpush1.msra.mxu0 0.0
    %1072 = vmatprep.subr.mxu0 0.0
    %1073 = vmatpush1.msra.mxu0 0.0
    %1074 = vmatprep.subr.mxu0 0.0
    %1075 = vmatpush1.msra.mxu0 0.0
    %1076 = vmatprep.subr.mxu0 0.0
    %1077 = vmatpush1.msra.mxu0 0.0
    %1078 = vmatprep.subr.mxu0 0.0
    %1079 = vmatpush1.msra.mxu0 0.0
    %1080 = vmatprep.subr.mxu0 0.0
    %1081 = vmatpush1.msra.mxu0 0.0
    %1082 = vmatprep.subr.mxu0 0.0
    %1083 = vmatpush1.msra.mxu0 0.0
    %1084 = vmatprep.subr.mxu0 0.0
    %1085 = vmatpush1.msra.mxu0 0.0
    %1086 = vmatprep.subr.mxu0 0.0
    %1087 = vmatpush1.msra.mxu0 0.0
    %1088 = vmatprep.subr.mxu0 0.0
    %1089 = vmatpush1.msra.mxu0 0.0
    %1090 = vmatprep.subr.mxu0 0.0
    %1091 = vmatpush1.msra.mxu0 0.0
    %1092 = vmatprep.subr.mxu0 0.0
    %1093 = vmatpush1.msra.mxu0 0.0
    %1094 = vmatprep.subr.mxu0 0.0
    %1095 = vmatpush1.msra.mxu0 0.0
    %1096 = vmatprep.subr.mxu0 0.0
    %1097 = vmatpush1.msra.mxu0 0.0
    %1098 = vmatprep.subr.mxu0 0.0
    %1099 = vmatpush1.msra.mxu0 0.0
    %1100 = vmatprep.subr.mxu0 0.0
    %1101 = vmatpush1.msra.mxu0 0.0
    %1102 = vmatprep.subr.mxu0 0.0
    %1103 = vmatpush1.msra.mxu0 0.0
    %1104 = vmatprep.subr.mxu0 0.0
    %1105 = vmatpush1.msra.mxu0 0.0
    %1106 = vmatprep.subr.mxu0 0.0
    %1107 = vmatpush1.msra.mxu0 0.0
    %1108 = vmatprep.subr.mxu0 0.0
    %1109 = vmatpush1.msra.mxu0 0.0
    %1110 = vmatprep.subr.mxu0 0.0
    %1111 = vmatpush1.msra.mxu0 0.0
    %1112 = vmatprep.subr.mxu0 0.0
    %1113 = vmatpush1.msra.mxu0 0.0
    %1114 = vmatprep.subr.mxu0 0.0
    %1115 = vmatpush1.msra.mxu0 0.0
    %1116 = vmatprep.subr.mxu0 0.0
    %1117 = vmatpush1.msra.mxu0 0.0
    %1118 = vmatprep.subr.mxu0 0.0
    %1119 = vmatpush1.msra.mxu0 0.0
    %1120 = vmatprep.subr.mxu0 0.0
    %1121 = vmatpush1.msra.mxu0 0.0
    %1122 = vmatprep.subr.mxu0 0.0
    %1123 = vmatpush1.msra.mxu0 0.0
    %1124 = vmatprep.subr.mxu0 0.0
    %1125 = vmatpush1.msra.mxu0 0.0
    %1126 = vmatprep.mubr.f32.mxu0 0.0
    %1127 = vmatmul.mubr.f32.gmra.mrb[0].mxu0 %v1060
    %v1128 = vpop.f32.mrb[0].mxu0
    %v1129 = vadd.f32 0.0, %v1128
    %v1130 = vpop.f32.mrb[0].mxu0
    %1131 = vdwg.mxu0
    %1133 = vrot.lane.b32.xlu0 %v661, 8
    %v1134 = vpop.permute.xlu0 %1133
    %1137 = vrot.lane.b32.xlu0 %v895, 16
    %v1138 = vpop.permute.xlu0 %1137
    %1141 = vrot.lane.b32.xlu0 %v1129, 24
    %v1142 = vpop.permute.xlu0 %1141
    %v1144 = vsel %vm331, %v494, %v1134
    %vm1145 = vcmask 130048
    %v1146 = vsel %vm1145, %v1144, %v1138
    %vm1147 = vcmask 195584
    %v1148 = vsel %vm1147, %v1146, %v1142
    %v1150 = vsel %vm331, %v228, 0
    %v1153 = vsel %vm331, %v320, 0
    %1155 = vmatprep.subr.mxu0 0.0
    %1156 = vmatpush1.xpose.msra.mxu0 %v1153
    %1157 = vmatprep.subr.mxu0 0.0
    %1158 = vmatpush1.xpose.msra.mxu0 0.0
    %1159 = vmatprep.subr.mxu0 0.0
    %1160 = vmatpush1.xpose.msra.mxu0 0.0
    %1161 = vmatprep.subr.mxu0 0.0
    %1162 = vmatpush1.xpose.msra.mxu0 0.0
    %1163 = vmatprep.subr.mxu0 0.0
    %1164 = vmatpush1.xpose.msra.mxu0 0.0
    %1165 = vmatprep.subr.mxu0 0.0
    %1166 = vmatpush1.xpose.msra.mxu0 0.0
    %1167 = vmatprep.subr.mxu0 0.0
    %1168 = vmatpush1.xpose.msra.mxu0 0.0
    %1169 = vmatprep.subr.mxu0 0.0
    %1170 = vmatpush1.xpose.msra.mxu0 0.0
    %1171 = vmatprep.subr.mxu0 0.0
    %1172 = vmatpush1.xpose.msra.mxu0 0.0
    %1173 = vmatprep.subr.mxu0 0.0
    %1174 = vmatpush1.xpose.msra.mxu0 0.0
    %1175 = vmatprep.subr.mxu0 0.0
    %1176 = vmatpush1.xpose.msra.mxu0 0.0
    %1177 = vmatprep.subr.mxu0 0.0
    %1178 = vmatpush1.xpose.msra.mxu0 0.0
    %1179 = vmatprep.subr.mxu0 0.0
    %1180 = vmatpush1.xpose.msra.mxu0 0.0
    %1181 = vmatprep.subr.mxu0 0.0
    %1182 = vmatpush1.xpose.msra.mxu0 0.0
    %1183 = vmatprep.subr.mxu0 0.0
    %1184 = vmatpush1.xpose.msra.mxu0 0.0
    %1185 = vmatprep.subr.mxu0 0.0
    %1186 = vmatpush1.xpose.msra.mxu0 0.0
    %1187 = vmatprep.subr.mxu0 0.0
    %1188 = vmatpush1.xpose.msra.mxu0 0.0
    %1189 = vmatprep.subr.mxu0 0.0
    %1190 = vmatpush1.xpose.msra.mxu0 0.0
    %1191 = vmatprep.subr.mxu0 0.0
    %1192 = vmatpush1.xpose.msra.mxu0 0.0
    %1193 = vmatprep.subr.mxu0 0.0
    %1194 = vmatpush1.xpose.msra.mxu0 0.0
    %1195 = vmatprep.subr.mxu0 0.0
    %1196 = vmatpush1.xpose.msra.mxu0 0.0
    %1197 = vmatprep.subr.mxu0 0.0
    %1198 = vmatpush1.xpose.msra.mxu0 0.0
    %1199 = vmatprep.subr.mxu0 0.0
    %1200 = vmatpush1.xpose.msra.mxu0 0.0
    %1201 = vmatprep.subr.mxu0 0.0
    %1202 = vmatpush1.xpose.msra.mxu0 0.0
    %1203 = vmatprep.subr.mxu0 0.0
    %1204 = vmatpush1.xpose.msra.mxu0 0.0
    %1205 = vmatprep.subr.mxu0 0.0
    %1206 = vmatpush1.xpose.msra.mxu0 0.0
    %1207 = vmatprep.subr.mxu0 0.0
    %1208 = vmatpush1.xpose.msra.mxu0 0.0
    %1209 = vmatprep.subr.mxu0 0.0
    %1210 = vmatpush1.xpose.msra.mxu0 0.0
    %1211 = vmatprep.subr.mxu0 0.0
    %1212 = vmatpush1.xpose.msra.mxu0 0.0
    %1213 = vmatprep.subr.mxu0 0.0
    %1214 = vmatpush1.xpose.msra.mxu0 0.0
    %1215 = vmatprep.subr.mxu0 0.0
    %1216 = vmatpush1.xpose.msra.mxu0 0.0
    %1217 = vmatprep.subr.mxu0 0.0
    %1218 = vmatpush1.xpose.msra.mxu0 0.0
    %1219 = vmatprep.mubr.f32.mxu0 0.0
    %1220 = vmatmul.mubr.f32.gmra.mrb[0].mxu0 %v1150
    %v1221 = vpop.f32.mrb[0].mxu0
    %v1222 = vadd.f32 0.0, %v1221
    %v1223 = vpop.f32.mrb[0].mxu0
    %1224 = vdwg.mxu0
    %v1225 = vmul.f32 %v1222, 0.35355338
    %v1226 = vsel %vm92, -10000.0, %v1225
    %v1227 = vsel %vm331, %v1226, -inf
    %1228 = vmax.xlane.f32.xlu0 %v1227
    %v1229 = vpop.xlane.xlu0 %1228
    %v1230 = vsub.f32 %v1226, %v1229
    %v1231 = vmul.f32 %v1230, 1.442695
    %v1232 = vpow.pop %v1231
    %v1233 = vsel %vm331, %v1232, 0.0
    %1234 = vadd.xlane.f32.xlu0 %v1233
    %v1235 = vpop.xlane.xlu0 %1234
    %v1236 = vrcp.pop %v1235
    %v1237 = vmul.f32 %v1232, %v1236
    %1238 = vrot.lane.b32.xlu0 %v320, 96
    %v1239 = vpop.permute.xlu0 %1238
    %v1242 = vsel %vm331, %v1237, 0
    %1244 = vmatprep.subr.mxu0 0.0
    %1245 = vmatpush1.msra.mxu0 %v1239
    %1246 = vmatprep.subr.mxu0 0.0
    %1247 = vmatpush1.msra.mxu0 0.0
    %1248 = vmatprep.subr.mxu0 0.0
    %1249 = vmatpush1.msra.mxu0 0.0
    %1250 = vmatprep.subr.mxu0 0.0
    %1251 = vmatpush1.msra.mxu0 0.0
    %1252 = vmatprep.subr.mxu0 0.0
    %1253 = vmatpush1.msra.mxu0 0.0
    %1254 = vmatprep.subr.mxu0 0.0
    %1255 = vmatpush1.msra.mxu0 0.0
    %1256 = vmatprep.subr.mxu0 0.0
    %1257 = vmatpush1.msra.mxu0 0.0
    %1258 = vmatprep.subr.mxu0 0.0
    %1259 = vmatpush1.msra.mxu0 0.0
    %1260 = vmatprep.subr.mxu0 0.0
    %1261 = vmatpush1.msra.mxu0 0.0
    %1262 = vmatprep.subr.mxu0 0.0
    %1263 = vmatpush1.msra.mxu0 0.0
    %1264 = vmatprep.subr.mxu0 0.0
    %1265 = vmatpush1.msra.mxu0 0.0
    %1266 = vmatprep.subr.mxu0 0.0
    %1267 = vmatpush1.msra.mxu0 0.0
    %1268 = vmatprep.subr.mxu0 0.0
    %1269 = vmatpush1.msra.mxu0 0.0
    %1270 = vmatprep.subr.mxu0 0.0
    %1271 = vmatpush1.msra.mxu0 0.0
    %1272 = vmatprep.subr.mxu0 0.0
    %1273 = vmatpush1.msra.mxu0 0.0
    %1274 = vmatprep.subr.mxu0 0.0
    %1275 = vmatpush1.msra.mxu0 0.0
    %1276 = vmatprep.subr.mxu0 0.0
    %1277 = vmatpush1.msra.mxu0 0.0
    %1278 = vmatprep.subr.mxu0 0.0
    %1279 = vmatpush1.msra.mxu0 0.0
    %1280 = vmatprep.subr.mxu0 0.0
    %1281 = vmatpush1.msra.mxu0 0.0
    %1282 = vmatprep.subr.mxu0 0.0
    %1283 = vmatpush1.msra.mxu0 0.0
    %1284 = vmatprep.subr.mxu0 0.0
    %1285 = vmatpush1.msra.mxu0 0.0
    %1286 = vmatprep.subr.mxu0 0.0
    %1287 = vmatpush1.msra.mxu0 0.0
    %1288 = vmatprep.subr.mxu0 0.0
    %1289 = vmatpush1.msra.mxu0 0.0
    %1290 = vmatprep.subr.mxu0 0.0
    %1291 = vmatpush1.msra.mxu0 0.0
    %1292 = vmatprep.subr.mxu0 0.0
    %1293 = vmatpush1.msra.mxu0 0.0
    %1294 = vmatprep.subr.mxu0 0.0
    %1295 = vmatpush1.msra.mxu0 0.0
    %1296 = vmatprep.subr.mxu0 0.0
    %1297 = vmatpush1.msra.mxu0 0.0
    %1298 = vmatprep.subr.mxu0 0.0
    %1299 = vmatpush1.msra.mxu0 0.0
    %1300 = vmatprep.subr.mxu0 0.0
    %1301 = vmatpush1.msra.mxu0 0.0
    %1302 = vmatprep.subr.mxu0 0.0
    %1303 = vmatpush1.msra.mxu0 0.0
    %1304 = vmatprep.subr.mxu0 0.0
    %1305 = vmatpush1.msra.mxu0 0.0
    %1306 = vmatprep.subr.mxu0 0.0
    %1307 = vmatpush1.msra.mxu0 0.0
    %1308 = vmatprep.mubr.f32.mxu0 0.0
    %1309 = vmatmul.mubr.f32.gmra.mrb[0].mxu0 %v1242
    %v1310 = vpop.f32.mrb[0].mxu0
    %v1311 = vadd.f32 0.0, %v1310
    %v1312 = vpop.f32.mrb[0].mxu0
    %1313 = vdwg.mxu0
    %1314 = vrot.lane.b32.xlu0 %v228, 120
    %v1315 = vpop.permute.xlu0 %1314
    %1316 = vrot.lane.b32.xlu0 %v320, 120
    %v1317 = vpop.permute.xlu0 %1316
    %v1318 = vsel %vm331, %v1315, 0
    %v1320 = vsel %vm331, %v1317, 0
    %1322 = vmatprep.subr.mxu0 0.0
    %1323 = vmatpush1.xpose.msra.mxu0 %v1320
    %1324 = vmatprep.subr.mxu0 0.0
    %1325 = vmatpush1.xpose.msra.mxu0 0.0
    %1326 = vmatprep.subr.mxu0 0.0
    %1327 = vmatpush1.xpose.msra.mxu0 0.0
    %1328 = vmatprep.subr.mxu0 0.0
    %1329 = vmatpush1.xpose.msra.mxu0 0.0
    %1330 = vmatprep.subr.mxu0 0.0
    %1331 = vmatpush1.xpose.msra.mxu0 0.0
    %1332 = vmatprep.subr.mxu0 0.0
    %1333 = vmatpush1.xpose.msra.mxu0 0.0
    %1334 = vmatprep.subr.mxu0 0.0
    %1335 = vmatpush1.xpose.msra.mxu0 0.0
    %1336 = vmatprep.subr.mxu0 0.0
    %1337 = vmatpush1.xpose.msra.mxu0 0.0
    %1338 = vmatprep.subr.mxu0 0.0
    %1339 = vmatpush1.xpose.msra.mxu0 0.0
    %1340 = vmatprep.subr.mxu0 0.0
    %1341 = vmatpush1.xpose.msra.mxu0 0.0
    %1342 = vmatprep.subr.mxu0 0.0
    %1343 = vmatpush1.xpose.msra.mxu0 0.0
    %1344 = vmatprep.subr.mxu0 0.0
    %1345 = vmatpush1.xpose.msra.mxu0 0.0
    %1346 = vmatprep.subr.mxu0 0.0
    %1347 = vmatpush1.xpose.msra.mxu0 0.0
    %1348 = vmatprep.subr.mxu0 0.0
    %1349 = vmatpush1.xpose.msra.mxu0 0.0
    %1350 = vmatprep.subr.mxu0 0.0
    %1351 = vmatpush1.xpose.msra.mxu0 0.0
    %1352 = vmatprep.subr.mxu0 0.0
    %1353 = vmatpush1.xpose.msra.mxu0 0.0
    %1354 = vmatprep.subr.mxu0 0.0
    %1355 = vmatpush1.xpose.msra.mxu0 0.0
    %1356 = vmatprep.subr.mxu0 0.0
    %1357 = vmatpush1.xpose.msra.mxu0 0.0
    %1358 = vmatprep.subr.mxu0 0.0
    %1359 = vmatpush1.xpose.msra.mxu0 0.0
    %1360 = vmatprep.subr.mxu0 0.0
    %1361 = vmatpush1.xpose.msra.mxu0 0.0
    %1362 = vmatprep.subr.mxu0 0.0
    %1363 = vmatpush1.xpose.msra.mxu0 0.0
    %1364 = vmatprep.subr.mxu0 0.0
    %1365 = vmatpush1.xpose.msra.mxu0 0.0
    %1366 = vmatprep.subr.mxu0 0.0
    %1367 = vmatpush1.xpose.msra.mxu0 0.0
    %1368 = vmatprep.subr.mxu0 0.0
    %1369 = vmatpush1.xpose.msra.mxu0 0.0
    %1370 = vmatprep.subr.mxu0 0.0
    %1371 = vmatpush1.xpose.msra.mxu0 0.0
    %1372 = vmatprep.subr.mxu0 0.0
    %1373 = vmatpush1.xpose.msra.mxu0 0.0
    %1374 = vmatprep.subr.mxu0 0.0
    %1375 = vmatpush1.xpose.msra.mxu0 0.0
    %1376 = vmatprep.subr.mxu0 0.0
    %1377 = vmatpush1.xpose.msra.mxu0 0.0
    %1378 = vmatprep.subr.mxu0 0.0
    %1379 = vmatpush1.xpose.msra.mxu0 0.0
    %1380 = vmatprep.subr.mxu0 0.0
    %1381 = vmatpush1.xpose.msra.mxu0 0.0
    %1382 = vmatprep.subr.mxu0 0.0
    %1383 = vmatpush1.xpose.msra.mxu0 0.0
    %1384 = vmatprep.subr.mxu0 0.0
    %1385 = vmatpush1.xpose.msra.mxu0 0.0
    %1386 = vmatprep.mubr.f32.mxu0 0.0
    %1387 = vmatmul.mubr.f32.gmra.mrb[0].mxu0 %v1318
    %v1388 = vpop.f32.mrb[0].mxu0
    %v1389 = vadd.f32 0.0, %v1388
    %v1390 = vpop.f32.mrb[0].mxu0
    %1391 = vdwg.mxu0
    %v1392 = vmul.f32 %v1389, 0.35355338
    %v1393 = vsel %vm92, -10000.0, %v1392
    %v1394 = vsel %vm331, %v1393, -inf
    %1395 = vmax.xlane.f32.xlu0 %v1394
    %v1396 = vpop.xlane.xlu0 %1395
    %v1397 = vsub.f32 %v1393, %v1396
    %v1398 = vmul.f32 %v1397, 1.442695
    %v1399 = vpow.pop %v1398
    %v1400 = vsel %vm331, %v1399, 0.0
    %1401 = vadd.xlane.f32.xlu0 %v1400
    %v1402 = vpop.xlane.xlu0 %1401
    %v1403 = vrcp.pop %v1402
    %v1404 = vmul.f32 %v1399, %v1403
    %1405 = vrot.lane.b32.xlu0 %v320, 88
    %v1406 = vpop.permute.xlu0 %1405
    %v1409 = vsel %vm331, %v1404, 0
    %1411 = vmatprep.subr.mxu0 0.0
    %1412 = vmatpush1.msra.mxu0 %v1406
    %1413 = vmatprep.subr.mxu0 0.0
    %1414 = vmatpush1.msra.mxu0 0.0
    %1415 = vmatprep.subr.mxu0 0.0
    %1416 = vmatpush1.msra.mxu0 0.0
    %1417 = vmatprep.subr.mxu0 0.0
    %1418 = vmatpush1.msra.mxu0 0.0
    %1419 = vmatprep.subr.mxu0 0.0
    %1420 = vmatpush1.msra.mxu0 0.0
    %1421 = vmatprep.subr.mxu0 0.0
    %1422 = vmatpush1.msra.mxu0 0.0
    %1423 = vmatprep.subr.mxu0 0.0
    %1424 = vmatpush1.msra.mxu0 0.0
    %1425 = vmatprep.subr.mxu0 0.0
    %1426 = vmatpush1.msra.mxu0 0.0
    %1427 = vmatprep.subr.mxu0 0.0
    %1428 = vmatpush1.msra.mxu0 0.0
    %1429 = vmatprep.subr.mxu0 0.0
    %1430 = vmatpush1.msra.mxu0 0.0
    %1431 = vmatprep.subr.mxu0 0.0
    %1432 = vmatpush1.msra.mxu0 0.0
    %1433 = vmatprep.subr.mxu0 0.0
    %1434 = vmatpush1.msra.mxu0 0.0
    %1435 = vmatprep.subr.mxu0 0.0
    %1436 = vmatpush1.msra.mxu0 0.0
    %1437 = vmatprep.subr.mxu0 0.0
    %1438 = vmatpush1.msra.mxu0 0.0
    %1439 = vmatprep.subr.mxu0 0.0
    %1440 = vmatpush1.msra.mxu0 0.0
    %1441 = vmatprep.subr.mxu0 0.0
    %1442 = vmatpush1.msra.mxu0 0.0
    %1443 = vmatprep.subr.mxu0 0.0
    %1444 = vmatpush1.msra.mxu0 0.0
    %1445 = vmatprep.subr.mxu0 0.0
    %1446 = vmatpush1.msra.mxu0 0.0
    %1447 = vmatprep.subr.mxu0 0.0
    %1448 = vmatpush1.msra.mxu0 0.0
    %1449 = vmatprep.subr.mxu0 0.0
    %1450 = vmatpush1.msra.mxu0 0.0
    %1451 = vmatprep.subr.mxu0 0.0
    %1452 = vmatpush1.msra.mxu0 0.0
    %1453 = vmatprep.subr.mxu0 0.0
    %1454 = vmatpush1.msra.mxu0 0.0
    %1455 = vmatprep.subr.mxu0 0.0
    %1456 = vmatpush1.msra.mxu0 0.0
    %1457 = vmatprep.subr.mxu0 0.0
    %1458 = vmatpush1.msra.mxu0 0.0
    %1459 = vmatprep.subr.mxu0 0.0
    %1460 = vmatpush1.msra.mxu0 0.0
    %1461 = vmatprep.subr.mxu0 0.0
    %1462 = vmatpush1.msra.mxu0 0.0
    %1463 = vmatprep.subr.mxu0 0.0
    %1464 = vmatpush1.msra.mxu0 0.0
    %1465 = vmatprep.subr.mxu0 0.0
    %1466 = vmatpush1.msra.mxu0 0.0
    %1467 = vmatprep.subr.mxu0 0.0
    %1468 = vmatpush1.msra.mxu0 0.0
    %1469 = vmatprep.subr.mxu0 0.0
    %1470 = vmatpush1.msra.mxu0 0.0
    %1471 = vmatprep.subr.mxu0 0.0
    %1472 = vmatpush1.msra.mxu0 0.0
    %1473 = vmatprep.subr.mxu0 0.0
    %1474 = vmatpush1.msra.mxu0 0.0
    %1475 = vmatprep.mubr.f32.mxu0 0.0
    %1476 = vmatmul.mubr.f32.gmra.mrb[0].mxu0 %v1409
    %v1477 = vpop.f32.mrb[0].mxu0
    %v1478 = vadd.f32 0.0, %v1477
    %v1479 = vpop.f32.mrb[0].mxu0
    %1480 = vdwg.mxu0
    %v1481 = vadd.f32 %v228, %v666
    %v1482 = vadd.f32 %v320, %v671
    %1484 = vrot.lane.b32.xlu0 %v1481, 112
    %v1485 = vpop.permute.xlu0 %1484
    %1487 = vrot.lane.b32.xlu0 %v1482, 112
    %v1488 = vpop.permute.xlu0 %1487
    %v1489 = vsel %vm331, %v1485, 0
    %v1491 = vsel %vm331, %v1488, 0
    %1493 = vmatprep.subr.mxu0 0.0
    %1494 = vmatpush1.xpose.msra.mxu0 %v1491
    %1495 = vmatprep.subr.mxu0 0.0
    %1496 = vmatpush1.xpose.msra.mxu0 0.0
    %1497 = vmatprep.subr.mxu0 0.0
    %1498 = vmatpush1.xpose.msra.mxu0 0.0
    %1499 = vmatprep.subr.mxu0 0.0
    %1500 = vmatpush1.xpose.msra.mxu0 0.0
    %1501 = vmatprep.subr.mxu0 0.0
    %1502 = vmatpush1.xpose.msra.mxu0 0.0
    %1503 = vmatprep.subr.mxu0 0.0
    %1504 = vmatpush1.xpose.msra.mxu0 0.0
    %1505 = vmatprep.subr.mxu0 0.0
    %1506 = vmatpush1.xpose.msra.mxu0 0.0
    %1507 = vmatprep.subr.mxu0 0.0
    %1508 = vmatpush1.xpose.msra.mxu0 0.0
    %1509 = vmatprep.subr.mxu0 0.0
    %1510 = vmatpush1.xpose.msra.mxu0 0.0
    %1511 = vmatprep.subr.mxu0 0.0
    %1512 = vmatpush1.xpose.msra.mxu0 0.0
    %1513 = vmatprep.subr.mxu0 0.0
    %1514 = vmatpush1.xpose.msra.mxu0 0.0
    %1515 = vmatprep.subr.mxu0 0.0
    %1516 = vmatpush1.xpose.msra.mxu0 0.0
    %1517 = vmatprep.subr.mxu0 0.0
    %1518 = vmatpush1.xpose.msra.mxu0 0.0
    %1519 = vmatprep.subr.mxu0 0.0
    %1520 = vmatpush1.xpose.msra.mxu0 0.0
    %1521 = vmatprep.subr.mxu0 0.0
    %1522 = vmatpush1.xpose.msra.mxu0 0.0
    %1523 = vmatprep.subr.mxu0 0.0
    %1524 = vmatpush1.xpose.msra.mxu0 0.0
    %1525 = vmatprep.subr.mxu0 0.0
    %1526 = vmatpush1.xpose.msra.mxu0 0.0
    %1527 = vmatprep.subr.mxu0 0.0
    %1528 = vmatpush1.xpose.msra.mxu0 0.0
    %1529 = vmatprep.subr.mxu0 0.0
    %1530 = vmatpush1.xpose.msra.mxu0 0.0
    %1531 = vmatprep.subr.mxu0 0.0
    %1532 = vmatpush1.xpose.msra.mxu0 0.0
    %1533 = vmatprep.subr.mxu0 0.0
    %1534 = vmatpush1.xpose.msra.mxu0 0.0
    %1535 = vmatprep.subr.mxu0 0.0
    %1536 = vmatpush1.xpose.msra.mxu0 0.0
    %1537 = vmatprep.subr.mxu0 0.0
    %1538 = vmatpush1.xpose.msra.mxu0 0.0
    %1539 = vmatprep.subr.mxu0 0.0
    %1540 = vmatpush1.xpose.msra.mxu0 0.0
    %1541 = vmatprep.subr.mxu0 0.0
    %1542 = vmatpush1.xpose.msra.mxu0 0.0
    %1543 = vmatprep.subr.mxu0 0.0
    %1544 = vmatpush1.xpose.msra.mxu0 0.0
    %1545 = vmatprep.subr.mxu0 0.0
    %1546 = vmatpush1.xpose.msra.mxu0 0.0
    %1547 = vmatprep.subr.mxu0 0.0
    %1548 = vmatpush1.xpose.msra.mxu0 0.0
    %1549 = vmatprep.subr.mxu0 0.0
    %1550 = vmatpush1.xpose.msra.mxu0 0.0
    %1551 = vmatprep.subr.mxu0 0.0
    %1552 = vmatpush1.xpose.msra.mxu0 0.0
    %1553 = vmatprep.subr.mxu0 0.0
    %1554 = vmatpush1.xpose.msra.mxu0 0.0
    %1555 = vmatprep.subr.mxu0 0.0
    %1556 = vmatpush1.xpose.msra.mxu0 0.0
    %1557 = vmatprep.mubr.f32.mxu0 0.0
    %1558 = vmatmul.mubr.f32.gmra.mrb[0].mxu0 %v1489
    %v1559 = vpop.f32.mrb[0].mxu0
    %v1560 = vadd.f32 0.0, %v1559
    %v1561 = vpop.f32.mrb[0].mxu0
    %1562 = vdwg.mxu0
    %v1563 = vmul.f32 %v1560, 0.35355338
    %v1564 = vmul.f32 %v320, %v761
    %1566 = vrot.lane.b32.xlu0 %v1564, 80
    %v1567 = vpop.permute.xlu0 %1566
    %v1569 = vsel %vm331, %v1567, 0.0
    %1570 = vadd.xlane.f32.xlu0 %v1569
    %v1571 = vpop.xlane.xlu0 %1570
    %v1572 = vadd.f32 %v1563, %v327
    %v1573 = vadd.f32 %v1572, %v1571
    %1574 = vxpose.xlu0.b32.start [1/16] %v1571, 128
    %1575 = vxpose.xlu0.b32.cont [2/16] 0.0, 128
    %1576 = vxpose.xlu0.b32.cont [3/16] 0.0, 128
    %1577 = vxpose.xlu0.b32.cont [4/16] 0.0, 128
    %1578 = vxpose.xlu0.b32.cont [5/16] 0.0, 128
    %1579 = vxpose.xlu0.b32.cont [6/16] 0.0, 128
    %1580 = vxpose.xlu0.b32.cont [7/16] 0.0, 128
    %1581 = vxpose.xlu0.b32.cont [8/16] 0.0, 128
    %1582 = vxpose.xlu0.b32.cont [9/16] 0.0, 128
    %1583 = vxpose.xlu0.b32.cont [10/16] 0.0, 128
    %1584 = vxpose.xlu0.b32.cont [11/16] 0.0, 128
    %1585 = vxpose.xlu0.b32.cont [12/16] 0.0, 128
    %1586 = vxpose.xlu0.b32.cont [13/16] 0.0, 128
    %1587 = vxpose.xlu0.b32.cont [14/16] 0.0, 128
    %1588 = vxpose.xlu0.b32.cont [15/16] 0.0, 128
    %1589 = vxpose.xlu0.b32.end [16/16] 0.0, 128
    %v1590 = vpop.trf.xlu0
    %v1591 = vpop.trf.xlu0
    %v1592 = vpop.trf.xlu0
    %v1593 = vpop.trf.xlu0
    %v1594 = vpop.trf.xlu0
    %v1595 = vpop.trf.xlu0
    %v1596 = vpop.trf.xlu0
    %v1597 = vpop.trf.xlu0
    %v1598 = vpop.trf.xlu0
    %v1599 = vpop.trf.xlu0
    %v1600 = vpop.trf.xlu0
    %v1601 = vpop.trf.xlu0
    %v1602 = vpop.trf.xlu0
    %v1603 = vpop.trf.xlu0
    %v1604 = vpop.trf.xlu0
    %v1605 = vpop.trf.xlu0
    %v1606 = vlaneseq
    %v1607 = vshrl.u32 %v1606, 7
    %v1608 = vsub.s32 0, %v1607
    %v1609 = vrot.slane %v1590, %v1608
    %v1610 = vadd.f32 %v1573, %v1609
    %v1611 = vsel %vm92, -10000.0, %v1610
    %v1612 = vsel %vm331, %v1611, -inf
    %1613 = vmax.xlane.f32.xlu0 %v1612
    %v1614 = vpop.xlane.xlu0 %1613
    %v1615 = vsub.f32 %v1611, %v1614
    %v1616 = vmul.f32 %v1615, 1.442695
    %v1617 = vpow.pop %v1616
    %v1618 = vsel %vm331, %v1617, 0.0
    %1619 = vadd.xlane.f32.xlu0 %v1618
    %v1620 = vpop.xlane.xlu0 %1619
    %v1621 = vrcp.pop %v1620
    %v1622 = vmul.f32 %v1617, %v1621
    %1623 = vrot.lane.b32.xlu0 %v320, 80
    %v1624 = vpop.permute.xlu0 %1623
    %v1627 = vsel %vm331, %v1622, 0
    %1629 = vmatprep.subr.mxu0 0.0
    %1630 = vmatpush1.msra.mxu0 %v1624
    %1631 = vmatprep.subr.mxu0 0.0
    %1632 = vmatpush1.msra.mxu0 0.0
    %1633 = vmatprep.subr.mxu0 0.0
    %1634 = vmatpush1.msra.mxu0 0.0
    %1635 = vmatprep.subr.mxu0 0.0
    %1636 = vmatpush1.msra.mxu0 0.0
    %1637 = vmatprep.subr.mxu0 0.0
    %1638 = vmatpush1.msra.mxu0 0.0
    %1639 = vmatprep.subr.mxu0 0.0
    %1640 = vmatpush1.msra.mxu0 0.0
    %1641 = vmatprep.subr.mxu0 0.0
    %1642 = vmatpush1.msra.mxu0 0.0
    %1643 = vmatprep.subr.mxu0 0.0
    %1644 = vmatpush1.msra.mxu0 0.0
    %1645 = vmatprep.subr.mxu0 0.0
    %1646 = vmatpush1.msra.mxu0 0.0
    %1647 = vmatprep.subr.mxu0 0.0
    %1648 = vmatpush1.msra.mxu0 0.0
    %1649 = vmatprep.subr.mxu0 0.0
    %1650 = vmatpush1.msra.mxu0 0.0
    %1651 = vmatprep.subr.mxu0 0.0
    %1652 = vmatpush1.msra.mxu0 0.0
    %1653 = vmatprep.subr.mxu0 0.0
    %1654 = vmatpush1.msra.mxu0 0.0
    %1655 = vmatprep.subr.mxu0 0.0
    %1656 = vmatpush1.msra.mxu0 0.0
    %1657 = vmatprep.subr.mxu0 0.0
    %1658 = vmatpush1.msra.mxu0 0.0
    %1659 = vmatprep.subr.mxu0 0.0
    %1660 = vmatpush1.msra.mxu0 0.0
    %1661 = vmatprep.subr.mxu0 0.0
    %1662 = vmatpush1.msra.mxu0 0.0
    %1663 = vmatprep.subr.mxu0 0.0
    %1664 = vmatpush1.msra.mxu0 0.0
    %1665 = vmatprep.subr.mxu0 0.0
    %1666 = vmatpush1.msra.mxu0 0.0
    %1667 = vmatprep.subr.mxu0 0.0
    %1668 = vmatpush1.msra.mxu0 0.0
    %1669 = vmatprep.subr.mxu0 0.0
    %1670 = vmatpush1.msra.mxu0 0.0
    %1671 = vmatprep.subr.mxu0 0.0
    %1672 = vmatpush1.msra.mxu0 0.0
    %1673 = vmatprep.subr.mxu0 0.0
    %1674 = vmatpush1.msra.mxu0 0.0
    %1675 = vmatprep.subr.mxu0 0.0
    %1676 = vmatpush1.msra.mxu0 0.0
    %1677 = vmatprep.subr.mxu0 0.0
    %1678 = vmatpush1.msra.mxu0 0.0
    %1679 = vmatprep.subr.mxu0 0.0
    %1680 = vmatpush1.msra.mxu0 0.0
    %1681 = vmatprep.subr.mxu0 0.0
    %1682 = vmatpush1.msra.mxu0 0.0
    %1683 = vmatprep.subr.mxu0 0.0
    %1684 = vmatpush1.msra.mxu0 0.0
    %1685 = vmatprep.subr.mxu0 0.0
    %1686 = vmatpush1.msra.mxu0 0.0
    %1687 = vmatprep.subr.mxu0 0.0
    %1688 = vmatpush1.msra.mxu0 0.0
    %1689 = vmatprep.subr.mxu0 0.0
    %1690 = vmatpush1.msra.mxu0 0.0
    %1691 = vmatprep.subr.mxu0 0.0
    %1692 = vmatpush1.msra.mxu0 0.0
    %1693 = vmatprep.mubr.f32.mxu0 0.0
    %1694 = vmatmul.mubr.f32.gmra.mrb[0].mxu0 %v1627
    %v1695 = vpop.f32.mrb[0].mxu0
    %v1696 = vadd.f32 0.0, %v1695
    %v1697 = vpop.f32.mrb[0].mxu0
    %1698 = vdwg.mxu0
    %v1699 = vadd.f32 %v228, %v900
    %v1700 = vadd.f32 %v320, %v905
    %1702 = vrot.lane.b32.xlu0 %v1699, 104
    %v1703 = vpop.permute.xlu0 %1702
    %1705 = vrot.lane.b32.xlu0 %v1700, 104
    %v1706 = vpop.permute.xlu0 %1705
    %v1707 = vsel %vm331, %v1703, 0
    %v1709 = vsel %vm331, %v1706, 0
    %1711 = vmatprep.subr.mxu0 0.0
    %1712 = vmatpush1.xpose.msra.mxu0 %v1709
    %1713 = vmatprep.subr.mxu0 0.0
    %1714 = vmatpush1.xpose.msra.mxu0 0.0
    %1715 = vmatprep.subr.mxu0 0.0
    %1716 = vmatpush1.xpose.msra.mxu0 0.0
    %1717 = vmatprep.subr.mxu0 0.0
    %1718 = vmatpush1.xpose.msra.mxu0 0.0
    %1719 = vmatprep.subr.mxu0 0.0
    %1720 = vmatpush1.xpose.msra.mxu0 0.0
    %1721 = vmatprep.subr.mxu0 0.0
    %1722 = vmatpush1.xpose.msra.mxu0 0.0
    %1723 = vmatprep.subr.mxu0 0.0
    %1724 = vmatpush1.xpose.msra.mxu0 0.0
    %1725 = vmatprep.subr.mxu0 0.0
    %1726 = vmatpush1.xpose.msra.mxu0 0.0
    %1727 = vmatprep.subr.mxu0 0.0
    %1728 = vmatpush1.xpose.msra.mxu0 0.0
    %1729 = vmatprep.subr.mxu0 0.0
    %1730 = vmatpush1.xpose.msra.mxu0 0.0
    %1731 = vmatprep.subr.mxu0 0.0
    %1732 = vmatpush1.xpose.msra.mxu0 0.0
    %1733 = vmatprep.subr.mxu0 0.0
    %1734 = vmatpush1.xpose.msra.mxu0 0.0
    %1735 = vmatprep.subr.mxu0 0.0
    %1736 = vmatpush1.xpose.msra.mxu0 0.0
    %1737 = vmatprep.subr.mxu0 0.0
    %1738 = vmatpush1.xpose.msra.mxu0 0.0
    %1739 = vmatprep.subr.mxu0 0.0
    %1740 = vmatpush1.xpose.msra.mxu0 0.0
    %1741 = vmatprep.subr.mxu0 0.0
    %1742 = vmatpush1.xpose.msra.mxu0 0.0
    %1743 = vmatprep.subr.mxu0 0.0
    %1744 = vmatpush1.xpose.msra.mxu0 0.0
    %1745 = vmatprep.subr.mxu0 0.0
    %1746 = vmatpush1.xpose.msra.mxu0 0.0
    %1747 = vmatprep.subr.mxu0 0.0
    %1748 = vmatpush1.xpose.msra.mxu0 0.0
    %1749 = vmatprep.subr.mxu0 0.0
    %1750 = vmatpush1.xpose.msra.mxu0 0.0
    %1751 = vmatprep.subr.mxu0 0.0
    %1752 = vmatpush1.xpose.msra.mxu0 0.0
    %1753 = vmatprep.subr.mxu0 0.0
    %1754 = vmatpush1.xpose.msra.mxu0 0.0
    %1755 = vmatprep.subr.mxu0 0.0
    %1756 = vmatpush1.xpose.msra.mxu0 0.0
    %1757 = vmatprep.subr.mxu0 0.0
    %1758 = vmatpush1.xpose.msra.mxu0 0.0
    %1759 = vmatprep.subr.mxu0 0.0
    %1760 = vmatpush1.xpose.msra.mxu0 0.0
    %1761 = vmatprep.subr.mxu0 0.0
    %1762 = vmatpush1.xpose.msra.mxu0 0.0
    %1763 = vmatprep.subr.mxu0 0.0
    %1764 = vmatpush1.xpose.msra.mxu0 0.0
    %1765 = vmatprep.subr.mxu0 0.0
    %1766 = vmatpush1.xpose.msra.mxu0 0.0
    %1767 = vmatprep.subr.mxu0 0.0
    %1768 = vmatpush1.xpose.msra.mxu0 0.0
    %1769 = vmatprep.subr.mxu0 0.0
    %1770 = vmatpush1.xpose.msra.mxu0 0.0
    %1771 = vmatprep.subr.mxu0 0.0
    %1772 = vmatpush1.xpose.msra.mxu0 0.0
    %1773 = vmatprep.subr.mxu0 0.0
    %1774 = vmatpush1.xpose.msra.mxu0 0.0
    %1775 = vmatprep.mubr.f32.mxu0 0.0
    %1776 = vmatmul.mubr.f32.gmra.mrb[0].mxu0 %v1707
    %v1777 = vpop.f32.mrb[0].mxu0
    %v1778 = vadd.f32 0.0, %v1777
    %v1779 = vpop.f32.mrb[0].mxu0
    %1780 = vdwg.mxu0
    %v1781 = vmul.f32 %v1778, 0.35355338
    %v1782 = vmul.f32 %v320, %v995
    %1784 = vrot.lane.b32.xlu0 %v1782, 72
    %v1785 = vpop.permute.xlu0 %1784
    %v1787 = vsel %vm331, %v1785, 0.0
    %1788 = vadd.xlane.f32.xlu0 %v1787
    %v1789 = vpop.xlane.xlu0 %1788
    %v1790 = vadd.f32 %v1781, %v328
    %v1791 = vadd.f32 %v1790, %v1789
    %1792 = vxpose.xlu0.b32.start [1/16] %v1789, 128
    %1793 = vxpose.xlu0.b32.cont [2/16] 0.0, 128
    %1794 = vxpose.xlu0.b32.cont [3/16] 0.0, 128
    %1795 = vxpose.xlu0.b32.cont [4/16] 0.0, 128
    %1796 = vxpose.xlu0.b32.cont [5/16] 0.0, 128
    %1797 = vxpose.xlu0.b32.cont [6/16] 0.0, 128
    %1798 = vxpose.xlu0.b32.cont [7/16] 0.0, 128
    %1799 = vxpose.xlu0.b32.cont [8/16] 0.0, 128
    %1800 = vxpose.xlu0.b32.cont [9/16] 0.0, 128
    %1801 = vxpose.xlu0.b32.cont [10/16] 0.0, 128
    %1802 = vxpose.xlu0.b32.cont [11/16] 0.0, 128
    %1803 = vxpose.xlu0.b32.cont [12/16] 0.0, 128
    %1804 = vxpose.xlu0.b32.cont [13/16] 0.0, 128
    %1805 = vxpose.xlu0.b32.cont [14/16] 0.0, 128
    %1806 = vxpose.xlu0.b32.cont [15/16] 0.0, 128
    %1807 = vxpose.xlu0.b32.end [16/16] 0.0, 128
    %v1808 = vpop.trf.xlu0
    %v1809 = vpop.trf.xlu0
    %v1810 = vpop.trf.xlu0
    %v1811 = vpop.trf.xlu0
    %v1812 = vpop.trf.xlu0
    %v1813 = vpop.trf.xlu0
    %v1814 = vpop.trf.xlu0
    %v1815 = vpop.trf.xlu0
    %v1816 = vpop.trf.xlu0
    %v1817 = vpop.trf.xlu0
    %v1818 = vpop.trf.xlu0
    %v1819 = vpop.trf.xlu0
    %v1820 = vpop.trf.xlu0
    %v1821 = vpop.trf.xlu0
    %v1822 = vpop.trf.xlu0
    %v1823 = vpop.trf.xlu0
    %v1824 = vlaneseq
    %v1825 = vshrl.u32 %v1824, 7
    %v1826 = vsub.s32 0, %v1825
    %v1827 = vrot.slane %v1808, %v1826
    %v1828 = vadd.f32 %v1791, %v1827
    %v1829 = vsel %vm92, -10000.0, %v1828
    %v1830 = vsel %vm331, %v1829, -inf
    %1831 = vmax.xlane.f32.xlu0 %v1830
    %v1832 = vpop.xlane.xlu0 %1831
    %v1833 = vsub.f32 %v1829, %v1832
    %v1834 = vmul.f32 %v1833, 1.442695
    %v1835 = vpow.pop %v1834
    %v1836 = vsel %vm331, %v1835, 0.0
    %1837 = vadd.xlane.f32.xlu0 %v1836
    %v1838 = vpop.xlane.xlu0 %1837
    %v1839 = vrcp.pop %v1838
    %v1840 = vmul.f32 %v1835, %v1839
    %1841 = vrot.lane.b32.xlu0 %v320, 72
    %v1842 = vpop.permute.xlu0 %1841
    %v1845 = vsel %vm331, %v1840, 0
    %1847 = vmatprep.subr.mxu0 0.0
    %1848 = vmatpush1.msra.mxu0 %v1842
    %1849 = vmatprep.subr.mxu0 0.0
    %1850 = vmatpush1.msra.mxu0 0.0
    %1851 = vmatprep.subr.mxu0 0.0
    %1852 = vmatpush1.msra.mxu0 0.0
    %1853 = vmatprep.subr.mxu0 0.0
    %1854 = vmatpush1.msra.mxu0 0.0
    %1855 = vmatprep.subr.mxu0 0.0
    %1856 = vmatpush1.msra.mxu0 0.0
    %1857 = vmatprep.subr.mxu0 0.0
    %1858 = vmatpush1.msra.mxu0 0.0
    %1859 = vmatprep.subr.mxu0 0.0
    %1860 = vmatpush1.msra.mxu0 0.0
    %1861 = vmatprep.subr.mxu0 0.0
    %1862 = vmatpush1.msra.mxu0 0.0
    %1863 = vmatprep.subr.mxu0 0.0
    %1864 = vmatpush1.msra.mxu0 0.0
    %1865 = vmatprep.subr.mxu0 0.0
    %1866 = vmatpush1.msra.mxu0 0.0
    %1867 = vmatprep.subr.mxu0 0.0
    %1868 = vmatpush1.msra.mxu0 0.0
    %1869 = vmatprep.subr.mxu0 0.0
    %1870 = vmatpush1.msra.mxu0 0.0
    %1871 = vmatprep.subr.mxu0 0.0
    %1872 = vmatpush1.msra.mxu0 0.0
    %1873 = vmatprep.subr.mxu0 0.0
    %1874 = vmatpush1.msra.mxu0 0.0
    %1875 = vmatprep.subr.mxu0 0.0
    %1876 = vmatpush1.msra.mxu0 0.0
    %1877 = vmatprep.subr.mxu0 0.0
    %1878 = vmatpush1.msra.mxu0 0.0
    %1879 = vmatprep.subr.mxu0 0.0
    %1880 = vmatpush1.msra.mxu0 0.0
    %1881 = vmatprep.subr.mxu0 0.0
    %1882 = vmatpush1.msra.mxu0 0.0
    %1883 = vmatprep.subr.mxu0 0.0
    %1884 = vmatpush1.msra.mxu0 0.0
    %1885 = vmatprep.subr.mxu0 0.0
    %1886 = vmatpush1.msra.mxu0 0.0
    %1887 = vmatprep.subr.mxu0 0.0
    %1888 = vmatpush1.msra.mxu0 0.0
    %1889 = vmatprep.subr.mxu0 0.0
    %1890 = vmatpush1.msra.mxu0 0.0
    %1891 = vmatprep.subr.mxu0 0.0
    %1892 = vmatpush1.msra.mxu0 0.0
    %1893 = vmatprep.subr.mxu0 0.0
    %1894 = vmatpush1.msra.mxu0 0.0
    %1895 = vmatprep.subr.mxu0 0.0
    %1896 = vmatpush1.msra.mxu0 0.0
    %1897 = vmatprep.subr.mxu0 0.0
    %1898 = vmatpush1.msra.mxu0 0.0
    %1899 = vmatprep.subr.mxu0 0.0
    %1900 = vmatpush1.msra.mxu0 0.0
    %1901 = vmatprep.subr.mxu0 0.0
    %1902 = vmatpush1.msra.mxu0 0.0
    %1903 = vmatprep.subr.mxu0 0.0
    %1904 = vmatpush1.msra.mxu0 0.0
    %1905 = vmatprep.subr.mxu0 0.0
    %1906 = vmatpush1.msra.mxu0 0.0
    %1907 = vmatprep.subr.mxu0 0.0
    %1908 = vmatpush1.msra.mxu0 0.0
    %1909 = vmatprep.subr.mxu0 0.0
    %1910 = vmatpush1.msra.mxu0 0.0
    %1911 = vmatprep.mubr.f32.mxu0 0.0
    %1912 = vmatmul.mubr.f32.gmra.mrb[0].mxu0 %v1845
    %v1913 = vpop.f32.mrb[0].mxu0
    %v1914 = vadd.f32 0.0, %v1913
    %v1915 = vpop.f32.mrb[0].mxu0
    %1916 = vdwg.mxu0
    %1918 = vrot.lane.b32.xlu0 %v1478, 8
    %v1919 = vpop.permute.xlu0 %1918
    %1922 = vrot.lane.b32.xlu0 %v1696, 16
    %v1923 = vpop.permute.xlu0 %1922
    %1926 = vrot.lane.b32.xlu0 %v1914, 24
    %v1927 = vpop.permute.xlu0 %1926
    %v1929 = vsel %vm331, %v1311, %v1919
    %v1930 = vsel %vm1145, %v1929, %v1923
    %v1931 = vsel %vm1147, %v1930, %v1927
    %v1932 = vld [vmem:[%s8] sm:$0xff]
    %v1933 = vld [vmem:[%s8 + $0x8] sm:$0xff]
    %v1934 = vld [vmem:[%s8 + $0x10] sm:$0xff]
    %v1935 = vld [vmem:[%s8 + $0x18] sm:$0xff]
    %v1936 = vld [vmem:[%s9] sm:$0x1]
    %v1938 = vlaneseq
    %v1939 = vshrl.u32 %v1938, 7
    %v1940 = vsub.s32 0, %v1939
    %v1941 = vrot.slane %v1936, %v1940
    %v1944 = vsel %vm95, %v1148, 0
    %v1947 = vsel %vm95, %v1931, 0
    %1949 = vmatprep.subr.mxu0 0.0
    %1950 = vmatpush1.msra.mxu0 %v1932
    %1951 = vmatprep.subr.mxu0 0.0
    %1952 = vmatpush1.msra.mxu0 %v1933
    %1953 = vmatprep.subr.mxu0 0.0
    %1954 = vmatpush1.msra.mxu0 %v1934
    %1955 = vmatprep.subr.mxu0 0.0
    %1956 = vmatpush1.msra.mxu0 %v1935
    %1957 = vmatprep.subr.mxu0 0.0
    %1958 = vmatpush1.msra.mxu0 0.0
    %1959 = vmatprep.subr.mxu0 0.0
    %1960 = vmatpush1.msra.mxu0 0.0
    %1961 = vmatprep.subr.mxu0 0.0
    %1962 = vmatpush1.msra.mxu0 0.0
    %1963 = vmatprep.subr.mxu0 0.0
    %1964 = vmatpush1.msra.mxu0 0.0
    %1965 = vmatprep.subr.mxu0 0.0
    %1966 = vmatpush1.msra.mxu0 0.0
    %1967 = vmatprep.subr.mxu0 0.0
    %1968 = vmatpush1.msra.mxu0 0.0
    %1969 = vmatprep.subr.mxu0 0.0
    %1970 = vmatpush1.msra.mxu0 0.0
    %1971 = vmatprep.subr.mxu0 0.0
    %1972 = vmatpush1.msra.mxu0 0.0
    %1973 = vmatprep.subr.mxu0 0.0
    %1974 = vmatpush1.msra.mxu0 0.0
    %1975 = vmatprep.subr.mxu0 0.0
    %1976 = vmatpush1.msra.mxu0 0.0
    %1977 = vmatprep.subr.mxu0 0.0
    %1978 = vmatpush1.msra.mxu0 0.0
    %1979 = vmatprep.subr.mxu0 0.0
    %1980 = vmatpush1.msra.mxu0 0.0
    %1981 = vmatprep.subr.mxu0 0.0
    %1982 = vmatpush1.msra.mxu0 0.0
    %1983 = vmatprep.subr.mxu0 0.0
    %1984 = vmatpush1.msra.mxu0 0.0
    %1985 = vmatprep.subr.mxu0 0.0
    %1986 = vmatpush1.msra.mxu0 0.0
    %1987 = vmatprep.subr.mxu0 0.0
    %1988 = vmatpush1.msra.mxu0 0.0
    %1989 = vmatprep.subr.mxu0 0.0
    %1990 = vmatpush1.msra.mxu0 0.0
    %1991 = vmatprep.subr.mxu0 0.0
    %1992 = vmatpush1.msra.mxu0 0.0
    %1993 = vmatprep.subr.mxu0 0.0
    %1994 = vmatpush1.msra.mxu0 0.0
    %1995 = vmatprep.subr.mxu0 0.0
    %1996 = vmatpush1.msra.mxu0 0.0
    %1997 = vmatprep.subr.mxu0 0.0
    %1998 = vmatpush1.msra.mxu0 0.0
    %1999 = vmatprep.subr.mxu0 0.0
    %2000 = vmatpush1.msra.mxu0 0.0
    %2001 = vmatprep.subr.mxu0 0.0
    %2002 = vmatpush1.msra.mxu0 0.0
    %2003 = vmatprep.subr.mxu0 0.0
    %2004 = vmatpush1.msra.mxu0 0.0
    %2005 = vmatprep.subr.mxu0 0.0
    %2006 = vmatpush1.msra.mxu0 0.0
    %2007 = vmatprep.subr.mxu0 0.0
    %2008 = vmatpush1.msra.mxu0 0.0
    %2009 = vmatprep.subr.mxu0 0.0
    %2010 = vmatpush1.msra.mxu0 0.0
    %2011 = vmatprep.subr.mxu0 0.0
    %2012 = vmatpush1.msra.mxu0 0.0
    %2013 = vmatprep.mubr.f32.mxu0 0.0
    %2014 = vmatmul.mubr.f32.gmra.mrb[0].mxu0 %v1944
    %v2015 = vpop.f32.mrb[0].mxu0
    %v2016 = vadd.f32 %v1941, %v2015
    %v2017 = vpop.f32.mrb[0].mxu0
    %2018 = vmatprep.mubr.f32.mxu0 0.0
    %2019 = vmatmul.mubr.f32.gmra.mrb[0].mxu0 %v1947
    %v2020 = vpop.f32.mrb[0].mxu0
    %v2021 = vadd.f32 %v1941, %v2020
    %v2022 = vpop.f32.mrb[0].mxu0
    %2023 = vdwg.mxu0
    %v2024 = vadd.f32 %v137, %v2016
    %v2025 = vadd.f32 %v138, %v2021
    %v2026 = vld [vmem:[%s10] sm:$0x1]
    %v2027 = vld [vmem:[%s11] sm:$0x1]
    %v2028 = vsel %vm95, %v2024, 0.0
    %2029 = vadd.xlane.f32.xlu0 %v2028
    %v2030 = vpop.xlane.xlu0 %2029
    %v2031 = vsel %vm95, %v2025, 0.0
    %2032 = vadd.xlane.f32.xlu0 %v2031
    %v2033 = vpop.xlane.xlu0 %2032
    %v2034 = vmul.f32 %v2030, %v102
    %v2035 = vmul.f32 %v2033, %v102
    %v2036 = vsub.f32 %v2024, %v2034
    %v2037 = vsub.f32 %v2025, %v2035
    %v2038 = vmul.f32 %v2036, %v2036
    %v2039 = vmul.f32 %v2037, %v2037
    %v2040 = vsel %vm95, %v2038, 0.0
    %2041 = vadd.xlane.f32.xlu0 %v2040
    %v2042 = vpop.xlane.xlu0 %2041
    %v2043 = vsel %vm95, %v2039, 0.0
    %2044 = vadd.xlane.f32.xlu0 %v2043
    %v2045 = vpop.xlane.xlu0 %2044
    %v2046 = vmul.f32 %v2042, %v102
    %v2047 = vmul.f32 %v2045, %v102
    %v2048 = vadd.f32 %v2046, 1e-08
    %v2049 = vadd.f32 %v2047, 1e-08
    %v2050 = vrsqrt.pop %v2048
    %v2051 = vrsqrt.pop %v2049
    %v2052 = vmul.f32 %v2036, %v2050
    %v2053 = vmul.f32 %v2037, %v2051
    %v2055 = vlaneseq
    %v2056 = vshrl.u32 %v2055, 7
    %v2057 = vsub.s32 0, %v2056
    %v2058 = vrot.slane %v2026, %v2057
    %v2060 = vmul.f32 %v2052, %v2058
    %v2061 = vmul.f32 %v2053, %v2058
    %v2063 = vlaneseq
    %v2064 = vshrl.u32 %v2063, 7
    %v2065 = vsub.s32 0, %v2064
    %v2066 = vrot.slane %v2027, %v2065
    %v2068 = vadd.f32 %v2060, %v2066
    %v2069 = vadd.f32 %v2061, %v2066
    %v2070 = vld [vmem:[%s12] sm:$0xff]
    %v2071 = vld [vmem:[%s12 + $0x8] sm:$0xff]
    %v2072 = vld [vmem:[%s12 + $0x10] sm:$0xff]
    %v2073 = vld [vmem:[%s12 + $0x18] sm:$0xff]
    %v2074 = vld [vmem:[%s13] sm:$0x1]
    %v2076 = vlaneseq
    %v2077 = vshrl.u32 %v2076, 7
    %v2078 = vsub.s32 0, %v2077
    %v2079 = vrot.slane %v2074, %v2078
    %v2082 = vsel %vm95, %v2068, 0
    %v2085 = vsel %vm95, %v2069, 0
    %2087 = vmatprep.subr.mxu0 0.0
    %2088 = vmatpush1.msra.mxu0 %v2070
    %2089 = vmatprep.subr.mxu0 0.0
    %2090 = vmatpush1.msra.mxu0 %v2071
    %2091 = vmatprep.subr.mxu0 0.0
    %2092 = vmatpush1.msra.mxu0 %v2072
    %2093 = vmatprep.subr.mxu0 0.0
    %2094 = vmatpush1.msra.mxu0 %v2073
    %2095 = vmatprep.subr.mxu0 0.0
    %2096 = vmatpush1.msra.mxu0 0.0
    %2097 = vmatprep.subr.mxu0 0.0
    %2098 = vmatpush1.msra.mxu0 0.0
    %2099 = vmatprep.subr.mxu0 0.0
    %2100 = vmatpush1.msra.mxu0 0.0
    %2101 = vmatprep.subr.mxu0 0.0
    %2102 = vmatpush1.msra.mxu0 0.0
    %2103 = vmatprep.subr.mxu0 0.0
    %2104 = vmatpush1.msra.mxu0 0.0
    %2105 = vmatprep.subr.mxu0 0.0
    %2106 = vmatpush1.msra.mxu0 0.0
    %2107 = vmatprep.subr.mxu0 0.0
    %2108 = vmatpush1.msra.mxu0 0.0
    %2109 = vmatprep.subr.mxu0 0.0
    %2110 = vmatpush1.msra.mxu0 0.0
    %2111 = vmatprep.subr.mxu0 0.0
    %2112 = vmatpush1.msra.mxu0 0.0
    %2113 = vmatprep.subr.mxu0 0.0
    %2114 = vmatpush1.msra.mxu0 0.0
    %2115 = vmatprep.subr.mxu0 0.0
    %2116 = vmatpush1.msra.mxu0 0.0
    %2117 = vmatprep.subr.mxu0 0.0
    %2118 = vmatpush1.msra.mxu0 0.0
    %2119 = vmatprep.subr.mxu0 0.0
    %2120 = vmatpush1.msra.mxu0 0.0
    %2121 = vmatprep.subr.mxu0 0.0
    %2122 = vmatpush1.msra.mxu0 0.0
    %2123 = vmatprep.subr.mxu0 0.0
    %2124 = vmatpush1.msra.mxu0 0.0
    %2125 = vmatprep.subr.mxu0 0.0
    %2126 = vmatpush1.msra.mxu0 0.0
    %2127 = vmatprep.subr.mxu0 0.0
    %2128 = vmatpush1.msra.mxu0 0.0
    %2129 = vmatprep.subr.mxu0 0.0
    %2130 = vmatpush1.msra.mxu0 0.0
    %2131 = vmatprep.subr.mxu0 0.0
    %2132 = vmatpush1.msra.mxu0 0.0
    %2133 = vmatprep.subr.mxu0 0.0
    %2134 = vmatpush1.msra.mxu0 0.0
    %2135 = vmatprep.subr.mxu0 0.0
    %2136 = vmatpush1.msra.mxu0 0.0
    %2137 = vmatprep.subr.mxu0 0.0
    %2138 = vmatpush1.msra.mxu0 0.0
    %2139 = vmatprep.subr.mxu0 0.0
    %2140 = vmatpush1.msra.mxu0 0.0
    %2141 = vmatprep.subr.mxu0 0.0
    %2142 = vmatpush1.msra.mxu0 0.0
    %2143 = vmatprep.subr.mxu0 0.0
    %2144 = vmatpush1.msra.mxu0 0.0
    %2145 = vmatprep.subr.mxu0 0.0
    %2146 = vmatpush1.msra.mxu0 0.0
    %2147 = vmatprep.subr.mxu0 0.0
    %2148 = vmatpush1.msra.mxu0 0.0
    %2149 = vmatprep.subr.mxu0 0.0
    %2150 = vmatpush1.msra.mxu0 0.0
    %2151 = vmatprep.mubr.f32.mxu0 0.0
    %2152 = vmatmul.mubr.f32.gmra.mrb[0].mxu0 %v2082
    %v2153 = vpop.f32.mrb[0].mxu0
    %v2154 = vadd.f32 %v2079, %v2153
    %v2155 = vpop.f32.mrb[0].mxu0
    %2156 = vmatprep.mubr.f32.mxu0 0.0
    %2157 = vmatmul.mubr.f32.gmra.mrb[0].mxu0 %v2085
    %v2158 = vpop.f32.mrb[0].mxu0
    %v2159 = vadd.f32 %v2079, %v2158
    %v2160 = vpop.f32.mrb[0].mxu0
    %2161 = vdwg.mxu0
    %v2162 = vmax.f32 %v2154, 0.0
    %v2163 = vmax.f32 %v2159, 0.0
    %v2164 = vld [vmem:[%s14] sm:$0xff]
    %v2165 = vld [vmem:[%s14 + $0x8] sm:$0xff]
    %v2166 = vld [vmem:[%s14 + $0x10] sm:$0xff]
    %v2167 = vld [vmem:[%s14 + $0x18] sm:$0xff]
    %v2168 = vld [vmem:[%s15] sm:$0x1]
    %v2170 = vlaneseq
    %v2171 = vshrl.u32 %v2170, 7
    %v2172 = vsub.s32 0, %v2171
    %v2173 = vrot.slane %v2168, %v2172
    %v2176 = vsel %vm95, %v2162, 0
    %v2179 = vsel %vm95, %v2163, 0
    %2181 = vmatprep.subr.mxu0 0.0
    %2182 = vmatpush1.msra.mxu0 %v2164
    %2183 = vmatprep.subr.mxu0 0.0
    %2184 = vmatpush1.msra.mxu0 %v2165
    %2185 = vmatprep.subr.mxu0 0.0
    %2186 = vmatpush1.msra.mxu0 %v2166
    %2187 = vmatprep.subr.mxu0 0.0
    %2188 = vmatpush1.msra.mxu0 %v2167
    %2189 = vmatprep.subr.mxu0 0.0
    %2190 = vmatpush1.msra.mxu0 0.0
    %2191 = vmatprep.subr.mxu0 0.0
    %2192 = vmatpush1.msra.mxu0 0.0
    %2193 = vmatprep.subr.mxu0 0.0
    %2194 = vmatpush1.msra.mxu0 0.0
    %2195 = vmatprep.subr.mxu0 0.0
    %2196 = vmatpush1.msra.mxu0 0.0
    %2197 = vmatprep.subr.mxu0 0.0
    %2198 = vmatpush1.msra.mxu0 0.0
    %2199 = vmatprep.subr.mxu0 0.0
    %2200 = vmatpush1.msra.mxu0 0.0
    %2201 = vmatprep.subr.mxu0 0.0
    %2202 = vmatpush1.msra.mxu0 0.0
    %2203 = vmatprep.subr.mxu0 0.0
    %2204 = vmatpush1.msra.mxu0 0.0
    %2205 = vmatprep.subr.mxu0 0.0
    %2206 = vmatpush1.msra.mxu0 0.0
    %2207 = vmatprep.subr.mxu0 0.0
    %2208 = vmatpush1.msra.mxu0 0.0
    %2209 = vmatprep.subr.mxu0 0.0
    %2210 = vmatpush1.msra.mxu0 0.0
    %2211 = vmatprep.subr.mxu0 0.0
    %2212 = vmatpush1.msra.mxu0 0.0
    %2213 = vmatprep.subr.mxu0 0.0
    %2214 = vmatpush1.msra.mxu0 0.0
    %2215 = vmatprep.subr.mxu0 0.0
    %2216 = vmatpush1.msra.mxu0 0.0
    %2217 = vmatprep.subr.mxu0 0.0
    %2218 = vmatpush1.msra.mxu0 0.0
    %2219 = vmatprep.subr.mxu0 0.0
    %2220 = vmatpush1.msra.mxu0 0.0
    %2221 = vmatprep.subr.mxu0 0.0
    %2222 = vmatpush1.msra.mxu0 0.0
    %2223 = vmatprep.subr.mxu0 0.0
    %2224 = vmatpush1.msra.mxu0 0.0
    %2225 = vmatprep.subr.mxu0 0.0
    %2226 = vmatpush1.msra.mxu0 0.0
    %2227 = vmatprep.subr.mxu0 0.0
    %2228 = vmatpush1.msra.mxu0 0.0
    %2229 = vmatprep.subr.mxu0 0.0
    %2230 = vmatpush1.msra.mxu0 0.0
    %2231 = vmatprep.subr.mxu0 0.0
    %2232 = vmatpush1.msra.mxu0 0.0
    %2233 = vmatprep.subr.mxu0 0.0
    %2234 = vmatpush1.msra.mxu0 0.0
    %2235 = vmatprep.subr.mxu0 0.0
    %2236 = vmatpush1.msra.mxu0 0.0
    %2237 = vmatprep.subr.mxu0 0.0
    %2238 = vmatpush1.msra.mxu0 0.0
    %2239 = vmatprep.subr.mxu0 0.0
    %2240 = vmatpush1.msra.mxu0 0.0
    %2241 = vmatprep.subr.mxu0 0.0
    %2242 = vmatpush1.msra.mxu0 0.0
    %2243 = vmatprep.subr.mxu0 0.0
    %2244 = vmatpush1.msra.mxu0 0.0
    %2245 = vmatprep.mubr.f32.mxu0 0.0
    %2246 = vmatmul.mubr.f32.gmra.mrb[0].mxu0 %v2176
    %v2247 = vpop.f32.mrb[0].mxu0
    %v2248 = vadd.f32 %v2173, %v2247
    %v2249 = vpop.f32.mrb[0].mxu0
    %2250 = vmatprep.mubr.f32.mxu0 0.0
    %2251 = vmatmul.mubr.f32.gmra.mrb[0].mxu0 %v2179
    %v2252 = vpop.f32.mrb[0].mxu0
    %v2253 = vadd.f32 %v2173, %v2252
    %v2254 = vpop.f32.mrb[0].mxu0
    %2255 = vdwg.mxu0
    %v2256 = vadd.f32 %v2068, %v2248
    %v2257 = vadd.f32 %v2069, %v2253
    %v2258 = vmul.f32 %v2256, %v79
    %v2259 = vmul.f32 %v2257, %v84
    %s2260 = scalar_lea.vmem %s2, 1
    %v2261 = vld [vmem:[%s2260] sm:$0x1]
    %s2262 = scalar_lea.vmem %s3, 1
    %v2263 = vld [vmem:[%s2262] sm:$0x1]
    %v2264 = vsel %vm95, %v2258, 0.0
    %2265 = vadd.xlane.f32.xlu0 %v2264
    %v2266 = vpop.xlane.xlu0 %2265
    %v2267 = vsel %vm95, %v2259, 0.0
    %2268 = vadd.xlane.f32.xlu0 %v2267
    %v2269 = vpop.xlane.xlu0 %2268
    %v2270 = vmul.f32 %v2266, %v102
    %v2271 = vmul.f32 %v2269, %v102
    %v2272 = vsub.f32 %v2258, %v2270
    %v2273 = vsub.f32 %v2259, %v2271
    %v2274 = vmul.f32 %v2272, %v2272
    %v2275 = vmul.f32 %v2273, %v2273
    %v2276 = vsel %vm95, %v2274, 0.0
    %2277 = vadd.xlane.f32.xlu0 %v2276
    %v2278 = vpop.xlane.xlu0 %2277
    %v2279 = vsel %vm95, %v2275, 0.0
    %2280 = vadd.xlane.f32.xlu0 %v2279
    %v2281 = vpop.xlane.xlu0 %2280
    %v2282 = vmul.f32 %v2278, %v102
    %v2283 = vmul.f32 %v2281, %v102
    %v2284 = vadd.f32 %v2282, 1e-08
    %v2285 = vadd.f32 %v2283, 1e-08
    %v2286 = vrsqrt.pop %v2284
    %v2287 = vrsqrt.pop %v2285
    %v2288 = vmul.f32 %v2272, %v2286
    %v2289 = vmul.f32 %v2273, %v2287
    %v2291 = vlaneseq
    %v2292 = vshrl.u32 %v2291, 7
    %v2293 = vsub.s32 0, %v2292
    %v2294 = vrot.slane %v2261, %v2293
    %v2296 = vmul.f32 %v2288, %v2294
    %v2297 = vmul.f32 %v2289, %v2294
    %v2299 = vlaneseq
    %v2300 = vshrl.u32 %v2299, 7
    %v2301 = vsub.s32 0, %v2300
    %v2302 = vrot.slane %v2263, %v2301
    %v2304 = vadd.f32 %v2296, %v2302
    %v2305 = vadd.f32 %v2297, %v2302
    %s2306 = scalar_lea.vmem %s4, 32
    %v2307 = vld [vmem:[%s2306] sm:$0xff]
    %v2308 = vld [vmem:[%s2306 + $0x8] sm:$0xff]
    %v2309 = vld [vmem:[%s2306 + $0x10] sm:$0xff]
    %v2310 = vld [vmem:[%s2306 + $0x18] sm:$0xff]
    %s2311 = scalar_lea.vmem %s5, 1
    %v2312 = vld [vmem:[%s2311] sm:$0x1]
    %v2314 = vlaneseq
    %v2315 = vshrl.u32 %v2314, 7
    %v2316 = vsub.s32 0, %v2315
    %v2317 = vrot.slane %v2312, %v2316
    %v2320 = vsel %vm95, %v2304, 0
    %v2323 = vsel %vm95, %v2305, 0
    %2325 = vmatprep.subr.mxu0 0.0
    %2326 = vmatpush1.msra.mxu0 %v2307
    %2327 = vmatprep.subr.mxu0 0.0
    %2328 = vmatpush1.msra.mxu0 %v2308
    %2329 = vmatprep.subr.mxu0 0.0
    %2330 = vmatpush1.msra.mxu0 %v2309
    %2331 = vmatprep.subr.mxu0 0.0
    %2332 = vmatpush1.msra.mxu0 %v2310
    %2333 = vmatprep.subr.mxu0 0.0
    %2334 = vmatpush1.msra.mxu0 0.0
    %2335 = vmatprep.subr.mxu0 0.0
    %2336 = vmatpush1.msra.mxu0 0.0
    %2337 = vmatprep.subr.mxu0 0.0
    %2338 = vmatpush1.msra.mxu0 0.0
    %2339 = vmatprep.subr.mxu0 0.0
    %2340 = vmatpush1.msra.mxu0 0.0
    %2341 = vmatprep.subr.mxu0 0.0
    %2342 = vmatpush1.msra.mxu0 0.0
    %2343 = vmatprep.subr.mxu0 0.0
    %2344 = vmatpush1.msra.mxu0 0.0
    %2345 = vmatprep.subr.mxu0 0.0
    %2346 = vmatpush1.msra.mxu0 0.0
    %2347 = vmatprep.subr.mxu0 0.0
    %2348 = vmatpush1.msra.mxu0 0.0
    %2349 = vmatprep.subr.mxu0 0.0
    %2350 = vmatpush1.msra.mxu0 0.0
    %2351 = vmatprep.subr.mxu0 0.0
    %2352 = vmatpush1.msra.mxu0 0.0
    %2353 = vmatprep.subr.mxu0 0.0
    %2354 = vmatpush1.msra.mxu0 0.0
    %2355 = vmatprep.subr.mxu0 0.0
    %2356 = vmatpush1.msra.mxu0 0.0
    %2357 = vmatprep.subr.mxu0 0.0
    %2358 = vmatpush1.msra.mxu0 0.0
    %2359 = vmatprep.subr.mxu0 0.0
    %2360 = vmatpush1.msra.mxu0 0.0
    %2361 = vmatprep.subr.mxu0 0.0
    %2362 = vmatpush1.msra.mxu0 0.0
    %2363 = vmatprep.subr.mxu0 0.0
    %2364 = vmatpush1.msra.mxu0 0.0
    %2365 = vmatprep.subr.mxu0 0.0
    %2366 = vmatpush1.msra.mxu0 0.0
    %2367 = vmatprep.subr.mxu0 0.0
    %2368 = vmatpush1.msra.mxu0 0.0
    %2369 = vmatprep.subr.mxu0 0.0
    %2370 = vmatpush1.msra.mxu0 0.0
    %2371 = vmatprep.subr.mxu0 0.0
    %2372 = vmatpush1.msra.mxu0 0.0
    %2373 = vmatprep.subr.mxu0 0.0
    %2374 = vmatpush1.msra.mxu0 0.0
    %2375 = vmatprep.subr.mxu0 0.0
    %2376 = vmatpush1.msra.mxu0 0.0
    %2377 = vmatprep.subr.mxu0 0.0
    %2378 = vmatpush1.msra.mxu0 0.0
    %2379 = vmatprep.subr.mxu0 0.0
    %2380 = vmatpush1.msra.mxu0 0.0
    %2381 = vmatprep.subr.mxu0 0.0
    %2382 = vmatpush1.msra.mxu0 0.0
    %2383 = vmatprep.subr.mxu0 0.0
    %2384 = vmatpush1.msra.mxu0 0.0
    %2385 = vmatprep.subr.mxu0 0.0
    %2386 = vmatpush1.msra.mxu0 0.0
    %2387 = vmatprep.subr.mxu0 0.0
    %2388 = vmatpush1.msra.mxu0 0.0
    %2389 = vmatprep.mubr.f32.mxu0 0.0
    %2390 = vmatmul.mubr.f32.gmra.mrb[0].mxu0 %v2320
    %v2391 = vpop.f32.mrb[0].mxu0
    %v2392 = vadd.f32 %v2317, %v2391
    %v2393 = vpop.f32.mrb[0].mxu0
    %2394 = vmatprep.mubr.f32.mxu0 0.0
    %2395 = vmatmul.mubr.f32.gmra.mrb[0].mxu0 %v2323
    %v2396 = vpop.f32.mrb[0].mxu0
    %v2397 = vadd.f32 %v2317, %v2396
    %v2398 = vpop.f32.mrb[0].mxu0
    %2399 = vdwg.mxu0
    %s2400 = scalar_lea.vmem %s6, 32
    %v2401 = vld [vmem:[%s2400] sm:$0xff]
    %v2402 = vld [vmem:[%s2400 + $0x8] sm:$0xff]
    %v2403 = vld [vmem:[%s2400 + $0x10] sm:$0xff]
    %v2404 = vld [vmem:[%s2400 + $0x18] sm:$0xff]
    %s2405 = scalar_lea.vmem %s7, 1
    %v2406 = vld [vmem:[%s2405] sm:$0x1]
    %v2408 = vlaneseq
    %v2409 = vshrl.u32 %v2408, 7
    %v2410 = vsub.s32 0, %v2409
    %v2411 = vrot.slane %v2406, %v2410
    %v2414 = vsel %vm95, %v2258, 0
    %v2417 = vsel %vm95, %v2259, 0
    %2419 = vmatprep.subr.mxu0 0.0
    %2420 = vmatpush1.msra.mxu0 %v2401
    %2421 = vmatprep.subr.mxu0 0.0
    %2422 = vmatpush1.msra.mxu0 %v2402
    %2423 = vmatprep.subr.mxu0 0.0
    %2424 = vmatpush1.msra.mxu0 %v2403
    %2425 = vmatprep.subr.mxu0 0.0
    %2426 = vmatpush1.msra.mxu0 %v2404
    %2427 = vmatprep.subr.mxu0 0.0
    %2428 = vmatpush1.msra.mxu0 0.0
    %2429 = vmatprep.subr.mxu0 0.0
    %2430 = vmatpush1.msra.mxu0 0.0
    %2431 = vmatprep.subr.mxu0 0.0
    %2432 = vmatpush1.msra.mxu0 0.0
    %2433 = vmatprep.subr.mxu0 0.0
    %2434 = vmatpush1.msra.mxu0 0.0
    %2435 = vmatprep.subr.mxu0 0.0
    %2436 = vmatpush1.msra.mxu0 0.0
    %2437 = vmatprep.subr.mxu0 0.0
    %2438 = vmatpush1.msra.mxu0 0.0
    %2439 = vmatprep.subr.mxu0 0.0
    %2440 = vmatpush1.msra.mxu0 0.0
    %2441 = vmatprep.subr.mxu0 0.0
    %2442 = vmatpush1.msra.mxu0 0.0
    %2443 = vmatprep.subr.mxu0 0.0
    %2444 = vmatpush1.msra.mxu0 0.0
    %2445 = vmatprep.subr.mxu0 0.0
    %2446 = vmatpush1.msra.mxu0 0.0
    %2447 = vmatprep.subr.mxu0 0.0
    %2448 = vmatpush1.msra.mxu0 0.0
    %2449 = vmatprep.subr.mxu0 0.0
    %2450 = vmatpush1.msra.mxu0 0.0
    %2451 = vmatprep.subr.mxu0 0.0
    %2452 = vmatpush1.msra.mxu0 0.0
    %2453 = vmatprep.subr.mxu0 0.0
    %2454 = vmatpush1.msra.mxu0 0.0
    %2455 = vmatprep.subr.mxu0 0.0
    %2456 = vmatpush1.msra.mxu0 0.0
    %2457 = vmatprep.subr.mxu0 0.0
    %2458 = vmatpush1.msra.mxu0 0.0
    %2459 = vmatprep.subr.mxu0 0.0
    %2460 = vmatpush1.msra.mxu0 0.0
    %2461 = vmatprep.subr.mxu0 0.0
    %2462 = vmatpush1.msra.mxu0 0.0
    %2463 = vmatprep.subr.mxu0 0.0
    %2464 = vmatpush1.msra.mxu0 0.0
    %2465 = vmatprep.subr.mxu0 0.0
    %2466 = vmatpush1.msra.mxu0 0.0
    %2467 = vmatprep.subr.mxu0 0.0
    %2468 = vmatpush1.msra.mxu0 0.0
    %2469 = vmatprep.subr.mxu0 0.0
    %2470 = vmatpush1.msra.mxu0 0.0
    %2471 = vmatprep.subr.mxu0 0.0
    %2472 = vmatpush1.msra.mxu0 0.0
    %2473 = vmatprep.subr.mxu0 0.0
    %2474 = vmatpush1.msra.mxu0 0.0
    %2475 = vmatprep.subr.mxu0 0.0
    %2476 = vmatpush1.msra.mxu0 0.0
    %2477 = vmatprep.subr.mxu0 0.0
    %2478 = vmatpush1.msra.mxu0 0.0
    %2479 = vmatprep.subr.mxu0 0.0
    %2480 = vmatpush1.msra.mxu0 0.0
    %2481 = vmatprep.subr.mxu0 0.0
    %2482 = vmatpush1.msra.mxu0 0.0
    %2483 = vmatprep.mubr.f32.mxu0 0.0
    %2484 = vmatmul.mubr.f32.gmra.mrb[0].mxu0 %v2414
    %v2485 = vpop.f32.mrb[0].mxu0
    %v2486 = vadd.f32 %v2411, %v2485
    %v2487 = vpop.f32.mrb[0].mxu0
    %2488 = vmatprep.mubr.f32.mxu0 0.0
    %2489 = vmatmul.mubr.f32.gmra.mrb[0].mxu0 %v2417
    %v2490 = vpop.f32.mrb[0].mxu0
    %v2491 = vadd.f32 %v2411, %v2490
    %v2492 = vpop.f32.mrb[0].mxu0
    %2493 = vdwg.mxu0
    %s2494 = scalar_lea.vmem %s16, 16
    %v2495 = vld [vmem:[%s2494] sm:$0xff]
    %v2496 = vld [vmem:[%s2494 + $0x8] sm:$0xff]
    %s2497 = scalar_lea.vmem %s17, 16
    %v2498 = vld [vmem:[%s2497] sm:$0xff]
    %v2499 = vld [vmem:[%s2497 + $0x8] sm:$0xff]
    %s2500 = scalar_lea.vmem %s18, 16
    %v2501 = vld [vmem:[%s2500] sm:$0xff]
    %v2502 = vld [vmem:[%s2500 + $0x8] sm:$0xff]
    %s2503 = scalar_lea.vmem %s19, 2
    %v2504 = vld [vmem:[%s2503] sm:$0x1]
    %v2505 = vld [vmem:[%s2503 + $0x1] sm:$0x1]
    %v2507 = vsel %vm331, %v2392, 0
    %v2510 = vsel %vm331, %v2486, 0
    %2512 = vmatprep.subr.mxu0 0.0
    %2513 = vmatpush1.xpose.msra.mxu0 %v2510
    %2514 = vmatprep.subr.mxu0 0.0
    %2515 = vmatpush1.xpose.msra.mxu0 0.0
    %2516 = vmatprep.subr.mxu0 0.0
    %2517 = vmatpush1.xpose.msra.mxu0 0.0
    %2518 = vmatprep.subr.mxu0 0.0
    %2519 = vmatpush1.xpose.msra.mxu0 0.0
    %2520 = vmatprep.subr.mxu0 0.0
    %2521 = vmatpush1.xpose.msra.mxu0 0.0
    %2522 = vmatprep.subr.mxu0 0.0
    %2523 = vmatpush1.xpose.msra.mxu0 0.0
    %2524 = vmatprep.subr.mxu0 0.0
    %2525 = vmatpush1.xpose.msra.mxu0 0.0
    %2526 = vmatprep.subr.mxu0 0.0
    %2527 = vmatpush1.xpose.msra.mxu0 0.0
    %2528 = vmatprep.subr.mxu0 0.0
    %2529 = vmatpush1.xpose.msra.mxu0 0.0
    %2530 = vmatprep.subr.mxu0 0.0
    %2531 = vmatpush1.xpose.msra.mxu0 0.0
    %2532 = vmatprep.subr.mxu0 0.0
    %2533 = vmatpush1.xpose.msra.mxu0 0.0
    %2534 = vmatprep.subr.mxu0 0.0
    %2535 = vmatpush1.xpose.msra.mxu0 0.0
    %2536 = vmatprep.subr.mxu0 0.0
    %2537 = vmatpush1.xpose.msra.mxu0 0.0
    %2538 = vmatprep.subr.mxu0 0.0
    %2539 = vmatpush1.xpose.msra.mxu0 0.0
    %2540 = vmatprep.subr.mxu0 0.0
    %2541 = vmatpush1.xpose.msra.mxu0 0.0
    %2542 = vmatprep.subr.mxu0 0.0
    %2543 = vmatpush1.xpose.msra.mxu0 0.0
    %2544 = vmatprep.subr.mxu0 0.0
    %2545 = vmatpush1.xpose.msra.mxu0 0.0
    %2546 = vmatprep.subr.mxu0 0.0
    %2547 = vmatpush1.xpose.msra.mxu0 0.0
    %2548 = vmatprep.subr.mxu0 0.0
    %2549 = vmatpush1.xpose.msra.mxu0 0.0
    %2550 = vmatprep.subr.mxu0 0.0
    %2551 = vmatpush1.xpose.msra.mxu0 0.0
    %2552 = vmatprep.subr.mxu0 0.0
    %2553 = vmatpush1.xpose.msra.mxu0 0.0
    %2554 = vmatprep.subr.mxu0 0.0
    %2555 = vmatpush1.xpose.msra.mxu0 0.0
    %2556 = vmatprep.subr.mxu0 0.0
    %2557 = vmatpush1.xpose.msra.mxu0 0.0
    %2558 = vmatprep.subr.mxu0 0.0
    %2559 = vmatpush1.xpose.msra.mxu0 0.0
    %2560 = vmatprep.subr.mxu0 0.0
    %2561 = vmatpush1.xpose.msra.mxu0 0.0
    %2562 = vmatprep.subr.mxu0 0.0
    %2563 = vmatpush1.xpose.msra.mxu0 0.0
    %2564 = vmatprep.subr.mxu0 0.0
    %2565 = vmatpush1.xpose.msra.mxu0 0.0
    %2566 = vmatprep.subr.mxu0 0.0
    %2567 = vmatpush1.xpose.msra.mxu0 0.0
    %2568 = vmatprep.subr.mxu0 0.0
    %2569 = vmatpush1.xpose.msra.mxu0 0.0
    %2570 = vmatprep.subr.mxu0 0.0
    %2571 = vmatpush1.xpose.msra.mxu0 0.0
    %2572 = vmatprep.subr.mxu0 0.0
    %2573 = vmatpush1.xpose.msra.mxu0 0.0
    %2574 = vmatprep.subr.mxu0 0.0
    %2575 = vmatpush1.xpose.msra.mxu0 0.0
    %2576 = vmatprep.mubr.f32.mxu0 0.0
    %2577 = vmatmul.mubr.f32.gmra.mrb[0].mxu0 %v2507
    %v2578 = vpop.f32.mrb[0].mxu0
    %v2579 = vadd.f32 0.0, %v2578
    %v2580 = vpop.f32.mrb[0].mxu0
    %2581 = vdwg.mxu0
    %v2582 = vmul.f32 %v2579, 0.35355338
    %v2583 = vsel %vm92, -10000.0, %v2582
    %v2584 = vsel %vm331, %v2583, -inf
    %2585 = vmax.xlane.f32.xlu0 %v2584
    %v2586 = vpop.xlane.xlu0 %2585
    %v2587 = vsub.f32 %v2583, %v2586
    %v2588 = vmul.f32 %v2587, 1.442695
    %v2589 = vpow.pop %v2588
    %v2590 = vsel %vm331, %v2589, 0.0
    %2591 = vadd.xlane.f32.xlu0 %v2590
    %v2592 = vpop.xlane.xlu0 %2591
    %v2593 = vrcp.pop %v2592
    %v2594 = vmul.f32 %v2589, %v2593
    %2595 = vrot.lane.b32.xlu0 %v2486, 96
    %v2596 = vpop.permute.xlu0 %2595
    %v2599 = vsel %vm331, %v2594, 0
    %2601 = vmatprep.subr.mxu0 0.0
    %2602 = vmatpush1.msra.mxu0 %v2596
    %2603 = vmatprep.subr.mxu0 0.0
    %2604 = vmatpush1.msra.mxu0 0.0
    %2605 = vmatprep.subr.mxu0 0.0
    %2606 = vmatpush1.msra.mxu0 0.0
    %2607 = vmatprep.subr.mxu0 0.0
    %2608 = vmatpush1.msra.mxu0 0.0
    %2609 = vmatprep.subr.mxu0 0.0
    %2610 = vmatpush1.msra.mxu0 0.0
    %2611 = vmatprep.subr.mxu0 0.0
    %2612 = vmatpush1.msra.mxu0 0.0
    %2613 = vmatprep.subr.mxu0 0.0
    %2614 = vmatpush1.msra.mxu0 0.0
    %2615 = vmatprep.subr.mxu0 0.0
    %2616 = vmatpush1.msra.mxu0 0.0
    %2617 = vmatprep.subr.mxu0 0.0
    %2618 = vmatpush1.msra.mxu0 0.0
    %2619 = vmatprep.subr.mxu0 0.0
    %2620 = vmatpush1.msra.mxu0 0.0
    %2621 = vmatprep.subr.mxu0 0.0
    %2622 = vmatpush1.msra.mxu0 0.0
    %2623 = vmatprep.subr.mxu0 0.0
    %2624 = vmatpush1.msra.mxu0 0.0
    %2625 = vmatprep.subr.mxu0 0.0
    %2626 = vmatpush1.msra.mxu0 0.0
    %2627 = vmatprep.subr.mxu0 0.0
    %2628 = vmatpush1.msra.mxu0 0.0
    %2629 = vmatprep.subr.mxu0 0.0
    %2630 = vmatpush1.msra.mxu0 0.0
    %2631 = vmatprep.subr.mxu0 0.0
    %2632 = vmatpush1.msra.mxu0 0.0
    %2633 = vmatprep.subr.mxu0 0.0
    %2634 = vmatpush1.msra.mxu0 0.0
    %2635 = vmatprep.subr.mxu0 0.0
    %2636 = vmatpush1.msra.mxu0 0.0
    %2637 = vmatprep.subr.mxu0 0.0
    %2638 = vmatpush1.msra.mxu0 0.0
    %2639 = vmatprep.subr.mxu0 0.0
    %2640 = vmatpush1.msra.mxu0 0.0
    %2641 = vmatprep.subr.mxu0 0.0
    %2642 = vmatpush1.msra.mxu0 0.0
    %2643 = vmatprep.subr.mxu0 0.0
    %2644 = vmatpush1.msra.mxu0 0.0
    %2645 = vmatprep.subr.mxu0 0.0
    %2646 = vmatpush1.msra.mxu0 0.0
    %2647 = vmatprep.subr.mxu0 0.0
    %2648 = vmatpush1.msra.mxu0 0.0
    %2649 = vmatprep.subr.mxu0 0.0
    %2650 = vmatpush1.msra.mxu0 0.0
    %2651 = vmatprep.subr.mxu0 0.0
    %2652 = vmatpush1.msra.mxu0 0.0
    %2653 = vmatprep.subr.mxu0 0.0
    %2654 = vmatpush1.msra.mxu0 0.0
    %2655 = vmatprep.subr.mxu0 0.0
    %2656 = vmatpush1.msra.mxu0 0.0
    %2657 = vmatprep.subr.mxu0 0.0
    %2658 = vmatpush1.msra.mxu0 0.0
    %2659 = vmatprep.subr.mxu0 0.0
    %2660 = vmatpush1.msra.mxu0 0.0
    %2661 = vmatprep.subr.mxu0 0.0
    %2662 = vmatpush1.msra.mxu0 0.0
    %2663 = vmatprep.subr.mxu0 0.0
    %2664 = vmatpush1.msra.mxu0 0.0
    %2665 = vmatprep.mubr.f32.mxu0 0.0
    %2666 = vmatmul.mubr.f32.gmra.mrb[0].mxu0 %v2599
    %v2667 = vpop.f32.mrb[0].mxu0
    %v2668 = vadd.f32 0.0, %v2667
    %v2669 = vpop.f32.mrb[0].mxu0
    %2670 = vdwg.mxu0
    %2671 = vrot.lane.b32.xlu0 %v2392, 120
    %v2672 = vpop.permute.xlu0 %2671
    %2673 = vrot.lane.b32.xlu0 %v2486, 120
    %v2674 = vpop.permute.xlu0 %2673
    %v2675 = vsel %vm331, %v2672, 0
    %v2677 = vsel %vm331, %v2674, 0
    %2679 = vmatprep.subr.mxu0 0.0
    %2680 = vmatpush1.xpose.msra.mxu0 %v2677
    %2681 = vmatprep.subr.mxu0 0.0
    %2682 = vmatpush1.xpose.msra.mxu0 0.0
    %2683 = vmatprep.subr.mxu0 0.0
    %2684 = vmatpush1.xpose.msra.mxu0 0.0
    %2685 = vmatprep.subr.mxu0 0.0
    %2686 = vmatpush1.xpose.msra.mxu0 0.0
    %2687 = vmatprep.subr.mxu0 0.0
    %2688 = vmatpush1.xpose.msra.mxu0 0.0
    %2689 = vmatprep.subr.mxu0 0.0
    %2690 = vmatpush1.xpose.msra.mxu0 0.0
    %2691 = vmatprep.subr.mxu0 0.0
    %2692 = vmatpush1.xpose.msra.mxu0 0.0
    %2693 = vmatprep.subr.mxu0 0.0
    %2694 = vmatpush1.xpose.msra.mxu0 0.0
    %2695 = vmatprep.subr.mxu0 0.0
    %2696 = vmatpush1.xpose.msra.mxu0 0.0
    %2697 = vmatprep.subr.mxu0 0.0
    %2698 = vmatpush1.xpose.msra.mxu0 0.0
    %2699 = vmatprep.subr.mxu0 0.0
    %2700 = vmatpush1.xpose.msra.mxu0 0.0
    %2701 = vmatprep.subr.mxu0 0.0
    %2702 = vmatpush1.xpose.msra.mxu0 0.0
    %2703 = vmatprep.subr.mxu0 0.0
    %2704 = vmatpush1.xpose.msra.mxu0 0.0
    %2705 = vmatprep.subr.mxu0 0.0
    %2706 = vmatpush1.xpose.msra.mxu0 0.0
    %2707 = vmatprep.subr.mxu0 0.0
    %2708 = vmatpush1.xpose.msra.mxu0 0.0
    %2709 = vmatprep.subr.mxu0 0.0
    %2710 = vmatpush1.xpose.msra.mxu0 0.0
    %2711 = vmatprep.subr.mxu0 0.0
    %2712 = vmatpush1.xpose.msra.mxu0 0.0
    %2713 = vmatprep.subr.mxu0 0.0
    %2714 = vmatpush1.xpose.msra.mxu0 0.0
    %2715 = vmatprep.subr.mxu0 0.0
    %2716 = vmatpush1.xpose.msra.mxu0 0.0
    %2717 = vmatprep.subr.mxu0 0.0
    %2718 = vmatpush1.xpose.msra.mxu0 0.0
    %2719 = vmatprep.subr.mxu0 0.0
    %2720 = vmatpush1.xpose.msra.mxu0 0.0
    %2721 = vmatprep.subr.mxu0 0.0
    %2722 = vmatpush1.xpose.msra.mxu0 0.0
    %2723 = vmatprep.subr.mxu0 0.0
    %2724 = vmatpush1.xpose.msra.mxu0 0.0
    %2725 = vmatprep.subr.mxu0 0.0
    %2726 = vmatpush1.xpose.msra.mxu0 0.0
    %2727 = vmatprep.subr.mxu0 0.0
    %2728 = vmatpush1.xpose.msra.mxu0 0.0
    %2729 = vmatprep.subr.mxu0 0.0
    %2730 = vmatpush1.xpose.msra.mxu0 0.0
    %2731 = vmatprep.subr.mxu0 0.0
    %2732 = vmatpush1.xpose.msra.mxu0 0.0
    %2733 = vmatprep.subr.mxu0 0.0
    %2734 = vmatpush1.xpose.msra.mxu0 0.0
    %2735 = vmatprep.subr.mxu0 0.0
    %2736 = vmatpush1.xpose.msra.mxu0 0.0
    %2737 = vmatprep.subr.mxu0 0.0
    %2738 = vmatpush1.xpose.msra.mxu0 0.0
    %2739 = vmatprep.subr.mxu0 0.0
    %2740 = vmatpush1.xpose.msra.mxu0 0.0
    %2741 = vmatprep.subr.mxu0 0.0
    %2742 = vmatpush1.xpose.msra.mxu0 0.0
    %2743 = vmatprep.mubr.f32.mxu0 0.0
    %2744 = vmatmul.mubr.f32.gmra.mrb[0].mxu0 %v2675
    %v2745 = vpop.f32.mrb[0].mxu0
    %v2746 = vadd.f32 0.0, %v2745
    %v2747 = vpop.f32.mrb[0].mxu0
    %2748 = vdwg.mxu0
    %v2749 = vmul.f32 %v2746, 0.35355338
    %v2750 = vsel %vm92, -10000.0, %v2749
    %v2751 = vsel %vm331, %v2750, -inf
    %2752 = vmax.xlane.f32.xlu0 %v2751
    %v2753 = vpop.xlane.xlu0 %2752
    %v2754 = vsub.f32 %v2750, %v2753
    %v2755 = vmul.f32 %v2754, 1.442695
    %v2756 = vpow.pop %v2755
    %v2757 = vsel %vm331, %v2756, 0.0
    %2758 = vadd.xlane.f32.xlu0 %v2757
    %v2759 = vpop.xlane.xlu0 %2758
    %v2760 = vrcp.pop %v2759
    %v2761 = vmul.f32 %v2756, %v2760
    %2762 = vrot.lane.b32.xlu0 %v2486, 88
    %v2763 = vpop.permute.xlu0 %2762
    %v2766 = vsel %vm331, %v2761, 0
    %2768 = vmatprep.subr.mxu0 0.0
    %2769 = vmatpush1.msra.mxu0 %v2763
    %2770 = vmatprep.subr.mxu0 0.0
    %2771 = vmatpush1.msra.mxu0 0.0
    %2772 = vmatprep.subr.mxu0 0.0
    %2773 = vmatpush1.msra.mxu0 0.0
    %2774 = vmatprep.subr.mxu0 0.0
    %2775 = vmatpush1.msra.mxu0 0.0
    %2776 = vmatprep.subr.mxu0 0.0
    %2777 = vmatpush1.msra.mxu0 0.0
    %2778 = vmatprep.subr.mxu0 0.0
    %2779 = vmatpush1.msra.mxu0 0.0
    %2780 = vmatprep.subr.mxu0 0.0
    %2781 = vmatpush1.msra.mxu0 0.0
    %2782 = vmatprep.subr.mxu0 0.0
    %2783 = vmatpush1.msra.mxu0 0.0
    %2784 = vmatprep.subr.mxu0 0.0
    %2785 = vmatpush1.msra.mxu0 0.0
    %2786 = vmatprep.subr.mxu0 0.0
    %2787 = vmatpush1.msra.mxu0 0.0
    %2788 = vmatprep.subr.mxu0 0.0
    %2789 = vmatpush1.msra.mxu0 0.0
    %2790 = vmatprep.subr.mxu0 0.0
    %2791 = vmatpush1.msra.mxu0 0.0
    %2792 = vmatprep.subr.mxu0 0.0
    %2793 = vmatpush1.msra.mxu0 0.0
    %2794 = vmatprep.subr.mxu0 0.0
    %2795 = vmatpush1.msra.mxu0 0.0
    %2796 = vmatprep.subr.mxu0 0.0
    %2797 = vmatpush1.msra.mxu0 0.0
    %2798 = vmatprep.subr.mxu0 0.0
    %2799 = vmatpush1.msra.mxu0 0.0
    %2800 = vmatprep.subr.mxu0 0.0
    %2801 = vmatpush1.msra.mxu0 0.0
    %2802 = vmatprep.subr.mxu0 0.0
    %2803 = vmatpush1.msra.mxu0 0.0
    %2804 = vmatprep.subr.mxu0 0.0
    %2805 = vmatpush1.msra.mxu0 0.0
    %2806 = vmatprep.subr.mxu0 0.0
    %2807 = vmatpush1.msra.mxu0 0.0
    %2808 = vmatprep.subr.mxu0 0.0
    %2809 = vmatpush1.msra.mxu0 0.0
    %2810 = vmatprep.subr.mxu0 0.0
    %2811 = vmatpush1.msra.mxu0 0.0
    %2812 = vmatprep.subr.mxu0 0.0
    %2813 = vmatpush1.msra.mxu0 0.0
    %2814 = vmatprep.subr.mxu0 0.0
    %2815 = vmatpush1.msra.mxu0 0.0
    %2816 = vmatprep.subr.mxu0 0.0
    %2817 = vmatpush1.msra.mxu0 0.0
    %2818 = vmatprep.subr.mxu0 0.0
    %2819 = vmatpush1.msra.mxu0 0.0
    %2820 = vmatprep.subr.mxu0 0.0
    %2821 = vmatpush1.msra.mxu0 0.0
    %2822 = vmatprep.subr.mxu0 0.0
    %2823 = vmatpush1.msra.mxu0 0.0
    %2824 = vmatprep.subr.mxu0 0.0
    %2825 = vmatpush1.msra.mxu0 0.0
    %2826 = vmatprep.subr.mxu0 0.0
    %2827 = vmatpush1.msra.mxu0 0.0
    %2828 = vmatprep.subr.mxu0 0.0
    %2829 = vmatpush1.msra.mxu0 0.0
    %2830 = vmatprep.subr.mxu0 0.0
    %2831 = vmatpush1.msra.mxu0 0.0
    %2832 = vmatprep.mubr.f32.mxu0 0.0
    %2833 = vmatmul.mubr.f32.gmra.mrb[0].mxu0 %v2766
    %v2834 = vpop.f32.mrb[0].mxu0
    %v2835 = vadd.f32 0.0, %v2834
    %v2836 = vpop.f32.mrb[0].mxu0
    %2837 = vdwg.mxu0
    %2839 = vrot.lane.b32.xlu0 %v2495, 16
    %v2840 = vpop.permute.xlu0 %2839
    %v2842 = vadd.f32 %v2392, %v2840
    %2844 = vrot.lane.b32.xlu0 %v2498, 16
    %v2845 = vpop.permute.xlu0 %2844
    %v2847 = vadd.f32 %v2486, %v2845
    %2849 = vrot.lane.b32.xlu0 %v2842, 112
    %v2850 = vpop.permute.xlu0 %2849
    %2852 = vrot.lane.b32.xlu0 %v2847, 112
    %v2853 = vpop.permute.xlu0 %2852
    %v2854 = vsel %vm331, %v2850, 0
    %v2856 = vsel %vm331, %v2853, 0
    %2858 = vmatprep.subr.mxu0 0.0
    %2859 = vmatpush1.xpose.msra.mxu0 %v2856
    %2860 = vmatprep.subr.mxu0 0.0
    %2861 = vmatpush1.xpose.msra.mxu0 0.0
    %2862 = vmatprep.subr.mxu0 0.0
    %2863 = vmatpush1.xpose.msra.mxu0 0.0
    %2864 = vmatprep.subr.mxu0 0.0
    %2865 = vmatpush1.xpose.msra.mxu0 0.0
    %2866 = vmatprep.subr.mxu0 0.0
    %2867 = vmatpush1.xpose.msra.mxu0 0.0
    %2868 = vmatprep.subr.mxu0 0.0
    %2869 = vmatpush1.xpose.msra.mxu0 0.0
    %2870 = vmatprep.subr.mxu0 0.0
    %2871 = vmatpush1.xpose.msra.mxu0 0.0
    %2872 = vmatprep.subr.mxu0 0.0
    %2873 = vmatpush1.xpose.msra.mxu0 0.0
    %2874 = vmatprep.subr.mxu0 0.0
    %2875 = vmatpush1.xpose.msra.mxu0 0.0
    %2876 = vmatprep.subr.mxu0 0.0
    %2877 = vmatpush1.xpose.msra.mxu0 0.0
    %2878 = vmatprep.subr.mxu0 0.0
    %2879 = vmatpush1.xpose.msra.mxu0 0.0
    %2880 = vmatprep.subr.mxu0 0.0
    %2881 = vmatpush1.xpose.msra.mxu0 0.0
    %2882 = vmatprep.subr.mxu0 0.0
    %2883 = vmatpush1.xpose.msra.mxu0 0.0
    %2884 = vmatprep.subr.mxu0 0.0
    %2885 = vmatpush1.xpose.msra.mxu0 0.0
    %2886 = vmatprep.subr.mxu0 0.0
    %2887 = vmatpush1.xpose.msra.mxu0 0.0
    %2888 = vmatprep.subr.mxu0 0.0
    %2889 = vmatpush1.xpose.msra.mxu0 0.0
    %2890 = vmatprep.subr.mxu0 0.0
    %2891 = vmatpush1.xpose.msra.mxu0 0.0
    %2892 = vmatprep.subr.mxu0 0.0
    %2893 = vmatpush1.xpose.msra.mxu0 0.0
    %2894 = vmatprep.subr.mxu0 0.0
    %2895 = vmatpush1.xpose.msra.mxu0 0.0
    %2896 = vmatprep.subr.mxu0 0.0
    %2897 = vmatpush1.xpose.msra.mxu0 0.0
    %2898 = vmatprep.subr.mxu0 0.0
    %2899 = vmatpush1.xpose.msra.mxu0 0.0
    %2900 = vmatprep.subr.mxu0 0.0
    %2901 = vmatpush1.xpose.msra.mxu0 0.0
    %2902 = vmatprep.subr.mxu0 0.0
    %2903 = vmatpush1.xpose.msra.mxu0 0.0
    %2904 = vmatprep.subr.mxu0 0.0
    %2905 = vmatpush1.xpose.msra.mxu0 0.0
    %2906 = vmatprep.subr.mxu0 0.0
    %2907 = vmatpush1.xpose.msra.mxu0 0.0
    %2908 = vmatprep.subr.mxu0 0.0
    %2909 = vmatpush1.xpose.msra.mxu0 0.0
    %2910 = vmatprep.subr.mxu0 0.0
    %2911 = vmatpush1.xpose.msra.mxu0 0.0
    %2912 = vmatprep.subr.mxu0 0.0
    %2913 = vmatpush1.xpose.msra.mxu0 0.0
    %2914 = vmatprep.subr.mxu0 0.0
    %2915 = vmatpush1.xpose.msra.mxu0 0.0
    %2916 = vmatprep.subr.mxu0 0.0
    %2917 = vmatpush1.xpose.msra.mxu0 0.0
    %2918 = vmatprep.subr.mxu0 0.0
    %2919 = vmatpush1.xpose.msra.mxu0 0.0
    %2920 = vmatprep.subr.mxu0 0.0
    %2921 = vmatpush1.xpose.msra.mxu0 0.0
    %2922 = vmatprep.mubr.f32.mxu0 0.0
    %2923 = vmatmul.mubr.f32.gmra.mrb[0].mxu0 %v2854
    %v2924 = vpop.f32.mrb[0].mxu0
    %v2925 = vadd.f32 0.0, %v2924
    %v2926 = vpop.f32.mrb[0].mxu0
    %2927 = vdwg.mxu0
    %v2928 = vmul.f32 %v2925, 0.35355338
    %v2930 = vlaneseq
    %v2931 = vshrl.u32 %v2930, 7
    %v2932 = vsub.s32 0, %v2931
    %v2933 = vrot.slane %v2504, %v2932
    %2934 = vrot.lane.b32.xlu0 %v2933, 48
    %v2935 = vpop.permute.xlu0 %2934
    %v2937 = vmul.f32 %v2486, %v2935
    %2939 = vrot.lane.b32.xlu0 %v2937, 80
    %v2940 = vpop.permute.xlu0 %2939
    %v2942 = vsel %vm331, %v2940, 0.0
    %2943 = vadd.xlane.f32.xlu0 %v2942
    %v2944 = vpop.xlane.xlu0 %2943
    %v2945 = vadd.f32 %v2928, %v2501
    %v2946 = vadd.f32 %v2945, %v2944
    %2947 = vxpose.xlu0.b32.start [1/16] %v2944, 128
    %2948 = vxpose.xlu0.b32.cont [2/16] 0.0, 128
    %2949 = vxpose.xlu0.b32.cont [3/16] 0.0, 128
    %2950 = vxpose.xlu0.b32.cont [4/16] 0.0, 128
    %2951 = vxpose.xlu0.b32.cont [5/16] 0.0, 128
    %2952 = vxpose.xlu0.b32.cont [6/16] 0.0, 128
    %2953 = vxpose.xlu0.b32.cont [7/16] 0.0, 128
    %2954 = vxpose.xlu0.b32.cont [8/16] 0.0, 128
    %2955 = vxpose.xlu0.b32.cont [9/16] 0.0, 128
    %2956 = vxpose.xlu0.b32.cont [10/16] 0.0, 128
    %2957 = vxpose.xlu0.b32.cont [11/16] 0.0, 128
    %2958 = vxpose.xlu0.b32.cont [12/16] 0.0, 128
    %2959 = vxpose.xlu0.b32.cont [13/16] 0.0, 128
    %2960 = vxpose.xlu0.b32.cont [14/16] 0.0, 128
    %2961 = vxpose.xlu0.b32.cont [15/16] 0.0, 128
    %2962 = vxpose.xlu0.b32.end [16/16] 0.0, 128
    %v2963 = vpop.trf.xlu0
    %v2964 = vpop.trf.xlu0
    %v2965 = vpop.trf.xlu0
    %v2966 = vpop.trf.xlu0
    %v2967 = vpop.trf.xlu0
    %v2968 = vpop.trf.xlu0
    %v2969 = vpop.trf.xlu0
    %v2970 = vpop.trf.xlu0
    %v2971 = vpop.trf.xlu0
    %v2972 = vpop.trf.xlu0
    %v2973 = vpop.trf.xlu0
    %v2974 = vpop.trf.xlu0
    %v2975 = vpop.trf.xlu0
    %v2976 = vpop.trf.xlu0
    %v2977 = vpop.trf.xlu0
    %v2978 = vpop.trf.xlu0
    %v2979 = vlaneseq
    %v2980 = vshrl.u32 %v2979, 7
    %v2981 = vsub.s32 0, %v2980
    %v2982 = vrot.slane %v2963, %v2981
    %v2983 = vadd.f32 %v2946, %v2982
    %v2984 = vsel %vm92, -10000.0, %v2983
    %v2985 = vsel %vm331, %v2984, -inf
    %2986 = vmax.xlane.f32.xlu0 %v2985
    %v2987 = vpop.xlane.xlu0 %2986
    %v2988 = vsub.f32 %v2984, %v2987
    %v2989 = vmul.f32 %v2988, 1.442695
    %v2990 = vpow.pop %v2989
    %v2991 = vsel %vm331, %v2990, 0.0
    %2992 = vadd.xlane.f32.xlu0 %v2991
    %v2993 = vpop.xlane.xlu0 %2992
    %v2994 = vrcp.pop %v2993
    %v2995 = vmul.f32 %v2990, %v2994
    %2996 = vrot.lane.b32.xlu0 %v2486, 80
    %v2997 = vpop.permute.xlu0 %2996
    %v3000 = vsel %vm331, %v2995, 0
    %3002 = vmatprep.subr.mxu0 0.0
    %3003 = vmatpush1.msra.mxu0 %v2997
    %3004 = vmatprep.subr.mxu0 0.0
    %3005 = vmatpush1.msra.mxu0 0.0
    %3006 = vmatprep.subr.mxu0 0.0
    %3007 = vmatpush1.msra.mxu0 0.0
    %3008 = vmatprep.subr.mxu0 0.0
    %3009 = vmatpush1.msra.mxu0 0.0
    %3010 = vmatprep.subr.mxu0 0.0
    %3011 = vmatpush1.msra.mxu0 0.0
    %3012 = vmatprep.subr.mxu0 0.0
    %3013 = vmatpush1.msra.mxu0 0.0
    %3014 = vmatprep.subr.mxu0 0.0
    %3015 = vmatpush1.msra.mxu0 0.0
    %3016 = vmatprep.subr.mxu0 0.0
    %3017 = vmatpush1.msra.mxu0 0.0
    %3018 = vmatprep.subr.mxu0 0.0
    %3019 = vmatpush1.msra.mxu0 0.0
    %3020 = vmatprep.subr.mxu0 0.0
    %3021 = vmatpush1.msra.mxu0 0.0
    %3022 = vmatprep.subr.mxu0 0.0
    %3023 = vmatpush1.msra.mxu0 0.0
    %3024 = vmatprep.subr.mxu0 0.0
    %3025 = vmatpush1.msra.mxu0 0.0
    %3026 = vmatprep.subr.mxu0 0.0
    %3027 = vmatpush1.msra.mxu0 0.0
    %3028 = vmatprep.subr.mxu0 0.0
    %3029 = vmatpush1.msra.mxu0 0.0
    %3030 = vmatprep.subr.mxu0 0.0
    %3031 = vmatpush1.msra.mxu0 0.0
    %3032 = vmatprep.subr.mxu0 0.0
    %3033 = vmatpush1.msra.mxu0 0.0
    %3034 = vmatprep.subr.mxu0 0.0
    %3035 = vmatpush1.msra.mxu0 0.0
    %3036 = vmatprep.subr.mxu0 0.0
    %3037 = vmatpush1.msra.mxu0 0.0
    %3038 = vmatprep.subr.mxu0 0.0
    %3039 = vmatpush1.msra.mxu0 0.0
    %3040 = vmatprep.subr.mxu0 0.0
    %3041 = vmatpush1.msra.mxu0 0.0
    %3042 = vmatprep.subr.mxu0 0.0
    %3043 = vmatpush1.msra.mxu0 0.0
    %3044 = vmatprep.subr.mxu0 0.0
    %3045 = vmatpush1.msra.mxu0 0.0
    %3046 = vmatprep.subr.mxu0 0.0
    %3047 = vmatpush1.msra.mxu0 0.0
    %3048 = vmatprep.subr.mxu0 0.0
    %3049 = vmatpush1.msra.mxu0 0.0
    %3050 = vmatprep.subr.mxu0 0.0
    %3051 = vmatpush1.msra.mxu0 0.0
    %3052 = vmatprep.subr.mxu0 0.0
    %3053 = vmatpush1.msra.mxu0 0.0
    %3054 = vmatprep.subr.mxu0 0.0
    %3055 = vmatpush1.msra.mxu0 0.0
    %3056 = vmatprep.subr.mxu0 0.0
    %3057 = vmatpush1.msra.mxu0 0.0
    %3058 = vmatprep.subr.mxu0 0.0
    %3059 = vmatpush1.msra.mxu0 0.0
    %3060 = vmatprep.subr.mxu0 0.0
    %3061 = vmatpush1.msra.mxu0 0.0
    %3062 = vmatprep.subr.mxu0 0.0
    %3063 = vmatpush1.msra.mxu0 0.0
    %3064 = vmatprep.subr.mxu0 0.0
    %3065 = vmatpush1.msra.mxu0 0.0
    %3066 = vmatprep.mubr.f32.mxu0 0.0
    %3067 = vmatmul.mubr.f32.gmra.mrb[0].mxu0 %v3000
    %v3068 = vpop.f32.mrb[0].mxu0
    %v3069 = vadd.f32 0.0, %v3068
    %v3070 = vpop.f32.mrb[0].mxu0
    %3071 = vdwg.mxu0
    %3073 = vrot.lane.b32.xlu0 %v2496, 24
    %v3074 = vpop.permute.xlu0 %3073
    %v3076 = vadd.f32 %v2392, %v3074
    %3078 = vrot.lane.b32.xlu0 %v2499, 24
    %v3079 = vpop.permute.xlu0 %3078
    %v3081 = vadd.f32 %v2486, %v3079
    %3083 = vrot.lane.b32.xlu0 %v3076, 104
    %v3084 = vpop.permute.xlu0 %3083
    %3086 = vrot.lane.b32.xlu0 %v3081, 104
    %v3087 = vpop.permute.xlu0 %3086
    %v3088 = vsel %vm331, %v3084, 0
    %v3090 = vsel %vm331, %v3087, 0
    %3092 = vmatprep.subr.mxu0 0.0
    %3093 = vmatpush1.xpose.msra.mxu0 %v3090
    %3094 = vmatprep.subr.mxu0 0.0
    %3095 = vmatpush1.xpose.msra.mxu0 0.0
    %3096 = vmatprep.subr.mxu0 0.0
    %3097 = vmatpush1.xpose.msra.mxu0 0.0
    %3098 = vmatprep.subr.mxu0 0.0
    %3099 = vmatpush1.xpose.msra.mxu0 0.0
    %3100 = vmatprep.subr.mxu0 0.0
    %3101 = vmatpush1.xpose.msra.mxu0 0.0
    %3102 = vmatprep.subr.mxu0 0.0
    %3103 = vmatpush1.xpose.msra.mxu0 0.0
    %3104 = vmatprep.subr.mxu0 0.0
    %3105 = vmatpush1.xpose.msra.mxu0 0.0
    %3106 = vmatprep.subr.mxu0 0.0
    %3107 = vmatpush1.xpose.msra.mxu0 0.0
    %3108 = vmatprep.subr.mxu0 0.0
    %3109 = vmatpush1.xpose.msra.mxu0 0.0
    %3110 = vmatprep.subr.mxu0 0.0
    %3111 = vmatpush1.xpose.msra.mxu0 0.0
    %3112 = vmatprep.subr.mxu0 0.0
    %3113 = vmatpush1.xpose.msra.mxu0 0.0
    %3114 = vmatprep.subr.mxu0 0.0
    %3115 = vmatpush1.xpose.msra.mxu0 0.0
    %3116 = vmatprep.subr.mxu0 0.0
    %3117 = vmatpush1.xpose.msra.mxu0 0.0
    %3118 = vmatprep.subr.mxu0 0.0
    %3119 = vmatpush1.xpose.msra.mxu0 0.0
    %3120 = vmatprep.subr.mxu0 0.0
    %3121 = vmatpush1.xpose.msra.mxu0 0.0
    %3122 = vmatprep.subr.mxu0 0.0
    %3123 = vmatpush1.xpose.msra.mxu0 0.0
    %3124 = vmatprep.subr.mxu0 0.0
    %3125 = vmatpush1.xpose.msra.mxu0 0.0
    %3126 = vmatprep.subr.mxu0 0.0
    %3127 = vmatpush1.xpose.msra.mxu0 0.0
    %3128 = vmatprep.subr.mxu0 0.0
    %3129 = vmatpush1.xpose.msra.mxu0 0.0
    %3130 = vmatprep.subr.mxu0 0.0
    %3131 = vmatpush1.xpose.msra.mxu0 0.0
    %3132 = vmatprep.subr.mxu0 0.0
    %3133 = vmatpush1.xpose.msra.mxu0 0.0
    %3134 = vmatprep.subr.mxu0 0.0
    %3135 = vmatpush1.xpose.msra.mxu0 0.0
    %3136 = vmatprep.subr.mxu0 0.0
    %3137 = vmatpush1.xpose.msra.mxu0 0.0
    %3138 = vmatprep.subr.mxu0 0.0
    %3139 = vmatpush1.xpose.msra.mxu0 0.0
    %3140 = vmatprep.subr.mxu0 0.0
    %3141 = vmatpush1.xpose.msra.mxu0 0.0
    %3142 = vmatprep.subr.mxu0 0.0
    %3143 = vmatpush1.xpose.msra.mxu0 0.0
    %3144 = vmatprep.subr.mxu0 0.0
    %3145 = vmatpush1.xpose.msra.mxu0 0.0
    %3146 = vmatprep.subr.mxu0 0.0
    %3147 = vmatpush1.xpose.msra.mxu0 0.0
    %3148 = vmatprep.subr.mxu0 0.0
    %3149 = vmatpush1.xpose.msra.mxu0 0.0
    %3150 = vmatprep.subr.mxu0 0.0
    %3151 = vmatpush1.xpose.msra.mxu0 0.0
    %3152 = vmatprep.subr.mxu0 0.0
    %3153 = vmatpush1.xpose.msra.mxu0 0.0
    %3154 = vmatprep.subr.mxu0 0.0
    %3155 = vmatpush1.xpose.msra.mxu0 0.0
    %3156 = vmatprep.mubr.f32.mxu0 0.0
    %3157 = vmatmul.mubr.f32.gmra.mrb[0].mxu0 %v3088
    %v3158 = vpop.f32.mrb[0].mxu0
    %v3159 = vadd.f32 0.0, %v3158
    %v3160 = vpop.f32.mrb[0].mxu0
    %3161 = vdwg.mxu0
    %v3162 = vmul.f32 %v3159, 0.35355338
    %v3164 = vlaneseq
    %v3165 = vshrl.u32 %v3164, 7
    %v3166 = vsub.s32 0, %v3165
    %v3167 = vrot.slane %v2505, %v3166
    %3168 = vrot.lane.b32.xlu0 %v3167, 56
    %v3169 = vpop.permute.xlu0 %3168
    %v3171 = vmul.f32 %v2486, %v3169
    %3173 = vrot.lane.b32.xlu0 %v3171, 72
    %v3174 = vpop.permute.xlu0 %3173
    %v3176 = vsel %vm331, %v3174, 0.0
    %3177 = vadd.xlane.f32.xlu0 %v3176
    %v3178 = vpop.xlane.xlu0 %3177
    %v3179 = vadd.f32 %v3162, %v2502
    %v3180 = vadd.f32 %v3179, %v3178
    %3181 = vxpose.xlu0.b32.start [1/16] %v3178, 128
    %3182 = vxpose.xlu0.b32.cont [2/16] 0.0, 128
    %3183 = vxpose.xlu0.b32.cont [3/16] 0.0, 128
    %3184 = vxpose.xlu0.b32.cont [4/16] 0.0, 128
    %3185 = vxpose.xlu0.b32.cont [5/16] 0.0, 128
    %3186 = vxpose.xlu0.b32.cont [6/16] 0.0, 128
    %3187 = vxpose.xlu0.b32.cont [7/16] 0.0, 128
    %3188 = vxpose.xlu0.b32.cont [8/16] 0.0, 128
    %3189 = vxpose.xlu0.b32.cont [9/16] 0.0, 128
    %3190 = vxpose.xlu0.b32.cont [10/16] 0.0, 128
    %3191 = vxpose.xlu0.b32.cont [11/16] 0.0, 128
    %3192 = vxpose.xlu0.b32.cont [12/16] 0.0, 128
    %3193 = vxpose.xlu0.b32.cont [13/16] 0.0, 128
    %3194 = vxpose.xlu0.b32.cont [14/16] 0.0, 128
    %3195 = vxpose.xlu0.b32.cont [15/16] 0.0, 128
    %3196 = vxpose.xlu0.b32.end [16/16] 0.0, 128
    %v3197 = vpop.trf.xlu0
    %v3198 = vpop.trf.xlu0
    %v3199 = vpop.trf.xlu0
    %v3200 = vpop.trf.xlu0
    %v3201 = vpop.trf.xlu0
    %v3202 = vpop.trf.xlu0
    %v3203 = vpop.trf.xlu0
    %v3204 = vpop.trf.xlu0
    %v3205 = vpop.trf.xlu0
    %v3206 = vpop.trf.xlu0
    %v3207 = vpop.trf.xlu0
    %v3208 = vpop.trf.xlu0
    %v3209 = vpop.trf.xlu0
    %v3210 = vpop.trf.xlu0
    %v3211 = vpop.trf.xlu0
    %v3212 = vpop.trf.xlu0
    %v3213 = vlaneseq
    %v3214 = vshrl.u32 %v3213, 7
    %v3215 = vsub.s32 0, %v3214
    %v3216 = vrot.slane %v3197, %v3215
    %v3217 = vadd.f32 %v3180, %v3216
    %v3218 = vsel %vm92, -10000.0, %v3217
    %v3219 = vsel %vm331, %v3218, -inf
    %3220 = vmax.xlane.f32.xlu0 %v3219
    %v3221 = vpop.xlane.xlu0 %3220
    %v3222 = vsub.f32 %v3218, %v3221
    %v3223 = vmul.f32 %v3222, 1.442695
    %v3224 = vpow.pop %v3223
    %v3225 = vsel %vm331, %v3224, 0.0
    %3226 = vadd.xlane.f32.xlu0 %v3225
    %v3227 = vpop.xlane.xlu0 %3226
    %v3228 = vrcp.pop %v3227
    %v3229 = vmul.f32 %v3224, %v3228
    %3230 = vrot.lane.b32.xlu0 %v2486, 72
    %v3231 = vpop.permute.xlu0 %3230
    %v3234 = vsel %vm331, %v3229, 0
    %3236 = vmatprep.subr.mxu0 0.0
    %3237 = vmatpush1.msra.mxu0 %v3231
    %3238 = vmatprep.subr.mxu0 0.0
    %3239 = vmatpush1.msra.mxu0 0.0
    %3240 = vmatprep.subr.mxu0 0.0
    %3241 = vmatpush1.msra.mxu0 0.0
    %3242 = vmatprep.subr.mxu0 0.0
    %3243 = vmatpush1.msra.mxu0 0.0
    %3244 = vmatprep.subr.mxu0 0.0
    %3245 = vmatpush1.msra.mxu0 0.0
    %3246 = vmatprep.subr.mxu0 0.0
    %3247 = vmatpush1.msra.mxu0 0.0
    %3248 = vmatprep.subr.mxu0 0.0
    %3249 = vmatpush1.msra.mxu0 0.0
    %3250 = vmatprep.subr.mxu0 0.0
    %3251 = vmatpush1.msra.mxu0 0.0
    %3252 = vmatprep.subr.mxu0 0.0
    %3253 = vmatpush1.msra.mxu0 0.0
    %3254 = vmatprep.subr.mxu0 0.0
    %3255 = vmatpush1.msra.mxu0 0.0
    %3256 = vmatprep.subr.mxu0 0.0
    %3257 = vmatpush1.msra.mxu0 0.0
    %3258 = vmatprep.subr.mxu0 0.0
    %3259 = vmatpush1.msra.mxu0 0.0
    %3260 = vmatprep.subr.mxu0 0.0
    %3261 = vmatpush1.msra.mxu0 0.0
    %3262 = vmatprep.subr.mxu0 0.0
    %3263 = vmatpush1.msra.mxu0 0.0
    %3264 = vmatprep.subr.mxu0 0.0
    %3265 = vmatpush1.msra.mxu0 0.0
    %3266 = vmatprep.subr.mxu0 0.0
    %3267 = vmatpush1.msra.mxu0 0.0
    %3268 = vmatprep.subr.mxu0 0.0
    %3269 = vmatpush1.msra.mxu0 0.0
    %3270 = vmatprep.subr.mxu0 0.0
    %3271 = vmatpush1.msra.mxu0 0.0
    %3272 = vmatprep.subr.mxu0 0.0
    %3273 = vmatpush1.msra.mxu0 0.0
    %3274 = vmatprep.subr.mxu0 0.0
    %3275 = vmatpush1.msra.mxu0 0.0
    %3276 = vmatprep.subr.mxu0 0.0
    %3277 = vmatpush1.msra.mxu0 0.0
    %3278 = vmatprep.subr.mxu0 0.0
    %3279 = vmatpush1.msra.mxu0 0.0
    %3280 = vmatprep.subr.mxu0 0.0
    %3281 = vmatpush1.msra.mxu0 0.0
    %3282 = vmatprep.subr.mxu0 0.0
    %3283 = vmatpush1.msra.mxu0 0.0
    %3284 = vmatprep.subr.mxu0 0.0
    %3285 = vmatpush1.msra.mxu0 0.0
    %3286 = vmatprep.subr.mxu0 0.0
    %3287 = vmatpush1.msra.mxu0 0.0
    %3288 = vmatprep.subr.mxu0 0.0
    %3289 = vmatpush1.msra.mxu0 0.0
    %3290 = vmatprep.subr.mxu0 0.0
    %3291 = vmatpush1.msra.mxu0 0.0
    %3292 = vmatprep.subr.mxu0 0.0
    %3293 = vmatpush1.msra.mxu0 0.0
    %3294 = vmatprep.subr.mxu0 0.0
    %3295 = vmatpush1.msra.mxu0 0.0
    %3296 = vmatprep.subr.mxu0 0.0
    %3297 = vmatpush1.msra.mxu0 0.0
    %3298 = vmatprep.subr.mxu0 0.0
    %3299 = vmatpush1.msra.mxu0 0.0
    %3300 = vmatprep.mubr.f32.mxu0 0.0
    %3301 = vmatmul.mubr.f32.gmra.mrb[0].mxu0 %v3234
    %v3302 = vpop.f32.mrb[0].mxu0
    %v3303 = vadd.f32 0.0, %v3302
    %v3304 = vpop.f32.mrb[0].mxu0
    %3305 = vdwg.mxu0
    %3307 = vrot.lane.b32.xlu0 %v2835, 8
    %v3308 = vpop.permute.xlu0 %3307
    %3311 = vrot.lane.b32.xlu0 %v3069, 16
    %v3312 = vpop.permute.xlu0 %3311
    %3315 = vrot.lane.b32.xlu0 %v3303, 24
    %v3316 = vpop.permute.xlu0 %3315
    %v3318 = vsel %vm331, %v2668, %v3308
    %v3319 = vsel %vm1145, %v3318, %v3312
    %v3320 = vsel %vm1147, %v3319, %v3316
    %v3322 = vsel %vm331, %v2397, 0
    %v3325 = vsel %vm331, %v2491, 0
    %3327 = vmatprep.subr.mxu0 0.0
    %3328 = vmatpush1.xpose.msra.mxu0 %v3325
    %3329 = vmatprep.subr.mxu0 0.0
    %3330 = vmatpush1.xpose.msra.mxu0 0.0
    %3331 = vmatprep.subr.mxu0 0.0
    %3332 = vmatpush1.xpose.msra.mxu0 0.0
    %3333 = vmatprep.subr.mxu0 0.0
    %3334 = vmatpush1.xpose.msra.mxu0 0.0
    %3335 = vmatprep.subr.mxu0 0.0
    %3336 = vmatpush1.xpose.msra.mxu0 0.0
    %3337 = vmatprep.subr.mxu0 0.0
    %3338 = vmatpush1.xpose.msra.mxu0 0.0
    %3339 = vmatprep.subr.mxu0 0.0
    %3340 = vmatpush1.xpose.msra.mxu0 0.0
    %3341 = vmatprep.subr.mxu0 0.0
    %3342 = vmatpush1.xpose.msra.mxu0 0.0
    %3343 = vmatprep.subr.mxu0 0.0
    %3344 = vmatpush1.xpose.msra.mxu0 0.0
    %3345 = vmatprep.subr.mxu0 0.0
    %3346 = vmatpush1.xpose.msra.mxu0 0.0
    %3347 = vmatprep.subr.mxu0 0.0
    %3348 = vmatpush1.xpose.msra.mxu0 0.0
    %3349 = vmatprep.subr.mxu0 0.0
    %3350 = vmatpush1.xpose.msra.mxu0 0.0
    %3351 = vmatprep.subr.mxu0 0.0
    %3352 = vmatpush1.xpose.msra.mxu0 0.0
    %3353 = vmatprep.subr.mxu0 0.0
    %3354 = vmatpush1.xpose.msra.mxu0 0.0
    %3355 = vmatprep.subr.mxu0 0.0
    %3356 = vmatpush1.xpose.msra.mxu0 0.0
    %3357 = vmatprep.subr.mxu0 0.0
    %3358 = vmatpush1.xpose.msra.mxu0 0.0
    %3359 = vmatprep.subr.mxu0 0.0
    %3360 = vmatpush1.xpose.msra.mxu0 0.0
    %3361 = vmatprep.subr.mxu0 0.0
    %3362 = vmatpush1.xpose.msra.mxu0 0.0
    %3363 = vmatprep.subr.mxu0 0.0
    %3364 = vmatpush1.xpose.msra.mxu0 0.0
    %3365 = vmatprep.subr.mxu0 0.0
    %3366 = vmatpush1.xpose.msra.mxu0 0.0
    %3367 = vmatprep.subr.mxu0 0.0
    %3368 = vmatpush1.xpose.msra.mxu0 0.0
    %3369 = vmatprep.subr.mxu0 0.0
    %3370 = vmatpush1.xpose.msra.mxu0 0.0
    %3371 = vmatprep.subr.mxu0 0.0
    %3372 = vmatpush1.xpose.msra.mxu0 0.0
    %3373 = vmatprep.subr.mxu0 0.0
    %3374 = vmatpush1.xpose.msra.mxu0 0.0
    %3375 = vmatprep.subr.mxu0 0.0
    %3376 = vmatpush1.xpose.msra.mxu0 0.0
    %3377 = vmatprep.subr.mxu0 0.0
    %3378 = vmatpush1.xpose.msra.mxu0 0.0
    %3379 = vmatprep.subr.mxu0 0.0
    %3380 = vmatpush1.xpose.msra.mxu0 0.0
    %3381 = vmatprep.subr.mxu0 0.0
    %3382 = vmatpush1.xpose.msra.mxu0 0.0
    %3383 = vmatprep.subr.mxu0 0.0
    %3384 = vmatpush1.xpose.msra.mxu0 0.0
    %3385 = vmatprep.subr.mxu0 0.0
    %3386 = vmatpush1.xpose.msra.mxu0 0.0
    %3387 = vmatprep.subr.mxu0 0.0
    %3388 = vmatpush1.xpose.msra.mxu0 0.0
    %3389 = vmatprep.subr.mxu0 0.0
    %3390 = vmatpush1.xpose.msra.mxu0 0.0
    %3391 = vmatprep.mubr.f32.mxu0 0.0
    %3392 = vmatmul.mubr.f32.gmra.mrb[0].mxu0 %v3322
    %v3393 = vpop.f32.mrb[0].mxu0
    %v3394 = vadd.f32 0.0, %v3393
    %v3395 = vpop.f32.mrb[0].mxu0
    %3396 = vdwg.mxu0
    %v3397 = vmul.f32 %v3394, 0.35355338
    %v3398 = vsel %vm92, -10000.0, %v3397
    %v3399 = vsel %vm331, %v3398, -inf
    %3400 = vmax.xlane.f32.xlu0 %v3399
    %v3401 = vpop.xlane.xlu0 %3400
    %v3402 = vsub.f32 %v3398, %v3401
    %v3403 = vmul.f32 %v3402, 1.442695
    %v3404 = vpow.pop %v3403
    %v3405 = vsel %vm331, %v3404, 0.0
    %3406 = vadd.xlane.f32.xlu0 %v3405
    %v3407 = vpop.xlane.xlu0 %3406
    %v3408 = vrcp.pop %v3407
    %v3409 = vmul.f32 %v3404, %v3408
    %3410 = vrot.lane.b32.xlu0 %v2491, 96
    %v3411 = vpop.permute.xlu0 %3410
    %v3414 = vsel %vm331, %v3409, 0
    %3416 = vmatprep.subr.mxu0 0.0
    %3417 = vmatpush1.msra.mxu0 %v3411
    %3418 = vmatprep.subr.mxu0 0.0
    %3419 = vmatpush1.msra.mxu0 0.0
    %3420 = vmatprep.subr.mxu0 0.0
    %3421 = vmatpush1.msra.mxu0 0.0
    %3422 = vmatprep.subr.mxu0 0.0
    %3423 = vmatpush1.msra.mxu0 0.0
    %3424 = vmatprep.subr.mxu0 0.0
    %3425 = vmatpush1.msra.mxu0 0.0
    %3426 = vmatprep.subr.mxu0 0.0
    %3427 = vmatpush1.msra.mxu0 0.0
    %3428 = vmatprep.subr.mxu0 0.0
    %3429 = vmatpush1.msra.mxu0 0.0
    %3430 = vmatprep.subr.mxu0 0.0
    %3431 = vmatpush1.msra.mxu0 0.0
    %3432 = vmatprep.subr.mxu0 0.0
    %3433 = vmatpush1.msra.mxu0 0.0
    %3434 = vmatprep.subr.mxu0 0.0
    %3435 = vmatpush1.msra.mxu0 0.0
    %3436 = vmatprep.subr.mxu0 0.0
    %3437 = vmatpush1.msra.mxu0 0.0
    %3438 = vmatprep.subr.mxu0 0.0
    %3439 = vmatpush1.msra.mxu0 0.0
    %3440 = vmatprep.subr.mxu0 0.0
    %3441 = vmatpush1.msra.mxu0 0.0
    %3442 = vmatprep.subr.mxu0 0.0
    %3443 = vmatpush1.msra.mxu0 0.0
    %3444 = vmatprep.subr.mxu0 0.0
    %3445 = vmatpush1.msra.mxu0 0.0
    %3446 = vmatprep.subr.mxu0 0.0
    %3447 = vmatpush1.msra.mxu0 0.0
    %3448 = vmatprep.subr.mxu0 0.0
    %3449 = vmatpush1.msra.mxu0 0.0
    %3450 = vmatprep.subr.mxu0 0.0
    %3451 = vmatpush1.msra.mxu0 0.0
    %3452 = vmatprep.subr.mxu0 0.0
    %3453 = vmatpush1.msra.mxu0 0.0
    %3454 = vmatprep.subr.mxu0 0.0
    %3455 = vmatpush1.msra.mxu0 0.0
    %3456 = vmatprep.subr.mxu0 0.0
    %3457 = vmatpush1.msra.mxu0 0.0
    %3458 = vmatprep.subr.mxu0 0.0
    %3459 = vmatpush1.msra.mxu0 0.0
    %3460 = vmatprep.subr.mxu0 0.0
    %3461 = vmatpush1.msra.mxu0 0.0
    %3462 = vmatprep.subr.mxu0 0.0
    %3463 = vmatpush1.msra.mxu0 0.0
    %3464 = vmatprep.subr.mxu0 0.0
    %3465 = vmatpush1.msra.mxu0 0.0
    %3466 = vmatprep.subr.mxu0 0.0
    %3467 = vmatpush1.msra.mxu0 0.0
    %3468 = vmatprep.subr.mxu0 0.0
    %3469 = vmatpush1.msra.mxu0 0.0
    %3470 = vmatprep.subr.mxu0 0.0
    %3471 = vmatpush1.msra.mxu0 0.0
    %3472 = vmatprep.subr.mxu0 0.0
    %3473 = vmatpush1.msra.mxu0 0.0
    %3474 = vmatprep.subr.mxu0 0.0
    %3475 = vmatpush1.msra.mxu0 0.0
    %3476 = vmatprep.subr.mxu0 0.0
    %3477 = vmatpush1.msra.mxu0 0.0
    %3478 = vmatprep.subr.mxu0 0.0
    %3479 = vmatpush1.msra.mxu0 0.0
    %3480 = vmatprep.mubr.f32.mxu0 0.0
    %3481 = vmatmul.mubr.f32.gmra.mrb[0].mxu0 %v3414
    %v3482 = vpop.f32.mrb[0].mxu0
    %v3483 = vadd.f32 0.0, %v3482
    %v3484 = vpop.f32.mrb[0].mxu0
    %3485 = vdwg.mxu0
    %3486 = vrot.lane.b32.xlu0 %v2397, 120
    %v3487 = vpop.permute.xlu0 %3486
    %3488 = vrot.lane.b32.xlu0 %v2491, 120
    %v3489 = vpop.permute.xlu0 %3488
    %v3490 = vsel %vm331, %v3487, 0
    %v3492 = vsel %vm331, %v3489, 0
    %3494 = vmatprep.subr.mxu0 0.0
    %3495 = vmatpush1.xpose.msra.mxu0 %v3492
    %3496 = vmatprep.subr.mxu0 0.0
    %3497 = vmatpush1.xpose.msra.mxu0 0.0
    %3498 = vmatprep.subr.mxu0 0.0
    %3499 = vmatpush1.xpose.msra.mxu0 0.0
    %3500 = vmatprep.subr.mxu0 0.0
    %3501 = vmatpush1.xpose.msra.mxu0 0.0
    %3502 = vmatprep.subr.mxu0 0.0
    %3503 = vmatpush1.xpose.msra.mxu0 0.0
    %3504 = vmatprep.subr.mxu0 0.0
    %3505 = vmatpush1.xpose.msra.mxu0 0.0
    %3506 = vmatprep.subr.mxu0 0.0
    %3507 = vmatpush1.xpose.msra.mxu0 0.0
    %3508 = vmatprep.subr.mxu0 0.0
    %3509 = vmatpush1.xpose.msra.mxu0 0.0
    %3510 = vmatprep.subr.mxu0 0.0
    %3511 = vmatpush1.xpose.msra.mxu0 0.0
    %3512 = vmatprep.subr.mxu0 0.0
    %3513 = vmatpush1.xpose.msra.mxu0 0.0
    %3514 = vmatprep.subr.mxu0 0.0
    %3515 = vmatpush1.xpose.msra.mxu0 0.0
    %3516 = vmatprep.subr.mxu0 0.0
    %3517 = vmatpush1.xpose.msra.mxu0 0.0
    %3518 = vmatprep.subr.mxu0 0.0
    %3519 = vmatpush1.xpose.msra.mxu0 0.0
    %3520 = vmatprep.subr.mxu0 0.0
    %3521 = vmatpush1.xpose.msra.mxu0 0.0
    %3522 = vmatprep.subr.mxu0 0.0
    %3523 = vmatpush1.xpose.msra.mxu0 0.0
    %3524 = vmatprep.subr.mxu0 0.0
    %3525 = vmatpush1.xpose.msra.mxu0 0.0
    %3526 = vmatprep.subr.mxu0 0.0
    %3527 = vmatpush1.xpose.msra.mxu0 0.0
    %3528 = vmatprep.subr.mxu0 0.0
    %3529 = vmatpush1.xpose.msra.mxu0 0.0
    %3530 = vmatprep.subr.mxu0 0.0
    %3531 = vmatpush1.xpose.msra.mxu0 0.0
    %3532 = vmatprep.subr.mxu0 0.0
    %3533 = vmatpush1.xpose.msra.mxu0 0.0
    %3534 = vmatprep.subr.mxu0 0.0
    %3535 = vmatpush1.xpose.msra.mxu0 0.0
    %3536 = vmatprep.subr.mxu0 0.0
    %3537 = vmatpush1.xpose.msra.mxu0 0.0
    %3538 = vmatprep.subr.mxu0 0.0
    %3539 = vmatpush1.xpose.msra.mxu0 0.0
    %3540 = vmatprep.subr.mxu0 0.0
    %3541 = vmatpush1.xpose.msra.mxu0 0.0
    %3542 = vmatprep.subr.mxu0 0.0
    %3543 = vmatpush1.xpose.msra.mxu0 0.0
    %3544 = vmatprep.subr.mxu0 0.0
    %3545 = vmatpush1.xpose.msra.mxu0 0.0
    %3546 = vmatprep.subr.mxu0 0.0
    %3547 = vmatpush1.xpose.msra.mxu0 0.0
    %3548 = vmatprep.subr.mxu0 0.0
    %3549 = vmatpush1.xpose.msra.mxu0 0.0
    %3550 = vmatprep.subr.mxu0 0.0
    %3551 = vmatpush1.xpose.msra.mxu0 0.0
    %3552 = vmatprep.subr.mxu0 0.0
    %3553 = vmatpush1.xpose.msra.mxu0 0.0
    %3554 = vmatprep.subr.mxu0 0.0
    %3555 = vmatpush1.xpose.msra.mxu0 0.0
    %3556 = vmatprep.subr.mxu0 0.0
    %3557 = vmatpush1.xpose.msra.mxu0 0.0
    %3558 = vmatprep.mubr.f32.mxu0 0.0
    %3559 = vmatmul.mubr.f32.gmra.mrb[0].mxu0 %v3490
    %v3560 = vpop.f32.mrb[0].mxu0
    %v3561 = vadd.f32 0.0, %v3560
    %v3562 = vpop.f32.mrb[0].mxu0
    %3563 = vdwg.mxu0
    %v3564 = vmul.f32 %v3561, 0.35355338
    %v3565 = vsel %vm92, -10000.0, %v3564
    %v3566 = vsel %vm331, %v3565, -inf
    %3567 = vmax.xlane.f32.xlu0 %v3566
    %v3568 = vpop.xlane.xlu0 %3567
    %v3569 = vsub.f32 %v3565, %v3568
    %v3570 = vmul.f32 %v3569, 1.442695
    %v3571 = vpow.pop %v3570
    %v3572 = vsel %vm331, %v3571, 0.0
    %3573 = vadd.xlane.f32.xlu0 %v3572
    %v3574 = vpop.xlane.xlu0 %3573
    %v3575 = vrcp.pop %v3574
    %v3576 = vmul.f32 %v3571, %v3575
    %3577 = vrot.lane.b32.xlu0 %v2491, 88
    %v3578 = vpop.permute.xlu0 %3577
    %v3581 = vsel %vm331, %v3576, 0
    %3583 = vmatprep.subr.mxu0 0.0
    %3584 = vmatpush1.msra.mxu0 %v3578
    %3585 = vmatprep.subr.mxu0 0.0
    %3586 = vmatpush1.msra.mxu0 0.0
    %3587 = vmatprep.subr.mxu0 0.0
    %3588 = vmatpush1.msra.mxu0 0.0
    %3589 = vmatprep.subr.mxu0 0.0
    %3590 = vmatpush1.msra.mxu0 0.0
    %3591 = vmatprep.subr.mxu0 0.0
    %3592 = vmatpush1.msra.mxu0 0.0
    %3593 = vmatprep.subr.mxu0 0.0
    %3594 = vmatpush1.msra.mxu0 0.0
    %3595 = vmatprep.subr.mxu0 0.0
    %3596 = vmatpush1.msra.mxu0 0.0
    %3597 = vmatprep.subr.mxu0 0.0
    %3598 = vmatpush1.msra.mxu0 0.0
    %3599 = vmatprep.subr.mxu0 0.0
    %3600 = vmatpush1.msra.mxu0 0.0
    %3601 = vmatprep.subr.mxu0 0.0
    %3602 = vmatpush1.msra.mxu0 0.0
    %3603 = vmatprep.subr.mxu0 0.0
    %3604 = vmatpush1.msra.mxu0 0.0
    %3605 = vmatprep.subr.mxu0 0.0
    %3606 = vmatpush1.msra.mxu0 0.0
    %3607 = vmatprep.subr.mxu0 0.0
    %3608 = vmatpush1.msra.mxu0 0.0
    %3609 = vmatprep.subr.mxu0 0.0
    %3610 = vmatpush1.msra.mxu0 0.0
    %3611 = vmatprep.subr.mxu0 0.0
    %3612 = vmatpush1.msra.mxu0 0.0
    %3613 = vmatprep.subr.mxu0 0.0
    %3614 = vmatpush1.msra.mxu0 0.0
    %3615 = vmatprep.subr.mxu0 0.0
    %3616 = vmatpush1.msra.mxu0 0.0
    %3617 = vmatprep.subr.mxu0 0.0
    %3618 = vmatpush1.msra.mxu0 0.0
    %3619 = vmatprep.subr.mxu0 0.0
    %3620 = vmatpush1.msra.mxu0 0.0
    %3621 = vmatprep.subr.mxu0 0.0
    %3622 = vmatpush1.msra.mxu0 0.0
    %3623 = vmatprep.subr.mxu0 0.0
    %3624 = vmatpush1.msra.mxu0 0.0
    %3625 = vmatprep.subr.mxu0 0.0
    %3626 = vmatpush1.msra.mxu0 0.0
    %3627 = vmatprep.subr.mxu0 0.0
    %3628 = vmatpush1.msra.mxu0 0.0
    %3629 = vmatprep.subr.mxu0 0.0
    %3630 = vmatpush1.msra.mxu0 0.0
    %3631 = vmatprep.subr.mxu0 0.0
    %3632 = vmatpush1.msra.mxu0 0.0
    %3633 = vmatprep.subr.mxu0 0.0
    %3634 = vmatpush1.msra.mxu0 0.0
    %3635 = vmatprep.subr.mxu0 0.0
    %3636 = vmatpush1.msra.mxu0 0.0
    %3637 = vmatprep.subr.mxu0 0.0
    %3638 = vmatpush1.msra.mxu0 0.0
    %3639 = vmatprep.subr.mxu0 0.0
    %3640 = vmatpush1.msra.mxu0 0.0
    %3641 = vmatprep.subr.mxu0 0.0
    %3642 = vmatpush1.msra.mxu0 0.0
    %3643 = vmatprep.subr.mxu0 0.0
    %3644 = vmatpush1.msra.mxu0 0.0
    %3645 = vmatprep.subr.mxu0 0.0
    %3646 = vmatpush1.msra.mxu0 0.0
    %3647 = vmatprep.mubr.f32.mxu0 0.0
    %3648 = vmatmul.mubr.f32.gmra.mrb[0].mxu0 %v3581
    %v3649 = vpop.f32.mrb[0].mxu0
    %v3650 = vadd.f32 0.0, %v3649
    %v3651 = vpop.f32.mrb[0].mxu0
    %3652 = vdwg.mxu0
    %v3653 = vadd.f32 %v2397, %v2840
    %v3654 = vadd.f32 %v2491, %v2845
    %3656 = vrot.lane.b32.xlu0 %v3653, 112
    %v3657 = vpop.permute.xlu0 %3656
    %3659 = vrot.lane.b32.xlu0 %v3654, 112
    %v3660 = vpop.permute.xlu0 %3659
    %v3661 = vsel %vm331, %v3657, 0
    %v3663 = vsel %vm331, %v3660, 0
    %3665 = vmatprep.subr.mxu0 0.0
    %3666 = vmatpush1.xpose.msra.mxu0 %v3663
    %3667 = vmatprep.subr.mxu0 0.0
    %3668 = vmatpush1.xpose.msra.mxu0 0.0
    %3669 = vmatprep.subr.mxu0 0.0
    %3670 = vmatpush1.xpose.msra.mxu0 0.0
    %3671 = vmatprep.subr.mxu0 0.0
    %3672 = vmatpush1.xpose.msra.mxu0 0.0
    %3673 = vmatprep.subr.mxu0 0.0
    %3674 = vmatpush1.xpose.msra.mxu0 0.0
    %3675 = vmatprep.subr.mxu0 0.0
    %3676 = vmatpush1.xpose.msra.mxu0 0.0
    %3677 = vmatprep.subr.mxu0 0.0
    %3678 = vmatpush1.xpose.msra.mxu0 0.0
    %3679 = vmatprep.subr.mxu0 0.0
    %3680 = vmatpush1.xpose.msra.mxu0 0.0
    %3681 = vmatprep.subr.mxu0 0.0
    %3682 = vmatpush1.xpose.msra.mxu0 0.0
    %3683 = vmatprep.subr.mxu0 0.0
    %3684 = vmatpush1.xpose.msra.mxu0 0.0
    %3685 = vmatprep.subr.mxu0 0.0
    %3686 = vmatpush1.xpose.msra.mxu0 0.0
    %3687 = vmatprep.subr.mxu0 0.0
    %3688 = vmatpush1.xpose.msra.mxu0 0.0
    %3689 = vmatprep.subr.mxu0 0.0
    %3690 = vmatpush1.xpose.msra.mxu0 0.0
    %3691 = vmatprep.subr.mxu0 0.0
    %3692 = vmatpush1.xpose.msra.mxu0 0.0
    %3693 = vmatprep.subr.mxu0 0.0
    %3694 = vmatpush1.xpose.msra.mxu0 0.0
    %3695 = vmatprep.subr.mxu0 0.0
    %3696 = vmatpush1.xpose.msra.mxu0 0.0
    %3697 = vmatprep.subr.mxu0 0.0
    %3698 = vmatpush1.xpose.msra.mxu0 0.0
    %3699 = vmatprep.subr.mxu0 0.0
    %3700 = vmatpush1.xpose.msra.mxu0 0.0
    %3701 = vmatprep.subr.mxu0 0.0
    %3702 = vmatpush1.xpose.msra.mxu0 0.0
    %3703 = vmatprep.subr.mxu0 0.0
    %3704 = vmatpush1.xpose.msra.mxu0 0.0
    %3705 = vmatprep.subr.mxu0 0.0
    %3706 = vmatpush1.xpose.msra.mxu0 0.0
    %3707 = vmatprep.subr.mxu0 0.0
    %3708 = vmatpush1.xpose.msra.mxu0 0.0
    %3709 = vmatprep.subr.mxu0 0.0
    %3710 = vmatpush1.xpose.msra.mxu0 0.0
    %3711 = vmatprep.subr.mxu0 0.0
    %3712 = vmatpush1.xpose.msra.mxu0 0.0
    %3713 = vmatprep.subr.mxu0 0.0
    %3714 = vmatpush1.xpose.msra.mxu0 0.0
    %3715 = vmatprep.subr.mxu0 0.0
    %3716 = vmatpush1.xpose.msra.mxu0 0.0
    %3717 = vmatprep.subr.mxu0 0.0
    %3718 = vmatpush1.xpose.msra.mxu0 0.0
    %3719 = vmatprep.subr.mxu0 0.0
    %3720 = vmatpush1.xpose.msra.mxu0 0.0
    %3721 = vmatprep.subr.mxu0 0.0
    %3722 = vmatpush1.xpose.msra.mxu0 0.0
    %3723 = vmatprep.subr.mxu0 0.0
    %3724 = vmatpush1.xpose.msra.mxu0 0.0
    %3725 = vmatprep.subr.mxu0 0.0
    %3726 = vmatpush1.xpose.msra.mxu0 0.0
    %3727 = vmatprep.subr.mxu0 0.0
    %3728 = vmatpush1.xpose.msra.mxu0 0.0
    %3729 = vmatprep.mubr.f32.mxu0 0.0
    %3730 = vmatmul.mubr.f32.gmra.mrb[0].mxu0 %v3661
    %v3731 = vpop.f32.mrb[0].mxu0
    %v3732 = vadd.f32 0.0, %v3731
    %v3733 = vpop.f32.mrb[0].mxu0
    %3734 = vdwg.mxu0
    %v3735 = vmul.f32 %v3732, 0.35355338
    %v3736 = vmul.f32 %v2491, %v2935
    %3738 = vrot.lane.b32.xlu0 %v3736, 80
    %v3739 = vpop.permute.xlu0 %3738
    %v3741 = vsel %vm331, %v3739, 0.0
    %3742 = vadd.xlane.f32.xlu0 %v3741
    %v3743 = vpop.xlane.xlu0 %3742
    %v3744 = vadd.f32 %v3735, %v2501
    %v3745 = vadd.f32 %v3744, %v3743
    %3746 = vxpose.xlu0.b32.start [1/16] %v3743, 128
    %3747 = vxpose.xlu0.b32.cont [2/16] 0.0, 128
    %3748 = vxpose.xlu0.b32.cont [3/16] 0.0, 128
    %3749 = vxpose.xlu0.b32.cont [4/16] 0.0, 128
    %3750 = vxpose.xlu0.b32.cont [5/16] 0.0, 128
    %3751 = vxpose.xlu0.b32.cont [6/16] 0.0, 128
    %3752 = vxpose.xlu0.b32.cont [7/16] 0.0, 128
    %3753 = vxpose.xlu0.b32.cont [8/16] 0.0, 128
    %3754 = vxpose.xlu0.b32.cont [9/16] 0.0, 128
    %3755 = vxpose.xlu0.b32.cont [10/16] 0.0, 128
    %3756 = vxpose.xlu0.b32.cont [11/16] 0.0, 128
    %3757 = vxpose.xlu0.b32.cont [12/16] 0.0, 128
    %3758 = vxpose.xlu0.b32.cont [13/16] 0.0, 128
    %3759 = vxpose.xlu0.b32.cont [14/16] 0.0, 128
    %3760 = vxpose.xlu0.b32.cont [15/16] 0.0, 128
    %3761 = vxpose.xlu0.b32.end [16/16] 0.0, 128
    %v3762 = vpop.trf.xlu0
    %v3763 = vpop.trf.xlu0
    %v3764 = vpop.trf.xlu0
    %v3765 = vpop.trf.xlu0
    %v3766 = vpop.trf.xlu0
    %v3767 = vpop.trf.xlu0
    %v3768 = vpop.trf.xlu0
    %v3769 = vpop.trf.xlu0
    %v3770 = vpop.trf.xlu0
    %v3771 = vpop.trf.xlu0
    %v3772 = vpop.trf.xlu0
    %v3773 = vpop.trf.xlu0
    %v3774 = vpop.trf.xlu0
    %v3775 = vpop.trf.xlu0
    %v3776 = vpop.trf.xlu0
    %v3777 = vpop.trf.xlu0
    %v3778 = vlaneseq
    %v3779 = vshrl.u32 %v3778, 7
    %v3780 = vsub.s32 0, %v3779
    %v3781 = vrot.slane %v3762, %v3780
    %v3782 = vadd.f32 %v3745, %v3781
    %v3783 = vsel %vm92, -10000.0, %v3782
    %v3784 = vsel %vm331, %v3783, -inf
    %3785 = vmax.xlane.f32.xlu0 %v3784
    %v3786 = vpop.xlane.xlu0 %3785
    %v3787 = vsub.f32 %v3783, %v3786
    %v3788 = vmul.f32 %v3787, 1.442695
    %v3789 = vpow.pop %v3788
    %v3790 = vsel %vm331, %v3789, 0.0
    %3791 = vadd.xlane.f32.xlu0 %v3790
    %v3792 = vpop.xlane.xlu0 %3791
    %v3793 = vrcp.pop %v3792
    %v3794 = vmul.f32 %v3789, %v3793
    %3795 = vrot.lane.b32.xlu0 %v2491, 80
    %v3796 = vpop.permute.xlu0 %3795
    %v3799 = vsel %vm331, %v3794, 0
    %3801 = vmatprep.subr.mxu0 0.0
    %3802 = vmatpush1.msra.mxu0 %v3796
    %3803 = vmatprep.subr.mxu0 0.0
    %3804 = vmatpush1.msra.mxu0 0.0
    %3805 = vmatprep.subr.mxu0 0.0
    %3806 = vmatpush1.msra.mxu0 0.0
    %3807 = vmatprep.subr.mxu0 0.0
    %3808 = vmatpush1.msra.mxu0 0.0
    %3809 = vmatprep.subr.mxu0 0.0
    %3810 = vmatpush1.msra.mxu0 0.0
    %3811 = vmatprep.subr.mxu0 0.0
    %3812 = vmatpush1.msra.mxu0 0.0
    %3813 = vmatprep.subr.mxu0 0.0
    %3814 = vmatpush1.msra.mxu0 0.0
    %3815 = vmatprep.subr.mxu0 0.0
    %3816 = vmatpush1.msra.mxu0 0.0
    %3817 = vmatprep.subr.mxu0 0.0
    %3818 = vmatpush1.msra.mxu0 0.0
    %3819 = vmatprep.subr.mxu0 0.0
    %3820 = vmatpush1.msra.mxu0 0.0
    %3821 = vmatprep.subr.mxu0 0.0
    %3822 = vmatpush1.msra.mxu0 0.0
    %3823 = vmatprep.subr.mxu0 0.0
    %3824 = vmatpush1.msra.mxu0 0.0
    %3825 = vmatprep.subr.mxu0 0.0
    %3826 = vmatpush1.msra.mxu0 0.0
    %3827 = vmatprep.subr.mxu0 0.0
    %3828 = vmatpush1.msra.mxu0 0.0
    %3829 = vmatprep.subr.mxu0 0.0
    %3830 = vmatpush1.msra.mxu0 0.0
    %3831 = vmatprep.subr.mxu0 0.0
    %3832 = vmatpush1.msra.mxu0 0.0
    %3833 = vmatprep.subr.mxu0 0.0
    %3834 = vmatpush1.msra.mxu0 0.0
    %3835 = vmatprep.subr.mxu0 0.0
    %3836 = vmatpush1.msra.mxu0 0.0
    %3837 = vmatprep.subr.mxu0 0.0
    %3838 = vmatpush1.msra.mxu0 0.0
    %3839 = vmatprep.subr.mxu0 0.0
    %3840 = vmatpush1.msra.mxu0 0.0
    %3841 = vmatprep.subr.mxu0 0.0
    %3842 = vmatpush1.msra.mxu0 0.0
    %3843 = vmatprep.subr.mxu0 0.0
    %3844 = vmatpush1.msra.mxu0 0.0
    %3845 = vmatprep.subr.mxu0 0.0
    %3846 = vmatpush1.msra.mxu0 0.0
    %3847 = vmatprep.subr.mxu0 0.0
    %3848 = vmatpush1.msra.mxu0 0.0
    %3849 = vmatprep.subr.mxu0 0.0
    %3850 = vmatpush1.msra.mxu0 0.0
    %3851 = vmatprep.subr.mxu0 0.0
    %3852 = vmatpush1.msra.mxu0 0.0
    %3853 = vmatprep.subr.mxu0 0.0
    %3854 = vmatpush1.msra.mxu0 0.0
    %3855 = vmatprep.subr.mxu0 0.0
    %3856 = vmatpush1.msra.mxu0 0.0
    %3857 = vmatprep.subr.mxu0 0.0
    %3858 = vmatpush1.msra.mxu0 0.0
    %3859 = vmatprep.subr.mxu0 0.0
    %3860 = vmatpush1.msra.mxu0 0.0
    %3861 = vmatprep.subr.mxu0 0.0
    %3862 = vmatpush1.msra.mxu0 0.0
    %3863 = vmatprep.subr.mxu0 0.0
    %3864 = vmatpush1.msra.mxu0 0.0
    %3865 = vmatprep.mubr.f32.mxu0 0.0
    %3866 = vmatmul.mubr.f32.gmra.mrb[0].mxu0 %v3799
    %v3867 = vpop.f32.mrb[0].mxu0
    %v3868 = vadd.f32 0.0, %v3867
    %v3869 = vpop.f32.mrb[0].mxu0
    %3870 = vdwg.mxu0
    %v3871 = vadd.f32 %v2397, %v3074
    %v3872 = vadd.f32 %v2491, %v3079
    %3874 = vrot.lane.b32.xlu0 %v3871, 104
    %v3875 = vpop.permute.xlu0 %3874
    %3877 = vrot.lane.b32.xlu0 %v3872, 104
    %v3878 = vpop.permute.xlu0 %3877
    %v3879 = vsel %vm331, %v3875, 0
    %v3881 = vsel %vm331, %v3878, 0
    %3883 = vmatprep.subr.mxu0 0.0
    %3884 = vmatpush1.xpose.msra.mxu0 %v3881
    %3885 = vmatprep.subr.mxu0 0.0
    %3886 = vmatpush1.xpose.msra.mxu0 0.0
    %3887 = vmatprep.subr.mxu0 0.0
    %3888 = vmatpush1.xpose.msra.mxu0 0.0
    %3889 = vmatprep.subr.mxu0 0.0
    %3890 = vmatpush1.xpose.msra.mxu0 0.0
    %3891 = vmatprep.subr.mxu0 0.0
    %3892 = vmatpush1.xpose.msra.mxu0 0.0
    %3893 = vmatprep.subr.mxu0 0.0
    %3894 = vmatpush1.xpose.msra.mxu0 0.0
    %3895 = vmatprep.subr.mxu0 0.0
    %3896 = vmatpush1.xpose.msra.mxu0 0.0
    %3897 = vmatprep.subr.mxu0 0.0
    %3898 = vmatpush1.xpose.msra.mxu0 0.0
    %3899 = vmatprep.subr.mxu0 0.0
    %3900 = vmatpush1.xpose.msra.mxu0 0.0
    %3901 = vmatprep.subr.mxu0 0.0
    %3902 = vmatpush1.xpose.msra.mxu0 0.0
    %3903 = vmatprep.subr.mxu0 0.0
    %3904 = vmatpush1.xpose.msra.mxu0 0.0
    %3905 = vmatprep.subr.mxu0 0.0
    %3906 = vmatpush1.xpose.msra.mxu0 0.0
    %3907 = vmatprep.subr.mxu0 0.0
    %3908 = vmatpush1.xpose.msra.mxu0 0.0
    %3909 = vmatprep.subr.mxu0 0.0
    %3910 = vmatpush1.xpose.msra.mxu0 0.0
    %3911 = vmatprep.subr.mxu0 0.0
    %3912 = vmatpush1.xpose.msra.mxu0 0.0
    %3913 = vmatprep.subr.mxu0 0.0
    %3914 = vmatpush1.xpose.msra.mxu0 0.0
    %3915 = vmatprep.subr.mxu0 0.0
    %3916 = vmatpush1.xpose.msra.mxu0 0.0
    %3917 = vmatprep.subr.mxu0 0.0
    %3918 = vmatpush1.xpose.msra.mxu0 0.0
    %3919 = vmatprep.subr.mxu0 0.0
    %3920 = vmatpush1.xpose.msra.mxu0 0.0
    %3921 = vmatprep.subr.mxu0 0.0
    %3922 = vmatpush1.xpose.msra.mxu0 0.0
    %3923 = vmatprep.subr.mxu0 0.0
    %3924 = vmatpush1.xpose.msra.mxu0 0.0
    %3925 = vmatprep.subr.mxu0 0.0
    %3926 = vmatpush1.xpose.msra.mxu0 0.0
    %3927 = vmatprep.subr.mxu0 0.0
    %3928 = vmatpush1.xpose.msra.mxu0 0.0
    %3929 = vmatprep.subr.mxu0 0.0
    %3930 = vmatpush1.xpose.msra.mxu0 0.0
    %3931 = vmatprep.subr.mxu0 0.0
    %3932 = vmatpush1.xpose.msra.mxu0 0.0
    %3933 = vmatprep.subr.mxu0 0.0
    %3934 = vmatpush1.xpose.msra.mxu0 0.0
    %3935 = vmatprep.subr.mxu0 0.0
    %3936 = vmatpush1.xpose.msra.mxu0 0.0
    %3937 = vmatprep.subr.mxu0 0.0
    %3938 = vmatpush1.xpose.msra.mxu0 0.0
    %3939 = vmatprep.subr.mxu0 0.0
    %3940 = vmatpush1.xpose.msra.mxu0 0.0
    %3941 = vmatprep.subr.mxu0 0.0
    %3942 = vmatpush1.xpose.msra.mxu0 0.0
    %3943 = vmatprep.subr.mxu0 0.0
    %3944 = vmatpush1.xpose.msra.mxu0 0.0
    %3945 = vmatprep.subr.mxu0 0.0
    %3946 = vmatpush1.xpose.msra.mxu0 0.0
    %3947 = vmatprep.mubr.f32.mxu0 0.0
    %3948 = vmatmul.mubr.f32.gmra.mrb[0].mxu0 %v3879
    %v3949 = vpop.f32.mrb[0].mxu0
    %v3950 = vadd.f32 0.0, %v3949
    %v3951 = vpop.f32.mrb[0].mxu0
    %3952 = vdwg.mxu0
    %v3953 = vmul.f32 %v3950, 0.35355338
    %v3954 = vmul.f32 %v2491, %v3169
    %3956 = vrot.lane.b32.xlu0 %v3954, 72
    %v3957 = vpop.permute.xlu0 %3956
    %v3959 = vsel %vm331, %v3957, 0.0
    %3960 = vadd.xlane.f32.xlu0 %v3959
    %v3961 = vpop.xlane.xlu0 %3960
    %v3962 = vadd.f32 %v3953, %v2502
    %v3963 = vadd.f32 %v3962, %v3961
    %3964 = vxpose.xlu0.b32.start [1/16] %v3961, 128
    %3965 = vxpose.xlu0.b32.cont [2/16] 0.0, 128
    %3966 = vxpose.xlu0.b32.cont [3/16] 0.0, 128
    %3967 = vxpose.xlu0.b32.cont [4/16] 0.0, 128
    %3968 = vxpose.xlu0.b32.cont [5/16] 0.0, 128
    %3969 = vxpose.xlu0.b32.cont [6/16] 0.0, 128
    %3970 = vxpose.xlu0.b32.cont [7/16] 0.0, 128
    %3971 = vxpose.xlu0.b32.cont [8/16] 0.0, 128
    %3972 = vxpose.xlu0.b32.cont [9/16] 0.0, 128
    %3973 = vxpose.xlu0.b32.cont [10/16] 0.0, 128
    %3974 = vxpose.xlu0.b32.cont [11/16] 0.0, 128
    %3975 = vxpose.xlu0.b32.cont [12/16] 0.0, 128
    %3976 = vxpose.xlu0.b32.cont [13/16] 0.0, 128
    %3977 = vxpose.xlu0.b32.cont [14/16] 0.0, 128
    %3978 = vxpose.xlu0.b32.cont [15/16] 0.0, 128
    %3979 = vxpose.xlu0.b32.end [16/16] 0.0, 128
    %v3980 = vpop.trf.xlu0
    %v3981 = vpop.trf.xlu0
    %v3982 = vpop.trf.xlu0
    %v3983 = vpop.trf.xlu0
    %v3984 = vpop.trf.xlu0
    %v3985 = vpop.trf.xlu0
    %v3986 = vpop.trf.xlu0
    %v3987 = vpop.trf.xlu0
    %v3988 = vpop.trf.xlu0
    %v3989 = vpop.trf.xlu0
    %v3990 = vpop.trf.xlu0
    %v3991 = vpop.trf.xlu0
    %v3992 = vpop.trf.xlu0
    %v3993 = vpop.trf.xlu0
    %v3994 = vpop.trf.xlu0
    %v3995 = vpop.trf.xlu0
    %v3996 = vlaneseq
    %v3997 = vshrl.u32 %v3996, 7
    %v3998 = vsub.s32 0, %v3997
    %v3999 = vrot.slane %v3980, %v3998
    %v4000 = vadd.f32 %v3963, %v3999
    %v4001 = vsel %vm92, -10000.0, %v4000
    %v4002 = vsel %vm331, %v4001, -inf
    %4003 = vmax.xlane.f32.xlu0 %v4002
    %v4004 = vpop.xlane.xlu0 %4003
    %v4005 = vsub.f32 %v4001, %v4004
    %v4006 = vmul.f32 %v4005, 1.442695
    %v4007 = vpow.pop %v4006
    %v4008 = vsel %vm331, %v4007, 0.0
    %4009 = vadd.xlane.f32.xlu0 %v4008
    %v4010 = vpop.xlane.xlu0 %4009
    %v4011 = vrcp.pop %v4010
    %v4012 = vmul.f32 %v4007, %v4011
    %4013 = vrot.lane.b32.xlu0 %v2491, 72
    %v4014 = vpop.permute.xlu0 %4013
    %v4017 = vsel %vm331, %v4012, 0
    %4019 = vmatprep.subr.mxu0 0.0
    %4020 = vmatpush1.msra.mxu0 %v4014
    %4021 = vmatprep.subr.mxu0 0.0
    %4022 = vmatpush1.msra.mxu0 0.0
    %4023 = vmatprep.subr.mxu0 0.0
    %4024 = vmatpush1.msra.mxu0 0.0
    %4025 = vmatprep.subr.mxu0 0.0
    %4026 = vmatpush1.msra.mxu0 0.0
    %4027 = vmatprep.subr.mxu0 0.0
    %4028 = vmatpush1.msra.mxu0 0.0
    %4029 = vmatprep.subr.mxu0 0.0
    %4030 = vmatpush1.msra.mxu0 0.0
    %4031 = vmatprep.subr.mxu0 0.0
    %4032 = vmatpush1.msra.mxu0 0.0
    %4033 = vmatprep.subr.mxu0 0.0
    %4034 = vmatpush1.msra.mxu0 0.0
    %4035 = vmatprep.subr.mxu0 0.0
    %4036 = vmatpush1.msra.mxu0 0.0
    %4037 = vmatprep.subr.mxu0 0.0
    %4038 = vmatpush1.msra.mxu0 0.0
    %4039 = vmatprep.subr.mxu0 0.0
    %4040 = vmatpush1.msra.mxu0 0.0
    %4041 = vmatprep.subr.mxu0 0.0
    %4042 = vmatpush1.msra.mxu0 0.0
    %4043 = vmatprep.subr.mxu0 0.0
    %4044 = vmatpush1.msra.mxu0 0.0
    %4045 = vmatprep.subr.mxu0 0.0
    %4046 = vmatpush1.msra.mxu0 0.0
    %4047 = vmatprep.subr.mxu0 0.0
    %4048 = vmatpush1.msra.mxu0 0.0
    %4049 = vmatprep.subr.mxu0 0.0
    %4050 = vmatpush1.msra.mxu0 0.0
    %4051 = vmatprep.subr.mxu0 0.0
    %4052 = vmatpush1.msra.mxu0 0.0
    %4053 = vmatprep.subr.mxu0 0.0
    %4054 = vmatpush1.msra.mxu0 0.0
    %4055 = vmatprep.subr.mxu0 0.0
    %4056 = vmatpush1.msra.mxu0 0.0
    %4057 = vmatprep.subr.mxu0 0.0
    %4058 = vmatpush1.msra.mxu0 0.0
    %4059 = vmatprep.subr.mxu0 0.0
    %4060 = vmatpush1.msra.mxu0 0.0
    %4061 = vmatprep.subr.mxu0 0.0
    %4062 = vmatpush1.msra.mxu0 0.0
    %4063 = vmatprep.subr.mxu0 0.0
    %4064 = vmatpush1.msra.mxu0 0.0
    %4065 = vmatprep.subr.mxu0 0.0
    %4066 = vmatpush1.msra.mxu0 0.0
    %4067 = vmatprep.subr.mxu0 0.0
    %4068 = vmatpush1.msra.mxu0 0.0
    %4069 = vmatprep.subr.mxu0 0.0
    %4070 = vmatpush1.msra.mxu0 0.0
    %4071 = vmatprep.subr.mxu0 0.0
    %4072 = vmatpush1.msra.mxu0 0.0
    %4073 = vmatprep.subr.mxu0 0.0
    %4074 = vmatpush1.msra.mxu0 0.0
    %4075 = vmatprep.subr.mxu0 0.0
    %4076 = vmatpush1.msra.mxu0 0.0
    %4077 = vmatprep.subr.mxu0 0.0
    %4078 = vmatpush1.msra.mxu0 0.0
    %4079 = vmatprep.subr.mxu0 0.0
    %4080 = vmatpush1.msra.mxu0 0.0
    %4081 = vmatprep.subr.mxu0 0.0
    %4082 = vmatpush1.msra.mxu0 0.0
    %4083 = vmatprep.mubr.f32.mxu0 0.0
    %4084 = vmatmul.mubr.f32.gmra.mrb[0].mxu0 %v4017
    %v4085 = vpop.f32.mrb[0].mxu0
    %v4086 = vadd.f32 0.0, %v4085
    %v4087 = vpop.f32.mrb[0].mxu0
    %4088 = vdwg.mxu0
    %4090 = vrot.lane.b32.xlu0 %v3650, 8
    %v4091 = vpop.permute.xlu0 %4090
    %4094 = vrot.lane.b32.xlu0 %v3868, 16
    %v4095 = vpop.permute.xlu0 %4094
    %4098 = vrot.lane.b32.xlu0 %v4086, 24
    %v4099 = vpop.permute.xlu0 %4098
    %v4101 = vsel %vm331, %v3483, %v4091
    %v4102 = vsel %vm1145, %v4101, %v4095
    %v4103 = vsel %vm1147, %v4102, %v4099
    %s4104 = scalar_lea.vmem %s8, 32
    %v4105 = vld [vmem:[%s4104] sm:$0xff]
    %v4106 = vld [vmem:[%s4104 + $0x8] sm:$0xff]
    %v4107 = vld [vmem:[%s4104 + $0x10] sm:$0xff]
    %v4108 = vld [vmem:[%s4104 + $0x18] sm:$0xff]
    %s4109 = scalar_lea.vmem %s9, 1
    %v4110 = vld [vmem:[%s4109] sm:$0x1]
    %v4112 = vlaneseq
    %v4113 = vshrl.u32 %v4112, 7
    %v4114 = vsub.s32 0, %v4113
    %v4115 = vrot.slane %v4110, %v4114
    %v4118 = vsel %vm95, %v3320, 0
    %v4121 = vsel %vm95, %v4103, 0
    %4123 = vmatprep.subr.mxu0 0.0
    %4124 = vmatpush1.msra.mxu0 %v4105
    %4125 = vmatprep.subr.mxu0 0.0
    %4126 = vmatpush1.msra.mxu0 %v4106
    %4127 = vmatprep.subr.mxu0 0.0
    %4128 = vmatpush1.msra.mxu0 %v4107
    %4129 = vmatprep.subr.mxu0 0.0
    %4130 = vmatpush1.msra.mxu0 %v4108
    %4131 = vmatprep.subr.mxu0 0.0
    %4132 = vmatpush1.msra.mxu0 0.0
    %4133 = vmatprep.subr.mxu0 0.0
    %4134 = vmatpush1.msra.mxu0 0.0
    %4135 = vmatprep.subr.mxu0 0.0
    %4136 = vmatpush1.msra.mxu0 0.0
    %4137 = vmatprep.subr.mxu0 0.0
    %4138 = vmatpush1.msra.mxu0 0.0
    %4139 = vmatprep.subr.mxu0 0.0
    %4140 = vmatpush1.msra.mxu0 0.0
    %4141 = vmatprep.subr.mxu0 0.0
    %4142 = vmatpush1.msra.mxu0 0.0
    %4143 = vmatprep.subr.mxu0 0.0
    %4144 = vmatpush1.msra.mxu0 0.0
    %4145 = vmatprep.subr.mxu0 0.0
    %4146 = vmatpush1.msra.mxu0 0.0
    %4147 = vmatprep.subr.mxu0 0.0
    %4148 = vmatpush1.msra.mxu0 0.0
    %4149 = vmatprep.subr.mxu0 0.0
    %4150 = vmatpush1.msra.mxu0 0.0
    %4151 = vmatprep.subr.mxu0 0.0
    %4152 = vmatpush1.msra.mxu0 0.0
    %4153 = vmatprep.subr.mxu0 0.0
    %4154 = vmatpush1.msra.mxu0 0.0
    %4155 = vmatprep.subr.mxu0 0.0
    %4156 = vmatpush1.msra.mxu0 0.0
    %4157 = vmatprep.subr.mxu0 0.0
    %4158 = vmatpush1.msra.mxu0 0.0
    %4159 = vmatprep.subr.mxu0 0.0
    %4160 = vmatpush1.msra.mxu0 0.0
    %4161 = vmatprep.subr.mxu0 0.0
    %4162 = vmatpush1.msra.mxu0 0.0
    %4163 = vmatprep.subr.mxu0 0.0
    %4164 = vmatpush1.msra.mxu0 0.0
    %4165 = vmatprep.subr.mxu0 0.0
    %4166 = vmatpush1.msra.mxu0 0.0
    %4167 = vmatprep.subr.mxu0 0.0
    %4168 = vmatpush1.msra.mxu0 0.0
    %4169 = vmatprep.subr.mxu0 0.0
    %4170 = vmatpush1.msra.mxu0 0.0
    %4171 = vmatprep.subr.mxu0 0.0
    %4172 = vmatpush1.msra.mxu0 0.0
    %4173 = vmatprep.subr.mxu0 0.0
    %4174 = vmatpush1.msra.mxu0 0.0
    %4175 = vmatprep.subr.mxu0 0.0
    %4176 = vmatpush1.msra.mxu0 0.0
    %4177 = vmatprep.subr.mxu0 0.0
    %4178 = vmatpush1.msra.mxu0 0.0
    %4179 = vmatprep.subr.mxu0 0.0
    %4180 = vmatpush1.msra.mxu0 0.0
    %4181 = vmatprep.subr.mxu0 0.0
    %4182 = vmatpush1.msra.mxu0 0.0
    %4183 = vmatprep.subr.mxu0 0.0
    %4184 = vmatpush1.msra.mxu0 0.0
    %4185 = vmatprep.subr.mxu0 0.0
    %4186 = vmatpush1.msra.mxu0 0.0
    %4187 = vmatprep.mubr.f32.mxu0 0.0
    %4188 = vmatmul.mubr.f32.gmra.mrb[0].mxu0 %v4118
    %v4189 = vpop.f32.mrb[0].mxu0
    %v4190 = vadd.f32 %v4115, %v4189
    %v4191 = vpop.f32.mrb[0].mxu0
    %4192 = vmatprep.mubr.f32.mxu0 0.0
    %4193 = vmatmul.mubr.f32.gmra.mrb[0].mxu0 %v4121
    %v4194 = vpop.f32.mrb[0].mxu0
    %v4195 = vadd.f32 %v4115, %v4194
    %v4196 = vpop.f32.mrb[0].mxu0
    %4197 = vdwg.mxu0
    %v4198 = vadd.f32 %v2304, %v4190
    %v4199 = vadd.f32 %v2305, %v4195
    %s4200 = scalar_lea.vmem %s10, 1
    %v4201 = vld [vmem:[%s4200] sm:$0x1]
    %s4202 = scalar_lea.vmem %s11, 1
    %v4203 = vld [vmem:[%s4202] sm:$0x1]
    %v4204 = vsel %vm95, %v4198, 0.0
    %4205 = vadd.xlane.f32.xlu0 %v4204
    %v4206 = vpop.xlane.xlu0 %4205
    %v4207 = vsel %vm95, %v4199, 0.0
    %4208 = vadd.xlane.f32.xlu0 %v4207
    %v4209 = vpop.xlane.xlu0 %4208
    %v4210 = vmul.f32 %v4206, %v102
    %v4211 = vmul.f32 %v4209, %v102
    %v4212 = vsub.f32 %v4198, %v4210
    %v4213 = vsub.f32 %v4199, %v4211
    %v4214 = vmul.f32 %v4212, %v4212
    %v4215 = vmul.f32 %v4213, %v4213
    %v4216 = vsel %vm95, %v4214, 0.0
    %4217 = vadd.xlane.f32.xlu0 %v4216
    %v4218 = vpop.xlane.xlu0 %4217
    %v4219 = vsel %vm95, %v4215, 0.0
    %4220 = vadd.xlane.f32.xlu0 %v4219
    %v4221 = vpop.xlane.xlu0 %4220
    %v4222 = vmul.f32 %v4218, %v102
    %v4223 = vmul.f32 %v4221, %v102
    %v4224 = vadd.f32 %v4222, 1e-08
    %v4225 = vadd.f32 %v4223, 1e-08
    %v4226 = vrsqrt.pop %v4224
    %v4227 = vrsqrt.pop %v4225
    %v4228 = vmul.f32 %v4212, %v4226
    %v4229 = vmul.f32 %v4213, %v4227
    %v4231 = vlaneseq
    %v4232 = vshrl.u32 %v4231, 7
    %v4233 = vsub.s32 0, %v4232
    %v4234 = vrot.slane %v4201, %v4233
    %v4236 = vmul.f32 %v4228, %v4234
    %v4237 = vmul.f32 %v4229, %v4234
    %v4239 = vlaneseq
    %v4240 = vshrl.u32 %v4239, 7
    %v4241 = vsub.s32 0, %v4240
    %v4242 = vrot.slane %v4203, %v4241
    %v4244 = vadd.f32 %v4236, %v4242
    %v4245 = vadd.f32 %v4237, %v4242
    %s4246 = scalar_lea.vmem %s12, 32
    %v4247 = vld [vmem:[%s4246] sm:$0xff]
    %v4248 = vld [vmem:[%s4246 + $0x8] sm:$0xff]
    %v4249 = vld [vmem:[%s4246 + $0x10] sm:$0xff]
    %v4250 = vld [vmem:[%s4246 + $0x18] sm:$0xff]
    %s4251 = scalar_lea.vmem %s13, 1
    %v4252 = vld [vmem:[%s4251] sm:$0x1]
    %v4254 = vlaneseq
    %v4255 = vshrl.u32 %v4254, 7
    %v4256 = vsub.s32 0, %v4255
    %v4257 = vrot.slane %v4252, %v4256
    %v4260 = vsel %vm95, %v4244, 0
    %v4263 = vsel %vm95, %v4245, 0
    %4265 = vmatprep.subr.mxu0 0.0
    %4266 = vmatpush1.msra.mxu0 %v4247
    %4267 = vmatprep.subr.mxu0 0.0
    %4268 = vmatpush1.msra.mxu0 %v4248
    %4269 = vmatprep.subr.mxu0 0.0
    %4270 = vmatpush1.msra.mxu0 %v4249
    %4271 = vmatprep.subr.mxu0 0.0
    %4272 = vmatpush1.msra.mxu0 %v4250
    %4273 = vmatprep.subr.mxu0 0.0
    %4274 = vmatpush1.msra.mxu0 0.0
    %4275 = vmatprep.subr.mxu0 0.0
    %4276 = vmatpush1.msra.mxu0 0.0
    %4277 = vmatprep.subr.mxu0 0.0
    %4278 = vmatpush1.msra.mxu0 0.0
    %4279 = vmatprep.subr.mxu0 0.0
    %4280 = vmatpush1.msra.mxu0 0.0
    %4281 = vmatprep.subr.mxu0 0.0
    %4282 = vmatpush1.msra.mxu0 0.0
    %4283 = vmatprep.subr.mxu0 0.0
    %4284 = vmatpush1.msra.mxu0 0.0
    %4285 = vmatprep.subr.mxu0 0.0
    %4286 = vmatpush1.msra.mxu0 0.0
    %4287 = vmatprep.subr.mxu0 0.0
    %4288 = vmatpush1.msra.mxu0 0.0
    %4289 = vmatprep.subr.mxu0 0.0
    %4290 = vmatpush1.msra.mxu0 0.0
    %4291 = vmatprep.subr.mxu0 0.0
    %4292 = vmatpush1.msra.mxu0 0.0
    %4293 = vmatprep.subr.mxu0 0.0
    %4294 = vmatpush1.msra.mxu0 0.0
    %4295 = vmatprep.subr.mxu0 0.0
    %4296 = vmatpush1.msra.mxu0 0.0
    %4297 = vmatprep.subr.mxu0 0.0
    %4298 = vmatpush1.msra.mxu0 0.0
    %4299 = vmatprep.subr.mxu0 0.0
    %4300 = vmatpush1.msra.mxu0 0.0
    %4301 = vmatprep.subr.mxu0 0.0
    %4302 = vmatpush1.msra.mxu0 0.0
    %4303 = vmatprep.subr.mxu0 0.0
    %4304 = vmatpush1.msra.mxu0 0.0
    %4305 = vmatprep.subr.mxu0 0.0
    %4306 = vmatpush1.msra.mxu0 0.0
    %4307 = vmatprep.subr.mxu0 0.0
    %4308 = vmatpush1.msra.mxu0 0.0
    %4309 = vmatprep.subr.mxu0 0.0
    %4310 = vmatpush1.msra.mxu0 0.0
    %4311 = vmatprep.subr.mxu0 0.0
    %4312 = vmatpush1.msra.mxu0 0.0
    %4313 = vmatprep.subr.mxu0 0.0
    %4314 = vmatpush1.msra.mxu0 0.0
    %4315 = vmatprep.subr.mxu0 0.0
    %4316 = vmatpush1.msra.mxu0 0.0
    %4317 = vmatprep.subr.mxu0 0.0
    %4318 = vmatpush1.msra.mxu0 0.0
    %4319 = vmatprep.subr.mxu0 0.0
    %4320 = vmatpush1.msra.mxu0 0.0
    %4321 = vmatprep.subr.mxu0 0.0
    %4322 = vmatpush1.msra.mxu0 0.0
    %4323 = vmatprep.subr.mxu0 0.0
    %4324 = vmatpush1.msra.mxu0 0.0
    %4325 = vmatprep.subr.mxu0 0.0
    %4326 = vmatpush1.msra.mxu0 0.0
    %4327 = vmatprep.subr.mxu0 0.0
    %4328 = vmatpush1.msra.mxu0 0.0
    %4329 = vmatprep.mubr.f32.mxu0 0.0
    %4330 = vmatmul.mubr.f32.gmra.mrb[0].mxu0 %v4260
    %v4331 = vpop.f32.mrb[0].mxu0
    %v4332 = vadd.f32 %v4257, %v4331
    %v4333 = vpop.f32.mrb[0].mxu0
    %4334 = vmatprep.mubr.f32.mxu0 0.0
    %4335 = vmatmul.mubr.f32.gmra.mrb[0].mxu0 %v4263
    %v4336 = vpop.f32.mrb[0].mxu0
    %v4337 = vadd.f32 %v4257, %v4336
    %v4338 = vpop.f32.mrb[0].mxu0
    %4339 = vdwg.mxu0
    %v4340 = vmax.f32 %v4332, 0.0
    %v4341 = vmax.f32 %v4337, 0.0
    %s4342 = scalar_lea.vmem %s14, 32
    %v4343 = vld [vmem:[%s4342] sm:$0xff]
    %v4344 = vld [vmem:[%s4342 + $0x8] sm:$0xff]
    %v4345 = vld [vmem:[%s4342 + $0x10] sm:$0xff]
    %v4346 = vld [vmem:[%s4342 + $0x18] sm:$0xff]
    %s4347 = scalar_lea.vmem %s15, 1
    %v4348 = vld [vmem:[%s4347] sm:$0x1]
    %v4350 = vlaneseq
    %v4351 = vshrl.u32 %v4350, 7
    %v4352 = vsub.s32 0, %v4351
    %v4353 = vrot.slane %v4348, %v4352
    %v4356 = vsel %vm95, %v4340, 0
    %v4359 = vsel %vm95, %v4341, 0
    %4361 = vmatprep.subr.mxu0 0.0
    %4362 = vmatpush1.msra.mxu0 %v4343
    %4363 = vmatprep.subr.mxu0 0.0
    %4364 = vmatpush1.msra.mxu0 %v4344
    %4365 = vmatprep.subr.mxu0 0.0
    %4366 = vmatpush1.msra.mxu0 %v4345
    %4367 = vmatprep.subr.mxu0 0.0
    %4368 = vmatpush1.msra.mxu0 %v4346
    %4369 = vmatprep.subr.mxu0 0.0
    %4370 = vmatpush1.msra.mxu0 0.0
    %4371 = vmatprep.subr.mxu0 0.0
    %4372 = vmatpush1.msra.mxu0 0.0
    %4373 = vmatprep.subr.mxu0 0.0
    %4374 = vmatpush1.msra.mxu0 0.0
    %4375 = vmatprep.subr.mxu0 0.0
    %4376 = vmatpush1.msra.mxu0 0.0
    %4377 = vmatprep.subr.mxu0 0.0
    %4378 = vmatpush1.msra.mxu0 0.0
    %4379 = vmatprep.subr.mxu0 0.0
    %4380 = vmatpush1.msra.mxu0 0.0
    %4381 = vmatprep.subr.mxu0 0.0
    %4382 = vmatpush1.msra.mxu0 0.0
    %4383 = vmatprep.subr.mxu0 0.0
    %4384 = vmatpush1.msra.mxu0 0.0
    %4385 = vmatprep.subr.mxu0 0.0
    %4386 = vmatpush1.msra.mxu0 0.0
    %4387 = vmatprep.subr.mxu0 0.0
    %4388 = vmatpush1.msra.mxu0 0.0
    %4389 = vmatprep.subr.mxu0 0.0
    %4390 = vmatpush1.msra.mxu0 0.0
    %4391 = vmatprep.subr.mxu0 0.0
    %4392 = vmatpush1.msra.mxu0 0.0
    %4393 = vmatprep.subr.mxu0 0.0
    %4394 = vmatpush1.msra.mxu0 0.0
    %4395 = vmatprep.subr.mxu0 0.0
    %4396 = vmatpush1.msra.mxu0 0.0
    %4397 = vmatprep.subr.mxu0 0.0
    %4398 = vmatpush1.msra.mxu0 0.0
    %4399 = vmatprep.subr.mxu0 0.0
    %4400 = vmatpush1.msra.mxu0 0.0
    %4401 = vmatprep.subr.mxu0 0.0
    %4402 = vmatpush1.msra.mxu0 0.0
    %4403 = vmatprep.subr.mxu0 0.0
    %4404 = vmatpush1.msra.mxu0 0.0
    %4405 = vmatprep.subr.mxu0 0.0
    %4406 = vmatpush1.msra.mxu0 0.0
    %4407 = vmatprep.subr.mxu0 0.0
    %4408 = vmatpush1.msra.mxu0 0.0
    %4409 = vmatprep.subr.mxu0 0.0
    %4410 = vmatpush1.msra.mxu0 0.0
    %4411 = vmatprep.subr.mxu0 0.0
    %4412 = vmatpush1.msra.mxu0 0.0
    %4413 = vmatprep.subr.mxu0 0.0
    %4414 = vmatpush1.msra.mxu0 0.0
    %4415 = vmatprep.subr.mxu0 0.0
    %4416 = vmatpush1.msra.mxu0 0.0
    %4417 = vmatprep.subr.mxu0 0.0
    %4418 = vmatpush1.msra.mxu0 0.0
    %4419 = vmatprep.subr.mxu0 0.0
    %4420 = vmatpush1.msra.mxu0 0.0
    %4421 = vmatprep.subr.mxu0 0.0
    %4422 = vmatpush1.msra.mxu0 0.0
    %4423 = vmatprep.subr.mxu0 0.0
    %4424 = vmatpush1.msra.mxu0 0.0
    %4425 = vmatprep.mubr.f32.mxu0 0.0
    %4426 = vmatmul.mubr.f32.gmra.mrb[0].mxu0 %v4356
    %v4427 = vpop.f32.mrb[0].mxu0
    %v4428 = vadd.f32 %v4353, %v4427
    %v4429 = vpop.f32.mrb[0].mxu0
    %4430 = vmatprep.mubr.f32.mxu0 0.0
    %4431 = vmatmul.mubr.f32.gmra.mrb[0].mxu0 %v4359
    %v4432 = vpop.f32.mrb[0].mxu0
    %v4433 = vadd.f32 %v4353, %v4432
    %v4434 = vpop.f32.mrb[0].mxu0
    %4435 = vdwg.mxu0
    %v4436 = vadd.f32 %v4244, %v4428
    %v4437 = vadd.f32 %v4245, %v4433
    %v4438 = vmul.f32 %v4436, %v79
    %v4439 = vmul.f32 %v4437, %v84
    %v4440 = vld [vmem:[%s20] sm:$0x1]
    %v4441 = vld [vmem:[%s21] sm:$0x1]
    %v4442 = vsel %vm95, %v4438, 0.0
    %4443 = vadd.xlane.f32.xlu0 %v4442
    %v4444 = vpop.xlane.xlu0 %4443
    %v4445 = vsel %vm95, %v4439, 0.0
    %4446 = vadd.xlane.f32.xlu0 %v4445
    %v4447 = vpop.xlane.xlu0 %4446
    %v4448 = vmul.f32 %v4444, %v102
    %v4449 = vmul.f32 %v4447, %v102
    %v4450 = vsub.f32 %v4438, %v4448
    %v4451 = vsub.f32 %v4439, %v4449
    %v4452 = vmul.f32 %v4450, %v4450
    %v4453 = vmul.f32 %v4451, %v4451
    %v4454 = vsel %vm95, %v4452, 0.0
    %4455 = vadd.xlane.f32.xlu0 %v4454
    %v4456 = vpop.xlane.xlu0 %4455
    %v4457 = vsel %vm95, %v4453, 0.0
    %4458 = vadd.xlane.f32.xlu0 %v4457
    %v4459 = vpop.xlane.xlu0 %4458
    %v4460 = vmul.f32 %v4456, %v102
    %v4461 = vmul.f32 %v4459, %v102
    %v4462 = vadd.f32 %v4460, 1e-08
    %v4463 = vadd.f32 %v4461, 1e-08
    %v4464 = vrsqrt.pop %v4462
    %v4465 = vrsqrt.pop %v4463
    %v4466 = vmul.f32 %v4450, %v4464
    %v4467 = vmul.f32 %v4451, %v4465
    %v4469 = vlaneseq
    %v4470 = vshrl.u32 %v4469, 7
    %v4471 = vsub.s32 0, %v4470
    %v4472 = vrot.slane %v4440, %v4471
    %v4474 = vmul.f32 %v4466, %v4472
    %v4475 = vmul.f32 %v4467, %v4472
    %v4477 = vlaneseq
    %v4478 = vshrl.u32 %v4477, 7
    %v4479 = vsub.s32 0, %v4478
    %v4480 = vrot.slane %v4441, %v4479
    %v4482 = vadd.f32 %v4474, %v4480
    %v4483 = vadd.f32 %v4475, %v4480
    %4484 = vst.msk [vmem:[#allocation2] sm:$0xff] %vm95, %v4482
    %4485 = vst.msk [vmem:[#allocation2 + $0x8] sm:$0xff] %vm95, %v4483
    // Predicated region
    $region90: #{local_self_attention_forward.1} parent=1 // pred_check
      _
    $region91: #{local_self_attention_forward.1} parent=1 // pred_check_branch
      %4487 = sbr.rel (0) target = $region93
    $region92: #{local_self_attention_forward.1} parent=1 // pred_region
      %s4489 = ssub.s32 256, 256
      %4490 = vsyncadd [#allocation3], %s4489
      %s4491 = sshll.u32 [#allocation2], 4
      %s4492 = int_to_ptr.vmem [resolvable:$true] %s4491
      %4497 = dma.vmem_to_hbm [thread:$0]  %s4492, 256, %s22, [#allocation3], 128, 128, 8
    $region93: #{local_self_attention_forward.1} parent=1 // pred_fallthru
      _
    // Predicated region
    $region94: #{local_self_attention_forward.1} parent=1 // pred_check
      _
    $region95: #{local_self_attention_forward.1} parent=1 // pred_check_branch
      %4499 = sbr.rel (0) target = $region97
    $region96: #{local_self_attention_forward.1} parent=1 // pred_region
      %4500 = dma.done [#allocation3], 256
    $region97: #{local_self_attention_forward.1} parent=1 // pred_fallthru
      _
    %4501 = vsyncpa [#allocation3], 1

</llo_original>
